<compile_context>
chip_gen: v7x
topology: tpu7x:2x2x1
jax: 0.10.0
libtpu: 0.0.40
codegen_flags: <defaults>
</compile_context>

<pallas_src>
import functools

import jax
import jax.numpy as jnp
from jax import lax
from jax.experimental import pallas as pl
from jax.experimental.pallas import tpu as pltpu

HIDDEN = 512
LN_EPS = 1e-5
MAX_TILE_B = 512   # max batch rows per grid step
LANES = 128        # lane width / subgoal padding


def _round_up(x, m):
    return ((x + m - 1) // m) * m


def _choose_tiling(batch):
    """Pick (b_pad, tile_b): large tiles (<=512 rows), grid >= 2 when possible (v7x)."""
    b128 = _round_up(max(batch, LANES), LANES)
    if b128 <= LANES:
        tile_b = b128                                   # one 128-row tile
    else:
        # split into at least two grid steps so v7x megacore can shard the batch axis
        tile_b = min(MAX_TILE_B, _round_up(b128 // 2, LANES))
    b_pad = _round_up(b128, tile_b)
    return b_pad, tile_b


def _actor_kernel(x_ref,
                  w1_ref, b1_ref, g1_ref, be1_ref,
                  w2_ref, b2_ref, g2_ref, be2_ref,
                  w3c_ref, b3c_ref,
                  u_ref, out_ref, *, subgoal):
    """One (TILE_B, state) activation tile -> TILE_B sampled subgoal indices."""
    x = x_ref[...].astype(jnp.float32)

    # --- Linear(state, 512) + ReLU + LayerNorm(512) ---
    # bf16 only on the MXU operands; LayerNorm / element-wise math stays f32 (v5e-safe).
    h = jnp.dot(x.astype(jnp.bfloat16), w1_ref[...],
                preferred_element_type=jnp.float32) + b1_ref[...]
    h = jnp.maximum(h, 0.0)
    mu = jnp.mean(h, axis=-1, keepdims=True)
    var = jnp.mean(jnp.square(h - mu), axis=-1, keepdims=True)
    h = (h - mu) * lax.rsqrt(var + LN_EPS) * g1_ref[...] + be1_ref[...]

    # --- Linear(512, 512) + ReLU + LayerNorm(512) ---
    h = jnp.dot(h.astype(jnp.bfloat16), w2_ref[...],
                preferred_element_type=jnp.float32) + b2_ref[...]
    h = jnp.maximum(h, 0.0)
    mu = jnp.mean(h, axis=-1, keepdims=True)
    var = jnp.mean(jnp.square(h - mu), axis=-1, keepdims=True)
    h = (h - mu) * lax.rsqrt(var + LN_EPS) * g2_ref[...] + be2_ref[...]

    # --- Linear(512, subgoal) folded with the CDF prefix-sum ---
    # w3c = w3 @ tri, b3c = b3 @ tri (host-precomputed), so this single MXU matmul
    # directly yields the unnormalized CDF: cdf[:, j] = sum_{k<=j} p[:, k].
    cdf = jnp.dot(h.astype(jnp.bfloat16), w3c_ref[...],
                  preferred_element_type=jnp.float32) + b3c_ref[...]

    # Zero-padded columns (j >= subgoal) all equal the total, so the last lane is
    # sum(p); compare against u * total instead of normalizing (no divide).
    sub_pad = cdf.shape[-1]
    total = cdf[:, sub_pad - 1:]
    thresh = u_ref[...] * total
    idx = jnp.sum((cdf < thresh).astype(jnp.int32), axis=-1, keepdims=True)
    idx = jnp.minimum(idx, subgoal - 1)

    # (TILE_B, 1) int32 store: 128x less HBM writeback than a 128-lane broadcast slab;
    # the masked-store cost is hidden under the MXU-bound compute.
    out_ref[...] = idx


def init_actor_params(key, state, subgoal):
    """torch.nn.Linear default init (U(-1/sqrt(in), 1/sqrt(in))).

    Weights stored bf16 (MXU-native, halves weight DMA); biases / LN params f32.
    Layer-3 weight/bias are prefix-summed along the subgoal dim (w3 @ tri, b3 @ tri)
    and zero-padded to 128 lanes so the kernel's third matmul emits the CDF directly.
    """
    ks = jax.random.split(key, 6)

    def linear(kw, kb, fan_in, fan_out):
        bound = 1.0 / float(fan_in) ** 0.5
        w = jax.random.uniform(kw, (fan_in, fan_out), jnp.float32, -bound, bound)
        b = jax.random.uniform(kb, (1, fan_out), jnp.float32, -bound, bound)
        return w, b

    w1, b1 = linear(ks[0], ks[1], state, HIDDEN)
    w2, b2 = linear(ks[2], ks[3], HIDDEN, HIDDEN)
    w3, b3 = linear(ks[4], ks[5], HIDDEN, subgoal)

    sub_pad = _round_up(max(subgoal, LANES), LANES)
    w3 = jnp.pad(w3, ((0, 0), (0, sub_pad - subgoal)))
    b3 = jnp.pad(b3, ((0, 0), (0, sub_pad - subgoal)))
    tri = jnp.triu(jnp.ones((sub_pad, sub_pad), jnp.float32))   # rows <= cols
    w3c = w3 @ tri                                              # prefix-summed columns
    b3c = b3 @ tri

    return dict(
        w1=w1.astype(jnp.bfloat16), b1=b1,
        g1=jnp.ones((1, HIDDEN), jnp.float32),
        be1=jnp.zeros((1, HIDDEN), jnp.float32),
        w2=w2.astype(jnp.bfloat16), b2=b2,
        g2=jnp.ones((1, HIDDEN), jnp.float32),
        be2=jnp.zeros((1, HIDDEN), jnp.float32),
        w3c=w3c.astype(jnp.bfloat16), b3c=b3c)


@functools.partial(jax.jit, static_argnames=("subgoal",))
def actor_forward(params, x, u, *, subgoal):
    """x: (B, state) f32, u: (B, 1) uniform [0,1) f32 -> (B,) int32 sampled indices."""
    batch, state = x.shape
    sub_pad = params["w3c"].shape[1]

    b_pad, tile_b = _choose_tiling(batch)
    grid_b = b_pad // tile_b
    if b_pad != batch:
        x = jnp.pad(x, ((0, b_pad - batch), (0, 0)))
        u = jnp.pad(u, ((0, b_pad - batch), (0, 0)), constant_values=0.5)

    # Batch-tiled activations; weights use a constant index_map so they are DMA'd once
    # and remain VMEM-resident across grid steps.
    def tile_spec(width):
        return pl.BlockSpec((tile_b, width), lambda i: (i, 0))

    def const_spec(arr):
        return pl.BlockSpec(arr.shape, lambda i: (0, 0))

    weight_args = (params["w1"], params["b1"], params["g1"], params["be1"],
                   params["w2"], params["b2"], params["g2"], params["be2"],
                   params["w3c"], params["b3c"])

    flops = 2 * b_pad * (state * HIDDEN + HIDDEN * HIDDEN + HIDDEN * sub_pad)
    bytes_accessed = (x.size * 4 + u.size * 4 + b_pad * 4
                      + sum(int(w.size) * w.dtype.itemsize for w in weight_args))

    out = pl.pallas_call(
        functools.partial(_actor_kernel, subgoal=subgoal),
        out_shape=jax.ShapeDtypeStruct((b_pad, 1), jnp.int32),
        grid_spec=pltpu.PrefetchScalarGridSpec(
            num_scalar_prefetch=0,
            grid=(grid_b,),
            in_specs=[tile_spec(state)]
                     + [const_spec(w) for w in weight_args]
                     + [tile_spec(1)],
            out_specs=pl.BlockSpec((tile_b, 1), lambda i: (i, 0)),
        ),
        compiler_params=pltpu.CompilerParams(
            dimension_semantics=("parallel",)),
        cost_estimate=pl.CostEstimate(
            flops=int(flops),
            transcendentals=int(2 * b_pad),       # two rsqrt per row
            bytes_accessed=int(bytes_accessed)),
    )(x, *weight_args, u)

    return out[:batch, 0]


if __name__ == "__main__":
    key = jax.random.PRNGKey(0)
    k_param, k_x, k_u = jax.random.split(key, 3)

    BATCH, STATE, SUBGOAL = 4, 16, 8
    params = init_actor_params(k_param, STATE, SUBGOAL)
    # keep inputs positive so the Categorical probs are well-formed for the demo
    x = jax.random.uniform(k_x, (BATCH, STATE), jnp.float32, 0.0, 1.0)
    u = jax.random.uniform(k_u, (BATCH, 1), jnp.float32, 0.0, 1.0)

    sample = actor_forward(params, x, u, subgoal=SUBGOAL)
    jax.block_until_ready(sample)
    assert sample.shape == (BATCH,)
    assert sample.dtype == jnp.int32
    assert bool(jnp.all((sample >= 0) & (sample < SUBGOAL)))
    print("KERNEL_OK")
</pallas_src>

<mosaic_0001>
module attributes {stable_mosaic.version = 11 : i64} {
  func.func @_actor_kernel(%arg0: i32, %arg1: memref<128x16xf32, #tpu.memory_space<vmem>>, %arg2: memref<16x512xbf16, #tpu.memory_space<vmem>>, %arg3: memref<1x512xf32, #tpu.memory_space<vmem>>, %arg4: memref<1x512xf32, #tpu.memory_space<vmem>>, %arg5: memref<1x512xf32, #tpu.memory_space<vmem>>, %arg6: memref<512x512xbf16, #tpu.memory_space<vmem>>, %arg7: memref<1x512xf32, #tpu.memory_space<vmem>>, %arg8: memref<1x512xf32, #tpu.memory_space<vmem>>, %arg9: memref<1x512xf32, #tpu.memory_space<vmem>>, %arg10: memref<512x128xbf16, #tpu.memory_space<vmem>>, %arg11: memref<1x128xf32, #tpu.memory_space<vmem>>, %arg12: memref<128x1xf32, #tpu.memory_space<vmem>>, %arg13: memref<128x1xi32, #tpu.memory_space<vmem>>) attributes {dimension_semantics = [#tpu.dimension_semantics<parallel>], iteration_bounds = array<i64: 1>, scalar_prefetch = 0 : i64, scratch_operands = 0 : i64, tpu.core_type = #tpu.core_type<tc>, window_params = [{transform_indices = @transform_0, window_bounds = array<i64: 128, 16>}, {pipeline_mode = #tpu.pipeline_mode<synchronous>, transform_indices = @transform_1, window_bounds = array<i64: 16, 512>}, {pipeline_mode = #tpu.pipeline_mode<synchronous>, transform_indices = @transform_2, window_bounds = array<i64: 1, 512>}, {pipeline_mode = #tpu.pipeline_mode<synchronous>, transform_indices = @transform_3, window_bounds = array<i64: 1, 512>}, {pipeline_mode = #tpu.pipeline_mode<synchronous>, transform_indices = @transform_4, window_bounds = array<i64: 1, 512>}, {pipeline_mode = #tpu.pipeline_mode<synchronous>, transform_indices = @transform_5, window_bounds = array<i64: 512, 512>}, {pipeline_mode = #tpu.pipeline_mode<synchronous>, transform_indices = @transform_6, window_bounds = array<i64: 1, 512>}, {pipeline_mode = #tpu.pipeline_mode<synchronous>, transform_indices = @transform_7, window_bounds = array<i64: 1, 512>}, {pipeline_mode = #tpu.pipeline_mode<synchronous>, transform_indices = @transform_8, window_bounds = array<i64: 1, 512>}, {pipeline_mode = #tpu.pipeline_mode<synchronous>, transform_indices = @transform_9, window_bounds = array<i64: 512, 128>}, {pipeline_mode = #tpu.pipeline_mode<synchronous>, transform_indices = @transform_10, window_bounds = array<i64: 1, 128>}, {transform_indices = @transform_11, window_bounds = array<i64: 128, 1>}, {transform_indices = @transform_12, window_bounds = array<i64: 128, 1>}]} {
    %c0 = arith.constant 0 : index
    %c0_0 = arith.constant 0 : index
    %0 = vector.load %arg1[%c0, %c0_0] : memref<128x16xf32, #tpu.memory_space<vmem>>, vector<128x16xf32>
    %1 = arith.truncf %0 : vector<128x16xf32> to vector<128x16xbf16>
    %c0_1 = arith.constant 0 : index
    %c0_2 = arith.constant 0 : index
    %2 = vector.load %arg2[%c0_1, %c0_2] : memref<16x512xbf16, #tpu.memory_space<vmem>>, vector<16x512xbf16>
    %cst = arith.constant dense<0.000000e+00> : vector<128x512xf32>
    %3 = tpu.matmul %1, %2, %cst {dimension_numbers = #tpu.dot_dimension_numbers<[1], [0], [0], [1], [0, 0, 1, 1], [], []>} : vector<128x16xbf16>, vector<16x512xbf16>, vector<128x512xf32> -> vector<128x512xf32>
    %c0_3 = arith.constant 0 : index
    %c0_4 = arith.constant 0 : index
    %4 = vector.load %arg3[%c0_3, %c0_4] : memref<1x512xf32, #tpu.memory_space<vmem>>, vector<1x512xf32>
    %5 = vector.broadcast %4 : vector<1x512xf32> to vector<128x512xf32>
    %6 = arith.addf %3, %5 : vector<128x512xf32>
    %cst_5 = arith.constant 0.000000e+00 : f32
    %7 = vector.broadcast %cst_5 : f32 to vector<128x512xf32>
    %8 = arith.maximumf %6, %7 : vector<128x512xf32>
    %cst_6 = arith.constant dense<0.000000e+00> : vector<128xf32>
    %9 = vector.multi_reduction <add>, %8, %cst_6 [1] : vector<128x512xf32> to vector<128xf32>
    %10 = vector.shape_cast %9 : vector<128xf32> to vector<128x1xf32>
    %cst_7 = arith.constant 5.120000e+02 : f32
    %11 = vector.broadcast %cst_7 : f32 to vector<128x1xf32>
    %12 = arith.divf %10, %11 : vector<128x1xf32>
    %13 = vector.broadcast %12 : vector<128x1xf32> to vector<128x512xf32>
    %14 = arith.subf %8, %13 : vector<128x512xf32>
    %15 = arith.mulf %14, %14 : vector<128x512xf32>
    %cst_8 = arith.constant dense<0.000000e+00> : vector<128xf32>
    %16 = vector.multi_reduction <add>, %15, %cst_8 [1] : vector<128x512xf32> to vector<128xf32>
    %17 = vector.shape_cast %16 : vector<128xf32> to vector<128x1xf32>
    %cst_9 = arith.constant 5.120000e+02 : f32
    %18 = vector.broadcast %cst_9 : f32 to vector<128x1xf32>
    %19 = arith.divf %17, %18 : vector<128x1xf32>
    %20 = vector.broadcast %12 : vector<128x1xf32> to vector<128x512xf32>
    %21 = arith.subf %8, %20 : vector<128x512xf32>
    %cst_10 = arith.constant 9.99999974E-6 : f32
    %22 = vector.broadcast %cst_10 : f32 to vector<128x1xf32>
    %23 = arith.addf %19, %22 : vector<128x1xf32>
    %24 = math.rsqrt %23 : vector<128x1xf32>
    %25 = vector.broadcast %24 : vector<128x1xf32> to vector<128x512xf32>
    %26 = arith.mulf %21, %25 : vector<128x512xf32>
    %c0_11 = arith.constant 0 : index
    %c0_12 = arith.constant 0 : index
    %27 = vector.load %arg4[%c0_11, %c0_12] : memref<1x512xf32, #tpu.memory_space<vmem>>, vector<1x512xf32>
    %28 = vector.broadcast %27 : vector<1x512xf32> to vector<128x512xf32>
    %29 = arith.mulf %26, %28 : vector<128x512xf32>
    %c0_13 = arith.constant 0 : index
    %c0_14 = arith.constant 0 : index
    %30 = vector.load %arg5[%c0_13, %c0_14] : memref<1x512xf32, #tpu.memory_space<vmem>>, vector<1x512xf32>
    %31 = vector.broadcast %30 : vector<1x512xf32> to vector<128x512xf32>
    %32 = arith.addf %29, %31 : vector<128x512xf32>
    %33 = arith.truncf %32 : vector<128x512xf32> to vector<128x512xbf16>
    %c0_15 = arith.constant 0 : index
    %c0_16 = arith.constant 0 : index
    %34 = vector.load %arg6[%c0_15, %c0_16] : memref<512x512xbf16, #tpu.memory_space<vmem>>, vector<512x512xbf16>
    %cst_17 = arith.constant dense<0.000000e+00> : vector<128x512xf32>
    %35 = tpu.matmul %33, %34, %cst_17 {dimension_numbers = #tpu.dot_dimension_numbers<[1], [0], [0], [1], [0, 0, 1, 1], [], []>} : vector<128x512xbf16>, vector<512x512xbf16>, vector<128x512xf32> -> vector<128x512xf32>
    %c0_18 = arith.constant 0 : index
    %c0_19 = arith.constant 0 : index
    %36 = vector.load %arg7[%c0_18, %c0_19] : memref<1x512xf32, #tpu.memory_space<vmem>>, vector<1x512xf32>
    %37 = vector.broadcast %36 : vector<1x512xf32> to vector<128x512xf32>
    %38 = arith.addf %35, %37 : vector<128x512xf32>
    %cst_20 = arith.constant 0.000000e+00 : f32
    %39 = vector.broadcast %cst_20 : f32 to vector<128x512xf32>
    %40 = arith.maximumf %38, %39 : vector<128x512xf32>
    %cst_21 = arith.constant dense<0.000000e+00> : vector<128xf32>
    %41 = vector.multi_reduction <add>, %40, %cst_21 [1] : vector<128x512xf32> to vector<128xf32>
    %42 = vector.shape_cast %41 : vector<128xf32> to vector<128x1xf32>
    %cst_22 = arith.constant 5.120000e+02 : f32
    %43 = vector.broadcast %cst_22 : f32 to vector<128x1xf32>
    %44 = arith.divf %42, %43 : vector<128x1xf32>
    %45 = vector.broadcast %44 : vector<128x1xf32> to vector<128x512xf32>
    %46 = arith.subf %40, %45 : vector<128x512xf32>
    %47 = arith.mulf %46, %46 : vector<128x512xf32>
    %cst_23 = arith.constant dense<0.000000e+00> : vector<128xf32>
    %48 = vector.multi_reduction <add>, %47, %cst_23 [1] : vector<128x512xf32> to vector<128xf32>
    %49 = vector.shape_cast %48 : vector<128xf32> to vector<128x1xf32>
    %cst_24 = arith.constant 5.120000e+02 : f32
    %50 = vector.broadcast %cst_24 : f32 to vector<128x1xf32>
    %51 = arith.divf %49, %50 : vector<128x1xf32>
    %52 = vector.broadcast %44 : vector<128x1xf32> to vector<128x512xf32>
    %53 = arith.subf %40, %52 : vector<128x512xf32>
    %cst_25 = arith.constant 9.99999974E-6 : f32
    %54 = vector.broadcast %cst_25 : f32 to vector<128x1xf32>
    %55 = arith.addf %51, %54 : vector<128x1xf32>
    %56 = math.rsqrt %55 : vector<128x1xf32>
    %57 = vector.broadcast %56 : vector<128x1xf32> to vector<128x512xf32>
    %58 = arith.mulf %53, %57 : vector<128x512xf32>
    %c0_26 = arith.constant 0 : index
    %c0_27 = arith.constant 0 : index
    %59 = vector.load %arg8[%c0_26, %c0_27] : memref<1x512xf32, #tpu.memory_space<vmem>>, vector<1x512xf32>
    %60 = vector.broadcast %59 : vector<1x512xf32> to vector<128x512xf32>
    %61 = arith.mulf %58, %60 : vector<128x512xf32>
    %c0_28 = arith.constant 0 : index
    %c0_29 = arith.constant 0 : index
    %62 = vector.load %arg9[%c0_28, %c0_29] : memref<1x512xf32, #tpu.memory_space<vmem>>, vector<1x512xf32>
    %63 = vector.broadcast %62 : vector<1x512xf32> to vector<128x512xf32>
    %64 = arith.addf %61, %63 : vector<128x512xf32>
    %65 = arith.truncf %64 : vector<128x512xf32> to vector<128x512xbf16>
    %c0_30 = arith.constant 0 : index
    %c0_31 = arith.constant 0 : index
    %66 = vector.load %arg10[%c0_30, %c0_31] : memref<512x128xbf16, #tpu.memory_space<vmem>>, vector<512x128xbf16>
    %cst_32 = arith.constant dense<0.000000e+00> : vector<128x128xf32>
    %67 = tpu.matmul %65, %66, %cst_32 {dimension_numbers = #tpu.dot_dimension_numbers<[1], [0], [0], [1], [0, 0, 1, 1], [], []>} : vector<128x512xbf16>, vector<512x128xbf16>, vector<128x128xf32> -> vector<128x128xf32>
    %c0_33 = arith.constant 0 : index
    %c0_34 = arith.constant 0 : index
    %68 = vector.load %arg11[%c0_33, %c0_34] : memref<1x128xf32, #tpu.memory_space<vmem>>, vector<1x128xf32>
    %69 = vector.broadcast %68 : vector<1x128xf32> to vector<128x128xf32>
    %70 = arith.addf %67, %69 : vector<128x128xf32>
    %71 = vector.extract_strided_slice %70 {offsets = [0, 127], sizes = [128, 1], strides = [1, 1]} : vector<128x128xf32> to vector<128x1xf32>
    %c0_35 = arith.constant 0 : index
    %c0_36 = arith.constant 0 : index
    %72 = vector.load %arg12[%c0_35, %c0_36] : memref<128x1xf32, #tpu.memory_space<vmem>>, vector<128x1xf32>
    %73 = arith.mulf %72, %71 : vector<128x1xf32>
    %74 = vector.broadcast %73 : vector<128x1xf32> to vector<128x128xf32>
    %75 = arith.cmpf olt, %70, %74 : vector<128x128xf32>
    %76 = arith.extui %75 : vector<128x128xi1> to vector<128x128xi32>
    %cst_37 = arith.constant dense<0> : vector<128xi32>
    %77 = vector.multi_reduction <add>, %76, %cst_37 [1] : vector<128x128xi32> to vector<128xi32>
    %78 = vector.shape_cast %77 : vector<128xi32> to vector<128x1xi32>
    %c7_i32 = arith.constant 7 : i32
    %79 = vector.broadcast %c7_i32 : i32 to vector<128x1xi32>
    %80 = arith.minsi %78, %79 : vector<128x1xi32>
    %c0_38 = arith.constant 0 : index
    %c0_39 = arith.constant 0 : index
    %81 = vector.load %arg13[%c0_38, %c0_39] : memref<128x1xi32, #tpu.memory_space<vmem>>, vector<128x1xi32>
    tpu.vector_store %arg13[%c0_38, %c0_39], %80 {strides = array<i32>} : memref<128x1xi32, #tpu.memory_space<vmem>>, vector<128x1xi32>,
    return
  }
  func.func @transform_0(%arg0: i32) -> (i32, i32) {
    %c0_i32 = arith.constant 0 : i32
    %c0_i32_0 = arith.constant 0 : i32
    return %arg0, %c0_i32 : i32, i32
  }
  func.func @transform_1(%arg0: i32) -> (i32, i32) {
    %c0_i32 = arith.constant 0 : i32
    %c0_i32_0 = arith.constant 0 : i32
    %c0_i32_1 = arith.constant 0 : i32
    return %c0_i32, %c0_i32_0 : i32, i32
  }
  func.func @transform_2(%arg0: i32) -> (i32, i32) {
    %c0_i32 = arith.constant 0 : i32
    %c0_i32_0 = arith.constant 0 : i32
    %c0_i32_1 = arith.constant 0 : i32
    return %c0_i32, %c0_i32_0 : i32, i32
  }
  func.func @transform_3(%arg0: i32) -> (i32, i32) {
    %c0_i32 = arith.constant 0 : i32
    %c0_i32_0 = arith.constant 0 : i32
    %c0_i32_1 = arith.constant 0 : i32
    return %c0_i32, %c0_i32_0 : i32, i32
  }
  func.func @transform_4(%arg0: i32) -> (i32, i32) {
    %c0_i32 = arith.constant 0 : i32
    %c0_i32_0 = arith.constant 0 : i32
    %c0_i32_1 = arith.constant 0 : i32
    return %c0_i32, %c0_i32_0 : i32, i32
  }
  func.func @transform_5(%arg0: i32) -> (i32, i32) {
    %c0_i32 = arith.constant 0 : i32
    %c0_i32_0 = arith.constant 0 : i32
    %c0_i32_1 = arith.constant 0 : i32
    return %c0_i32, %c0_i32_0 : i32, i32
  }
  func.func @transform_6(%arg0: i32) -> (i32, i32) {
    %c0_i32 = arith.constant 0 : i32
    %c0_i32_0 = arith.constant 0 : i32
    %c0_i32_1 = arith.constant 0 : i32
    return %c0_i32, %c0_i32_0 : i32, i32
  }
  func.func @transform_7(%arg0: i32) -> (i32, i32) {
    %c0_i32 = arith.constant 0 : i32
    %c0_i32_0 = arith.constant 0 : i32
    %c0_i32_1 = arith.constant 0 : i32
    return %c0_i32, %c0_i32_0 : i32, i32
  }
  func.func @transform_8(%arg0: i32) -> (i32, i32) {
    %c0_i32 = arith.constant 0 : i32
    %c0_i32_0 = arith.constant 0 : i32
    %c0_i32_1 = arith.constant 0 : i32
    return %c0_i32, %c0_i32_0 : i32, i32
  }
  func.func @transform_9(%arg0: i32) -> (i32, i32) {
    %c0_i32 = arith.constant 0 : i32
    %c0_i32_0 = arith.constant 0 : i32
    %c0_i32_1 = arith.constant 0 : i32
    return %c0_i32, %c0_i32_0 : i32, i32
  }
  func.func @transform_10(%arg0: i32) -> (i32, i32) {
    %c0_i32 = arith.constant 0 : i32
    %c0_i32_0 = arith.constant 0 : i32
    %c0_i32_1 = arith.constant 0 : i32
    return %c0_i32, %c0_i32_0 : i32, i32
  }
  func.func @transform_11(%arg0: i32) -> (i32, i32) {
    %c0_i32 = arith.constant 0 : i32
    %c0_i32_0 = arith.constant 0 : i32
    return %arg0, %c0_i32 : i32, i32
  }
  func.func @transform_12(%arg0: i32) -> (i32, i32) {
    %c0_i32 = arith.constant 0 : i32
    %c0_i32_0 = arith.constant 0 : i32
    return %arg0, %c0_i32 : i32, i32
  }
}

</mosaic_0001>

<llo_original>
// kernel: actor_forward.1
$region0: #{actor_forward.1}
  #allocation0 [shape = 'u32[]', space=smem, size = 0x4, offset = 0x4, fixed_abs, tag = 'smem constant byte address 0x4 - core index']
  #allocation1 [shape = 'u32[144,128]{1,0:T(1,128)}', space=vmem, size = 0x12000, scoped, tag = 'internal scratch']
  %s0 = inlined_call_operand.vmem [shape: f32[128,16], index: 0, kind: input, shape index: {}]
  %s1 = inlined_call_operand.vmem [shape: bf16[16,512], index: 1, kind: input, shape index: {}]
  %s2 = inlined_call_operand.vmem [shape: f32[1,512], index: 2, kind: input, shape index: {}]
  %s3 = inlined_call_operand.vmem [shape: f32[1,512], index: 3, kind: input, shape index: {}]
  %s4 = inlined_call_operand.vmem [shape: f32[1,512], index: 4, kind: input, shape index: {}]
  %s5 = inlined_call_operand.hbm [shape: bf16[512,512], index: 5, kind: input, shape index: {}]
  %s6 = inlined_call_operand.vmem [shape: f32[1,512], index: 6, kind: input, shape index: {}]
  %s7 = inlined_call_operand.hbm [shape: f32[1,512], index: 7, kind: input, shape index: {}]
  %s8 = inlined_call_operand.hbm [shape: f32[1,512], index: 8, kind: input, shape index: {}]
  %s9 = inlined_call_operand.vmem [shape: bf16[512,128], index: 9, kind: input, shape index: {}]
  %s10 = inlined_call_operand.hbm [shape: f32[1,128], index: 10, kind: input, shape index: {}]
  %s11 = inlined_call_operand.vmem [shape: f32[128,1], index: 11, kind: input, shape index: {}]
  %s12 = inlined_call_operand.vmem [shape: s32[128,1], index: 12, kind: output, shape index: {}]
  %s13 = sld [smem:[#allocation0]]
  $region74: #{actor_forward.1} parent=0
    _
  %s15 = ssub.s32 1, %s13
  %s16 = scalar_select 0, %s15, %s13
  $region1: #{actor_forward.1} parent=0
    #allocation2 [shape = 'u8[524288]{0}', space=vmem, size = 0x80000, scoped, tag = 'input window, operand 5, single buffered']
    #allocation3 [shape = 's32[1]{0}', space=sflag, size = 0x4, scoped, tag = 'scoped memory for actor_forward.1']
    #allocation4 [shape = 'u8[2048]{0}', space=vmem, size = 0x800, scoped, tag = 'input window, operand 7, single buffered']
    #allocation5 [shape = 's32[1]{0}', space=sflag, size = 0x4, scoped, tag = 'scoped memory for actor_forward.1']
    #allocation6 [shape = 'u8[2048]{0}', space=vmem, size = 0x800, scoped, tag = 'input window, operand 8, single buffered']
    #allocation7 [shape = 'u8[512]{0}', space=vmem, size = 0x400, scoped, tag = 'input window, operand 10, single buffered']
    #allocation8 [shape = 's32[1]{0}', space=sflag, size = 0x4, scoped, tag = 'scoped memory for actor_forward.1']
    %17 = vsyncpa [#allocation3], 0
    %18 = vsyncpa [#allocation5], 0
    %19 = vsyncpa [#allocation8], 0
    // Predicated region
    $region2: #{actor_forward.1} parent=1 // pred_check
      _
    $region3: #{actor_forward.1} parent=1 // pred_check_branch
      %21 = sbr.rel (0) target = $region5
    $region4: #{actor_forward.1} parent=1 // pred_region
      _
    $region5: #{actor_forward.1} parent=1 // pred_fallthru
      _
    // Predicated region
    $region6: #{actor_forward.1} parent=1 // pred_check
      _
    $region7: #{actor_forward.1} parent=1 // pred_check_branch
      %23 = sbr.rel (0) target = $region9
    $region8: #{actor_forward.1} parent=1 // pred_region
      _
    $region9: #{actor_forward.1} parent=1 // pred_fallthru
      _
    // Predicated region
    $region10: #{actor_forward.1} parent=1 // pred_check
      _
    $region11: #{actor_forward.1} parent=1 // pred_check_branch
      %25 = sbr.rel (0) target = $region13
    $region12: #{actor_forward.1} parent=1 // pred_region
      _
    $region13: #{actor_forward.1} parent=1 // pred_fallthru
      _
    // Predicated region
    $region14: #{actor_forward.1} parent=1 // pred_check
      _
    $region15: #{actor_forward.1} parent=1 // pred_check_branch
      %27 = sbr.rel (0) target = $region17
    $region16: #{actor_forward.1} parent=1 // pred_region
      _
    $region17: #{actor_forward.1} parent=1 // pred_fallthru
      _
    // Predicated region
    $region18: #{actor_forward.1} parent=1 // pred_check
      _
    $region19: #{actor_forward.1} parent=1 // pred_check_branch
      %29 = sbr.rel (0) target = $region21
    $region20: #{actor_forward.1} parent=1 // pred_region
      _
    $region21: #{actor_forward.1} parent=1 // pred_fallthru
      _
    // Predicated region
    $region22: #{actor_forward.1} parent=1 // pred_check
      _
    $region23: #{actor_forward.1} parent=1 // pred_check_branch
      %31 = sbr.rel (0) target = $region25
    $region24: #{actor_forward.1} parent=1 // pred_region
      %s33 = ssub.s32 16384, 16384
      %34 = vsyncadd [#allocation3], %s33
      %s35 = sshll.u32 [#allocation2], 4
      %s36 = int_to_ptr.vmem [resolvable:$true] %s35
      %41 = dma.hbm_to_vmem [thread:$0]  %s5, 16384, %s36, [#allocation3], 256, 256, 16
    $region25: #{actor_forward.1} parent=1 // pred_fallthru
      _
    // Predicated region
    $region26: #{actor_forward.1} parent=1 // pred_check
      _
    $region27: #{actor_forward.1} parent=1 // pred_check_branch
      %43 = sbr.rel (0) target = $region29
    $region28: #{actor_forward.1} parent=1 // pred_region
      _
    $region29: #{actor_forward.1} parent=1 // pred_fallthru
      _
    // Predicated region
    $region30: #{actor_forward.1} parent=1 // pred_check
      _
    $region31: #{actor_forward.1} parent=1 // pred_check_branch
      %45 = sbr.rel (0) target = $region33
    $region32: #{actor_forward.1} parent=1 // pred_region
      %s47 = ssub.s32 64, 64
      %48 = vsyncadd [#allocation5], %s47
      %s50 = sshll.u32 [#allocation4], 4
      %s51 = int_to_ptr.vmem [resolvable:$true] %s50
      %53 = dma.hbm_to_vmem [thread:$0]  %s7, 64, %s51, [#allocation5]
    $region33: #{actor_forward.1} parent=1 // pred_fallthru
      _
    // Predicated region
    $region34: #{actor_forward.1} parent=1 // pred_check
      _
    $region35: #{actor_forward.1} parent=1 // pred_check_branch
      %55 = sbr.rel (0) target = $region37
    $region36: #{actor_forward.1} parent=1 // pred_region
      %s57 = ssub.s32 64, 64
      %58 = vsyncadd [#allocation5], %s57
      %s60 = sshll.u32 [#allocation6], 4
      %s61 = int_to_ptr.vmem [resolvable:$true] %s60
      %63 = dma.hbm_to_vmem [thread:$0]  %s8, 64, %s61, [#allocation5]
    $region37: #{actor_forward.1} parent=1 // pred_fallthru
      _
    // Predicated region
    $region38: #{actor_forward.1} parent=1 // pred_check
      _
    $region39: #{actor_forward.1} parent=1 // pred_check_branch
      %65 = sbr.rel (0) target = $region41
    $region40: #{actor_forward.1} parent=1 // pred_region
      _
    $region41: #{actor_forward.1} parent=1 // pred_fallthru
      _
    // Predicated region
    $region42: #{actor_forward.1} parent=1 // pred_check
      _
    $region43: #{actor_forward.1} parent=1 // pred_check_branch
      %67 = sbr.rel (0) target = $region45
    $region44: #{actor_forward.1} parent=1 // pred_region
      %s69 = ssub.s32 16, 16
      %70 = vsyncadd [#allocation8], %s69
      %s72 = sshll.u32 [#allocation7], 4
      %s73 = int_to_ptr.vmem [resolvable:$true] %s72
      %75 = dma.hbm_to_vmem [thread:$0]  %s10, 16, %s73, [#allocation8]
    $region45: #{actor_forward.1} parent=1 // pred_fallthru
      _
    // Predicated region
    $region46: #{actor_forward.1} parent=1 // pred_check
      _
    $region47: #{actor_forward.1} parent=1 // pred_check_branch
      %77 = sbr.rel (0) target = $region49
    $region48: #{actor_forward.1} parent=1 // pred_region
      _
    $region49: #{actor_forward.1} parent=1 // pred_fallthru
      _
    // Predicated region
    $region50: #{actor_forward.1} parent=1 // pred_check
      _
    $region51: #{actor_forward.1} parent=1 // pred_check_branch
      %79 = sbr.rel (0) target = $region53
    $region52: #{actor_forward.1} parent=1 // pred_region
      %80 = dma.done [#allocation3], 16384
    $region53: #{actor_forward.1} parent=1 // pred_fallthru
      _
    // Predicated region
    $region54: #{actor_forward.1} parent=1 // pred_check
      _
    $region55: #{actor_forward.1} parent=1 // pred_check_branch
      %82 = sbr.rel (0) target = $region57
    $region56: #{actor_forward.1} parent=1 // pred_region
      %83 = dma.done [#allocation5], 64
    $region57: #{actor_forward.1} parent=1 // pred_fallthru
      _
    // Predicated region
    $region58: #{actor_forward.1} parent=1 // pred_check
      _
    $region59: #{actor_forward.1} parent=1 // pred_check_branch
      %85 = sbr.rel (0) target = $region61
    $region60: #{actor_forward.1} parent=1 // pred_region
      %86 = dma.done [#allocation5], 64
    $region61: #{actor_forward.1} parent=1 // pred_fallthru
      _
    // Predicated region
    $region62: #{actor_forward.1} parent=1 // pred_check
      _
    $region63: #{actor_forward.1} parent=1 // pred_check_branch
      %88 = sbr.rel (0) target = $region65
    $region64: #{actor_forward.1} parent=1 // pred_region
      %89 = dma.done [#allocation8], 16
    $region65: #{actor_forward.1} parent=1 // pred_fallthru
      _
    %v91 = vld [vmem:[%s0] sm:$0xff]
    %v92 = vld [vmem:[%s0 + $0x8] sm:$0xff]
    %v93 = vld [vmem:[%s0 + $0x10] sm:$0xff]
    %v94 = vld [vmem:[%s0 + $0x18] sm:$0xff]
    %v95 = vld [vmem:[%s0 + $0x20] sm:$0xff]
    %v96 = vld [vmem:[%s0 + $0x28] sm:$0xff]
    %v97 = vld [vmem:[%s0 + $0x30] sm:$0xff]
    %v98 = vld [vmem:[%s0 + $0x38] sm:$0xff]
    %v99 = vld [vmem:[%s0 + $0x40] sm:$0xff]
    %v100 = vld [vmem:[%s0 + $0x48] sm:$0xff]
    %v101 = vld [vmem:[%s0 + $0x50] sm:$0xff]
    %v102 = vld [vmem:[%s0 + $0x58] sm:$0xff]
    %v103 = vld [vmem:[%s0 + $0x60] sm:$0xff]
    %v104 = vld [vmem:[%s0 + $0x68] sm:$0xff]
    %v105 = vld [vmem:[%s0 + $0x70] sm:$0xff]
    %v106 = vld [vmem:[%s0 + $0x78] sm:$0xff]
    %v107 = vpack.c.bf16 %v92, %v91
    %v108 = vpack.c.bf16 %v94, %v93
    %v109 = vpack.c.bf16 %v96, %v95
    %v110 = vpack.c.bf16 %v98, %v97
    %v111 = vpack.c.bf16 %v100, %v99
    %v112 = vpack.c.bf16 %v102, %v101
    %v113 = vpack.c.bf16 %v104, %v103
    %v114 = vpack.c.bf16 %v106, %v105
    %v115 = vld [vmem:[%s1] sm:$0xff]
    %v116 = vld [vmem:[%s1 + $0x8] sm:$0xff]
    %v117 = vld [vmem:[%s1 + $0x10] sm:$0xff]
    %v118 = vld [vmem:[%s1 + $0x18] sm:$0xff]
    %v119 = vld [vmem:[%s2] sm:$0xf]
    %v121 = vlaneseq
    %v122 = vshrl.u32 %v121, 7
    %v123 = vsub.s32 0, %v122
    %v124 = vrot.slane %v119, %v123
    %v125 = vlaneseq
    %v126 = vshrl.u32 %v125, 7
    %v127 = vsub.s32 1, %v126
    %v128 = vrot.slane %v119, %v127
    %v129 = vlaneseq
    %v130 = vshrl.u32 %v129, 7
    %v131 = vsub.s32 2, %v130
    %v132 = vrot.slane %v119, %v131
    %v133 = vlaneseq
    %v134 = vshrl.u32 %v133, 7
    %v135 = vsub.s32 3, %v134
    %v136 = vrot.slane %v119, %v135
    %v145 = vunpack.c.l.b16 %v115
    %v146 = vunpack.c.h.b16 %v115
    %v147 = vunpack.c.l.b16 %v116
    %v148 = vunpack.c.h.b16 %v116
    %v149 = vunpack.c.l.b16 %v117
    %v150 = vunpack.c.h.b16 %v117
    %v151 = vunpack.c.l.b16 %v118
    %v152 = vunpack.c.h.b16 %v118
    %v153 = vpack.c.b16 %v149, %v145
    %v154 = vpack.c.b16 %v150, %v146
    %v155 = vpack.c.b16 %v151, %v147
    %v156 = vpack.c.b16 %v152, %v148
    %vm161 = vcmask 130048
    %v163 = vsel %vm161, %v107, 0
    %v166 = vsel %vm161, %v108, 0
    %v169 = vsel %vm161, %v109, 0
    %v172 = vsel %vm161, %v110, 0
    %v175 = vsel %vm161, %v111, 0
    %v178 = vsel %vm161, %v112, 0
    %v181 = vsel %vm161, %v113, 0
    %v184 = vsel %vm161, %v114, 0
    %186 = vmatprep.subr.bf16.mxu0 %v154
    %187 = vmatpush1.bf16.msra.mxu0 %v153
    %188 = vmatprep.subr.bf16.mxu0 0
    %189 = vmatpush1.bf16.msra.mxu0 0
    %190 = vmatprep.subr.bf16.mxu0 0
    %191 = vmatpush1.bf16.msra.mxu0 0
    %192 = vmatprep.subr.bf16.mxu0 0
    %193 = vmatpush1.bf16.msra.mxu0 0
    %194 = vmatprep.subr.bf16.mxu0 0
    %195 = vmatpush1.bf16.msra.mxu0 0
    %196 = vmatprep.subr.bf16.mxu0 0
    %197 = vmatpush1.bf16.msra.mxu0 0
    %198 = vmatprep.subr.bf16.mxu0 0
    %199 = vmatpush1.bf16.msra.mxu0 0
    %200 = vmatprep.subr.bf16.mxu0 0
    %201 = vmatpush1.bf16.msra.mxu0 0
    %202 = vmatprep.subr.bf16.mxu0 0
    %203 = vmatpush1.bf16.msra.mxu0 0
    %204 = vmatprep.subr.bf16.mxu0 0
    %205 = vmatpush1.bf16.msra.mxu0 0
    %206 = vmatprep.subr.bf16.mxu0 0
    %207 = vmatpush1.bf16.msra.mxu0 0
    %208 = vmatprep.subr.bf16.mxu0 0
    %209 = vmatpush1.bf16.msra.mxu0 0
    %210 = vmatprep.subr.bf16.mxu0 0
    %211 = vmatpush1.bf16.msra.mxu0 0
    %212 = vmatprep.subr.bf16.mxu0 0
    %213 = vmatpush1.bf16.msra.mxu0 0
    %214 = vmatprep.subr.bf16.mxu0 0
    %215 = vmatpush1.bf16.msra.mxu0 0
    %216 = vmatprep.subr.bf16.mxu0 0
    %217 = vmatpush1.bf16.msra.mxu0 0
    %218 = vmatprep.mubr.bf16.mxu0 0
    %219 = vmatmul.mubr.bf16.gmra.mrb[0].mxu0 %v163
    %v220 = vpop.f32.mrb[0].mxu0
    %v221 = vadd.f32 %v124, %v220
    %v222 = vpop.f32.mrb[0].mxu0
    %v223 = vadd.f32 %v128, %v222
    %v224 = vpop.f32.mrb[0].mxu0
    %v225 = vadd.f32 %v124, %v224
    %v226 = vpop.f32.mrb[0].mxu0
    %v227 = vadd.f32 %v128, %v226
    %228 = vmatprep.mubr.bf16.mxu0 0
    %229 = vmatmul.mubr.bf16.gmra.mrb[0].mxu0 %v166
    %v230 = vpop.f32.mrb[0].mxu0
    %v231 = vadd.f32 %v124, %v230
    %v232 = vpop.f32.mrb[0].mxu0
    %v233 = vadd.f32 %v128, %v232
    %v234 = vpop.f32.mrb[0].mxu0
    %v235 = vadd.f32 %v124, %v234
    %v236 = vpop.f32.mrb[0].mxu0
    %v237 = vadd.f32 %v128, %v236
    %238 = vmatprep.mubr.bf16.mxu0 0
    %239 = vmatmul.mubr.bf16.gmra.mrb[0].mxu0 %v169
    %v240 = vpop.f32.mrb[0].mxu0
    %v241 = vadd.f32 %v124, %v240
    %v242 = vpop.f32.mrb[0].mxu0
    %v243 = vadd.f32 %v128, %v242
    %v244 = vpop.f32.mrb[0].mxu0
    %v245 = vadd.f32 %v124, %v244
    %v246 = vpop.f32.mrb[0].mxu0
    %v247 = vadd.f32 %v128, %v246
    %248 = vmatprep.mubr.bf16.mxu0 0
    %249 = vmatmul.mubr.bf16.gmra.mrb[0].mxu0 %v172
    %v250 = vpop.f32.mrb[0].mxu0
    %v251 = vadd.f32 %v124, %v250
    %v252 = vpop.f32.mrb[0].mxu0
    %v253 = vadd.f32 %v128, %v252
    %v254 = vpop.f32.mrb[0].mxu0
    %v255 = vadd.f32 %v124, %v254
    %v256 = vpop.f32.mrb[0].mxu0
    %v257 = vadd.f32 %v128, %v256
    %258 = vmatprep.mubr.bf16.mxu0 0
    %259 = vmatmul.mubr.bf16.gmra.mrb[0].mxu0 %v175
    %v260 = vpop.f32.mrb[0].mxu0
    %v261 = vadd.f32 %v124, %v260
    %v262 = vpop.f32.mrb[0].mxu0
    %v263 = vadd.f32 %v128, %v262
    %v264 = vpop.f32.mrb[0].mxu0
    %v265 = vadd.f32 %v124, %v264
    %v266 = vpop.f32.mrb[0].mxu0
    %v267 = vadd.f32 %v128, %v266
    %268 = vmatprep.mubr.bf16.mxu0 0
    %269 = vmatmul.mubr.bf16.gmra.mrb[0].mxu0 %v178
    %v270 = vpop.f32.mrb[0].mxu0
    %v271 = vadd.f32 %v124, %v270
    %v272 = vpop.f32.mrb[0].mxu0
    %v273 = vadd.f32 %v128, %v272
    %v274 = vpop.f32.mrb[0].mxu0
    %v275 = vadd.f32 %v124, %v274
    %v276 = vpop.f32.mrb[0].mxu0
    %v277 = vadd.f32 %v128, %v276
    %278 = vmatprep.mubr.bf16.mxu0 0
    %279 = vmatmul.mubr.bf16.gmra.mrb[0].mxu0 %v181
    %v280 = vpop.f32.mrb[0].mxu0
    %v281 = vadd.f32 %v124, %v280
    %v282 = vpop.f32.mrb[0].mxu0
    %v283 = vadd.f32 %v128, %v282
    %v284 = vpop.f32.mrb[0].mxu0
    %v285 = vadd.f32 %v124, %v284
    %v286 = vpop.f32.mrb[0].mxu0
    %v287 = vadd.f32 %v128, %v286
    %288 = vmatprep.mubr.bf16.mxu0 0
    %289 = vmatmul.mubr.bf16.gmra.mrb[0].mxu0 %v184
    %v290 = vpop.f32.mrb[0].mxu0
    %v291 = vadd.f32 %v124, %v290
    %v292 = vpop.f32.mrb[0].mxu0
    %v293 = vadd.f32 %v128, %v292
    %v294 = vpop.f32.mrb[0].mxu0
    %v295 = vadd.f32 %v124, %v294
    %v296 = vpop.f32.mrb[0].mxu0
    %v297 = vadd.f32 %v128, %v296
    %298 = vdwg.mxu0
    %299 = vmatprep.subr.bf16.mxu0 %v156
    %300 = vmatpush1.bf16.msra.mxu0 %v155
    %301 = vmatprep.subr.bf16.mxu0 0
    %302 = vmatpush1.bf16.msra.mxu0 0
    %303 = vmatprep.subr.bf16.mxu0 0
    %304 = vmatpush1.bf16.msra.mxu0 0
    %305 = vmatprep.subr.bf16.mxu0 0
    %306 = vmatpush1.bf16.msra.mxu0 0
    %307 = vmatprep.subr.bf16.mxu0 0
    %308 = vmatpush1.bf16.msra.mxu0 0
    %309 = vmatprep.subr.bf16.mxu0 0
    %310 = vmatpush1.bf16.msra.mxu0 0
    %311 = vmatprep.subr.bf16.mxu0 0
    %312 = vmatpush1.bf16.msra.mxu0 0
    %313 = vmatprep.subr.bf16.mxu0 0
    %314 = vmatpush1.bf16.msra.mxu0 0
    %315 = vmatprep.subr.bf16.mxu0 0
    %316 = vmatpush1.bf16.msra.mxu0 0
    %317 = vmatprep.subr.bf16.mxu0 0
    %318 = vmatpush1.bf16.msra.mxu0 0
    %319 = vmatprep.subr.bf16.mxu0 0
    %320 = vmatpush1.bf16.msra.mxu0 0
    %321 = vmatprep.subr.bf16.mxu0 0
    %322 = vmatpush1.bf16.msra.mxu0 0
    %323 = vmatprep.subr.bf16.mxu0 0
    %324 = vmatpush1.bf16.msra.mxu0 0
    %325 = vmatprep.subr.bf16.mxu0 0
    %326 = vmatpush1.bf16.msra.mxu0 0
    %327 = vmatprep.subr.bf16.mxu0 0
    %328 = vmatpush1.bf16.msra.mxu0 0
    %329 = vmatprep.subr.bf16.mxu0 0
    %330 = vmatpush1.bf16.msra.mxu0 0
    %331 = vmatprep.mubr.bf16.mxu0 0
    %332 = vmatmul.mubr.bf16.gmra.mrb[0].mxu0 %v163
    %v333 = vpop.f32.mrb[0].mxu0
    %v334 = vadd.f32 %v132, %v333
    %v335 = vpop.f32.mrb[0].mxu0
    %v336 = vadd.f32 %v136, %v335
    %v337 = vpop.f32.mrb[0].mxu0
    %v338 = vadd.f32 %v132, %v337
    %v339 = vpop.f32.mrb[0].mxu0
    %v340 = vadd.f32 %v136, %v339
    %341 = vmatprep.mubr.bf16.mxu0 0
    %342 = vmatmul.mubr.bf16.gmra.mrb[0].mxu0 %v166
    %v343 = vpop.f32.mrb[0].mxu0
    %v344 = vadd.f32 %v132, %v343
    %v345 = vpop.f32.mrb[0].mxu0
    %v346 = vadd.f32 %v136, %v345
    %v347 = vpop.f32.mrb[0].mxu0
    %v348 = vadd.f32 %v132, %v347
    %v349 = vpop.f32.mrb[0].mxu0
    %v350 = vadd.f32 %v136, %v349
    %351 = vmatprep.mubr.bf16.mxu0 0
    %352 = vmatmul.mubr.bf16.gmra.mrb[0].mxu0 %v169
    %v353 = vpop.f32.mrb[0].mxu0
    %v354 = vadd.f32 %v132, %v353
    %v355 = vpop.f32.mrb[0].mxu0
    %v356 = vadd.f32 %v136, %v355
    %v357 = vpop.f32.mrb[0].mxu0
    %v358 = vadd.f32 %v132, %v357
    %v359 = vpop.f32.mrb[0].mxu0
    %v360 = vadd.f32 %v136, %v359
    %361 = vmatprep.mubr.bf16.mxu0 0
    %362 = vmatmul.mubr.bf16.gmra.mrb[0].mxu0 %v172
    %v363 = vpop.f32.mrb[0].mxu0
    %v364 = vadd.f32 %v132, %v363
    %v365 = vpop.f32.mrb[0].mxu0
    %v366 = vadd.f32 %v136, %v365
    %v367 = vpop.f32.mrb[0].mxu0
    %v368 = vadd.f32 %v132, %v367
    %v369 = vpop.f32.mrb[0].mxu0
    %v370 = vadd.f32 %v136, %v369
    %371 = vmatprep.mubr.bf16.mxu0 0
    %372 = vmatmul.mubr.bf16.gmra.mrb[0].mxu0 %v175
    %v373 = vpop.f32.mrb[0].mxu0
    %v374 = vadd.f32 %v132, %v373
    %v375 = vpop.f32.mrb[0].mxu0
    %v376 = vadd.f32 %v136, %v375
    %v377 = vpop.f32.mrb[0].mxu0
    %v378 = vadd.f32 %v132, %v377
    %v379 = vpop.f32.mrb[0].mxu0
    %v380 = vadd.f32 %v136, %v379
    %381 = vmatprep.mubr.bf16.mxu0 0
    %382 = vmatmul.mubr.bf16.gmra.mrb[0].mxu0 %v178
    %v383 = vpop.f32.mrb[0].mxu0
    %v384 = vadd.f32 %v132, %v383
    %v385 = vpop.f32.mrb[0].mxu0
    %v386 = vadd.f32 %v136, %v385
    %v387 = vpop.f32.mrb[0].mxu0
    %v388 = vadd.f32 %v132, %v387
    %v389 = vpop.f32.mrb[0].mxu0
    %v390 = vadd.f32 %v136, %v389
    %391 = vmatprep.mubr.bf16.mxu0 0
    %392 = vmatmul.mubr.bf16.gmra.mrb[0].mxu0 %v181
    %v393 = vpop.f32.mrb[0].mxu0
    %v394 = vadd.f32 %v132, %v393
    %v395 = vpop.f32.mrb[0].mxu0
    %v396 = vadd.f32 %v136, %v395
    %v397 = vpop.f32.mrb[0].mxu0
    %v398 = vadd.f32 %v132, %v397
    %v399 = vpop.f32.mrb[0].mxu0
    %v400 = vadd.f32 %v136, %v399
    %401 = vmatprep.mubr.bf16.mxu0 0
    %402 = vmatmul.mubr.bf16.gmra.mrb[0].mxu0 %v184
    %v403 = vpop.f32.mrb[0].mxu0
    %v404 = vadd.f32 %v132, %v403
    %v405 = vpop.f32.mrb[0].mxu0
    %v406 = vadd.f32 %v136, %v405
    %v407 = vpop.f32.mrb[0].mxu0
    %v408 = vadd.f32 %v132, %v407
    %v409 = vpop.f32.mrb[0].mxu0
    %v410 = vadd.f32 %v136, %v409
    %411 = vdwg.mxu0
    %v412 = vmax.f32 %v221, 0.0
    %v413 = vmax.f32 %v223, 0.0
    %v414 = vmax.f32 %v334, 0.0
    %v415 = vmax.f32 %v336, 0.0
    %v416 = vmax.f32 %v225, 0.0
    %v417 = vmax.f32 %v227, 0.0
    %v418 = vmax.f32 %v338, 0.0
    %v419 = vmax.f32 %v340, 0.0
    %v420 = vmax.f32 %v231, 0.0
    %v421 = vmax.f32 %v233, 0.0
    %v422 = vmax.f32 %v344, 0.0
    %v423 = vmax.f32 %v346, 0.0
    %v424 = vmax.f32 %v235, 0.0
    %v425 = vmax.f32 %v237, 0.0
    %v426 = vmax.f32 %v348, 0.0
    %v427 = vmax.f32 %v350, 0.0
    %v428 = vmax.f32 %v241, 0.0
    %v429 = vmax.f32 %v243, 0.0
    %v430 = vmax.f32 %v354, 0.0
    %v431 = vmax.f32 %v356, 0.0
    %v432 = vmax.f32 %v245, 0.0
    %v433 = vmax.f32 %v247, 0.0
    %v434 = vmax.f32 %v358, 0.0
    %v435 = vmax.f32 %v360, 0.0
    %v436 = vmax.f32 %v251, 0.0
    %v437 = vmax.f32 %v253, 0.0
    %v438 = vmax.f32 %v364, 0.0
    %v439 = vmax.f32 %v366, 0.0
    %v440 = vmax.f32 %v255, 0.0
    %v441 = vmax.f32 %v257, 0.0
    %v442 = vmax.f32 %v368, 0.0
    %v443 = vmax.f32 %v370, 0.0
    %v444 = vmax.f32 %v261, 0.0
    %v445 = vmax.f32 %v263, 0.0
    %v446 = vmax.f32 %v374, 0.0
    %v447 = vmax.f32 %v376, 0.0
    %v448 = vmax.f32 %v265, 0.0
    %v449 = vmax.f32 %v267, 0.0
    %v450 = vmax.f32 %v378, 0.0
    %v451 = vmax.f32 %v380, 0.0
    %v452 = vmax.f32 %v271, 0.0
    %v453 = vmax.f32 %v273, 0.0
    %v454 = vmax.f32 %v384, 0.0
    %v455 = vmax.f32 %v386, 0.0
    %v456 = vmax.f32 %v275, 0.0
    %v457 = vmax.f32 %v277, 0.0
    %v458 = vmax.f32 %v388, 0.0
    %v459 = vmax.f32 %v390, 0.0
    %v460 = vmax.f32 %v281, 0.0
    %v461 = vmax.f32 %v283, 0.0
    %v462 = vmax.f32 %v394, 0.0
    %v463 = vmax.f32 %v396, 0.0
    %v464 = vmax.f32 %v285, 0.0
    %v465 = vmax.f32 %v287, 0.0
    %v466 = vmax.f32 %v398, 0.0
    %v467 = vmax.f32 %v400, 0.0
    %v468 = vmax.f32 %v291, 0.0
    %v469 = vmax.f32 %v293, 0.0
    %v470 = vmax.f32 %v404, 0.0
    %v471 = vmax.f32 %v406, 0.0
    %v472 = vmax.f32 %v295, 0.0
    %v473 = vmax.f32 %v297, 0.0
    %v474 = vmax.f32 %v408, 0.0
    %v475 = vmax.f32 %v410, 0.0
    %v476 = vadd.f32 %v412, %v413
    %v477 = vadd.f32 %v476, %v414
    %v478 = vadd.f32 %v477, %v415
    %479 = vadd.xlane.f32.xlu0 %v478
    %v480 = vpop.xlane.xlu0 %479
    %v481 = vadd.f32 %v416, %v417
    %v482 = vadd.f32 %v481, %v418
    %v483 = vadd.f32 %v482, %v419
    %484 = vadd.xlane.f32.xlu0 %v483
    %v485 = vpop.xlane.xlu0 %484
    %v486 = vadd.f32 %v420, %v421
    %v487 = vadd.f32 %v486, %v422
    %v488 = vadd.f32 %v487, %v423
    %489 = vadd.xlane.f32.xlu0 %v488
    %v490 = vpop.xlane.xlu0 %489
    %v491 = vadd.f32 %v424, %v425
    %v492 = vadd.f32 %v491, %v426
    %v493 = vadd.f32 %v492, %v427
    %494 = vadd.xlane.f32.xlu0 %v493
    %v495 = vpop.xlane.xlu0 %494
    %v496 = vadd.f32 %v428, %v429
    %v497 = vadd.f32 %v496, %v430
    %v498 = vadd.f32 %v497, %v431
    %499 = vadd.xlane.f32.xlu0 %v498
    %v500 = vpop.xlane.xlu0 %499
    %v501 = vadd.f32 %v432, %v433
    %v502 = vadd.f32 %v501, %v434
    %v503 = vadd.f32 %v502, %v435
    %504 = vadd.xlane.f32.xlu0 %v503
    %v505 = vpop.xlane.xlu0 %504
    %v506 = vadd.f32 %v436, %v437
    %v507 = vadd.f32 %v506, %v438
    %v508 = vadd.f32 %v507, %v439
    %509 = vadd.xlane.f32.xlu0 %v508
    %v510 = vpop.xlane.xlu0 %509
    %v511 = vadd.f32 %v440, %v441
    %v512 = vadd.f32 %v511, %v442
    %v513 = vadd.f32 %v512, %v443
    %514 = vadd.xlane.f32.xlu0 %v513
    %v515 = vpop.xlane.xlu0 %514
    %v516 = vadd.f32 %v444, %v445
    %v517 = vadd.f32 %v516, %v446
    %v518 = vadd.f32 %v517, %v447
    %519 = vadd.xlane.f32.xlu0 %v518
    %v520 = vpop.xlane.xlu0 %519
    %v521 = vadd.f32 %v448, %v449
    %v522 = vadd.f32 %v521, %v450
    %v523 = vadd.f32 %v522, %v451
    %524 = vadd.xlane.f32.xlu0 %v523
    %v525 = vpop.xlane.xlu0 %524
    %v526 = vadd.f32 %v452, %v453
    %v527 = vadd.f32 %v526, %v454
    %v528 = vadd.f32 %v527, %v455
    %529 = vadd.xlane.f32.xlu0 %v528
    %v530 = vpop.xlane.xlu0 %529
    %v531 = vadd.f32 %v456, %v457
    %v532 = vadd.f32 %v531, %v458
    %v533 = vadd.f32 %v532, %v459
    %534 = vadd.xlane.f32.xlu0 %v533
    %v535 = vpop.xlane.xlu0 %534
    %v536 = vadd.f32 %v460, %v461
    %v537 = vadd.f32 %v536, %v462
    %v538 = vadd.f32 %v537, %v463
    %539 = vadd.xlane.f32.xlu0 %v538
    %v540 = vpop.xlane.xlu0 %539
    %v541 = vadd.f32 %v464, %v465
    %v542 = vadd.f32 %v541, %v466
    %v543 = vadd.f32 %v542, %v467
    %544 = vadd.xlane.f32.xlu0 %v543
    %v545 = vpop.xlane.xlu0 %544
    %v546 = vadd.f32 %v468, %v469
    %v547 = vadd.f32 %v546, %v470
    %v548 = vadd.f32 %v547, %v471
    %549 = vadd.xlane.f32.xlu0 %v548
    %v550 = vpop.xlane.xlu0 %549
    %v551 = vadd.f32 %v472, %v473
    %v552 = vadd.f32 %v551, %v474
    %v553 = vadd.f32 %v552, %v475
    %554 = vadd.xlane.f32.xlu0 %v553
    %v555 = vpop.xlane.xlu0 %554
    %v556 = vrcp.pop 512.0
    %v557 = vmul.f32 %v480, %v556
    %v558 = vmul.f32 %v485, %v556
    %v559 = vmul.f32 %v490, %v556
    %v560 = vmul.f32 %v495, %v556
    %v561 = vmul.f32 %v500, %v556
    %v562 = vmul.f32 %v505, %v556
    %v563 = vmul.f32 %v510, %v556
    %v564 = vmul.f32 %v515, %v556
    %v565 = vmul.f32 %v520, %v556
    %v566 = vmul.f32 %v525, %v556
    %v567 = vmul.f32 %v530, %v556
    %v568 = vmul.f32 %v535, %v556
    %v569 = vmul.f32 %v540, %v556
    %v570 = vmul.f32 %v545, %v556
    %v571 = vmul.f32 %v550, %v556
    %v572 = vmul.f32 %v555, %v556
    %v573 = vsub.f32 %v412, %v557
    %v574 = vsub.f32 %v413, %v557
    %v575 = vsub.f32 %v414, %v557
    %v576 = vsub.f32 %v415, %v557
    %v577 = vsub.f32 %v416, %v558
    %v578 = vsub.f32 %v417, %v558
    %v579 = vsub.f32 %v418, %v558
    %v580 = vsub.f32 %v419, %v558
    %v581 = vsub.f32 %v420, %v559
    %v582 = vsub.f32 %v421, %v559
    %v583 = vsub.f32 %v422, %v559
    %v584 = vsub.f32 %v423, %v559
    %v585 = vsub.f32 %v424, %v560
    %v586 = vsub.f32 %v425, %v560
    %v587 = vsub.f32 %v426, %v560
    %v588 = vsub.f32 %v427, %v560
    %v589 = vsub.f32 %v428, %v561
    %v590 = vsub.f32 %v429, %v561
    %v591 = vsub.f32 %v430, %v561
    %v592 = vsub.f32 %v431, %v561
    %v593 = vsub.f32 %v432, %v562
    %v594 = vsub.f32 %v433, %v562
    %v595 = vsub.f32 %v434, %v562
    %v596 = vsub.f32 %v435, %v562
    %v597 = vsub.f32 %v436, %v563
    %v598 = vsub.f32 %v437, %v563
    %v599 = vsub.f32 %v438, %v563
    %v600 = vsub.f32 %v439, %v563
    %v601 = vsub.f32 %v440, %v564
    %v602 = vsub.f32 %v441, %v564
    %v603 = vsub.f32 %v442, %v564
    %v604 = vsub.f32 %v443, %v564
    %v605 = vsub.f32 %v444, %v565
    %v606 = vsub.f32 %v445, %v565
    %v607 = vsub.f32 %v446, %v565
    %v608 = vsub.f32 %v447, %v565
    %v609 = vsub.f32 %v448, %v566
    %v610 = vsub.f32 %v449, %v566
    %v611 = vsub.f32 %v450, %v566
    %v612 = vsub.f32 %v451, %v566
    %v613 = vsub.f32 %v452, %v567
    %v614 = vsub.f32 %v453, %v567
    %v615 = vsub.f32 %v454, %v567
    %v616 = vsub.f32 %v455, %v567
    %v617 = vsub.f32 %v456, %v568
    %v618 = vsub.f32 %v457, %v568
    %v619 = vsub.f32 %v458, %v568
    %v620 = vsub.f32 %v459, %v568
    %v621 = vsub.f32 %v460, %v569
    %v622 = vsub.f32 %v461, %v569
    %v623 = vsub.f32 %v462, %v569
    %v624 = vsub.f32 %v463, %v569
    %v625 = vsub.f32 %v464, %v570
    %v626 = vsub.f32 %v465, %v570
    %v627 = vsub.f32 %v466, %v570
    %v628 = vsub.f32 %v467, %v570
    %v629 = vsub.f32 %v468, %v571
    %v630 = vsub.f32 %v469, %v571
    %v631 = vsub.f32 %v470, %v571
    %v632 = vsub.f32 %v471, %v571
    %v633 = vsub.f32 %v472, %v572
    %v634 = vsub.f32 %v473, %v572
    %v635 = vsub.f32 %v474, %v572
    %v636 = vsub.f32 %v475, %v572
    %v637 = vmul.f32 %v573, %v573
    %v638 = vmul.f32 %v574, %v574
    %v639 = vmul.f32 %v575, %v575
    %v640 = vmul.f32 %v576, %v576
    %v641 = vmul.f32 %v577, %v577
    %v642 = vmul.f32 %v578, %v578
    %v643 = vmul.f32 %v579, %v579
    %v644 = vmul.f32 %v580, %v580
    %v645 = vmul.f32 %v581, %v581
    %v646 = vmul.f32 %v582, %v582
    %v647 = vmul.f32 %v583, %v583
    %v648 = vmul.f32 %v584, %v584
    %v649 = vmul.f32 %v585, %v585
    %v650 = vmul.f32 %v586, %v586
    %v651 = vmul.f32 %v587, %v587
    %v652 = vmul.f32 %v588, %v588
    %v653 = vmul.f32 %v589, %v589
    %v654 = vmul.f32 %v590, %v590
    %v655 = vmul.f32 %v591, %v591
    %v656 = vmul.f32 %v592, %v592
    %v657 = vmul.f32 %v593, %v593
    %v658 = vmul.f32 %v594, %v594
    %v659 = vmul.f32 %v595, %v595
    %v660 = vmul.f32 %v596, %v596
    %v661 = vmul.f32 %v597, %v597
    %v662 = vmul.f32 %v598, %v598
    %v663 = vmul.f32 %v599, %v599
    %v664 = vmul.f32 %v600, %v600
    %v665 = vmul.f32 %v601, %v601
    %v666 = vmul.f32 %v602, %v602
    %v667 = vmul.f32 %v603, %v603
    %v668 = vmul.f32 %v604, %v604
    %v669 = vmul.f32 %v605, %v605
    %v670 = vmul.f32 %v606, %v606
    %v671 = vmul.f32 %v607, %v607
    %v672 = vmul.f32 %v608, %v608
    %v673 = vmul.f32 %v609, %v609
    %v674 = vmul.f32 %v610, %v610
    %v675 = vmul.f32 %v611, %v611
    %v676 = vmul.f32 %v612, %v612
    %v677 = vmul.f32 %v613, %v613
    %v678 = vmul.f32 %v614, %v614
    %v679 = vmul.f32 %v615, %v615
    %v680 = vmul.f32 %v616, %v616
    %v681 = vmul.f32 %v617, %v617
    %v682 = vmul.f32 %v618, %v618
    %v683 = vmul.f32 %v619, %v619
    %v684 = vmul.f32 %v620, %v620
    %v685 = vmul.f32 %v621, %v621
    %v686 = vmul.f32 %v622, %v622
    %v687 = vmul.f32 %v623, %v623
    %v688 = vmul.f32 %v624, %v624
    %v689 = vmul.f32 %v625, %v625
    %v690 = vmul.f32 %v626, %v626
    %v691 = vmul.f32 %v627, %v627
    %v692 = vmul.f32 %v628, %v628
    %v693 = vmul.f32 %v629, %v629
    %v694 = vmul.f32 %v630, %v630
    %v695 = vmul.f32 %v631, %v631
    %v696 = vmul.f32 %v632, %v632
    %v697 = vmul.f32 %v633, %v633
    %v698 = vmul.f32 %v634, %v634
    %v699 = vmul.f32 %v635, %v635
    %v700 = vmul.f32 %v636, %v636
    %v701 = vadd.f32 %v637, %v638
    %v702 = vadd.f32 %v701, %v639
    %v703 = vadd.f32 %v702, %v640
    %704 = vadd.xlane.f32.xlu0 %v703
    %v705 = vpop.xlane.xlu0 %704
    %v706 = vadd.f32 %v641, %v642
    %v707 = vadd.f32 %v706, %v643
    %v708 = vadd.f32 %v707, %v644
    %709 = vadd.xlane.f32.xlu0 %v708
    %v710 = vpop.xlane.xlu0 %709
    %v711 = vadd.f32 %v645, %v646
    %v712 = vadd.f32 %v711, %v647
    %v713 = vadd.f32 %v712, %v648
    %714 = vadd.xlane.f32.xlu0 %v713
    %v715 = vpop.xlane.xlu0 %714
    %v716 = vadd.f32 %v649, %v650
    %v717 = vadd.f32 %v716, %v651
    %v718 = vadd.f32 %v717, %v652
    %719 = vadd.xlane.f32.xlu0 %v718
    %v720 = vpop.xlane.xlu0 %719
    %v721 = vadd.f32 %v653, %v654
    %v722 = vadd.f32 %v721, %v655
    %v723 = vadd.f32 %v722, %v656
    %724 = vadd.xlane.f32.xlu0 %v723
    %v725 = vpop.xlane.xlu0 %724
    %v726 = vadd.f32 %v657, %v658
    %v727 = vadd.f32 %v726, %v659
    %v728 = vadd.f32 %v727, %v660
    %729 = vadd.xlane.f32.xlu0 %v728
    %v730 = vpop.xlane.xlu0 %729
    %v731 = vadd.f32 %v661, %v662
    %v732 = vadd.f32 %v731, %v663
    %v733 = vadd.f32 %v732, %v664
    %734 = vadd.xlane.f32.xlu0 %v733
    %v735 = vpop.xlane.xlu0 %734
    %v736 = vadd.f32 %v665, %v666
    %v737 = vadd.f32 %v736, %v667
    %v738 = vadd.f32 %v737, %v668
    %739 = vadd.xlane.f32.xlu0 %v738
    %v740 = vpop.xlane.xlu0 %739
    %v741 = vadd.f32 %v669, %v670
    %v742 = vadd.f32 %v741, %v671
    %v743 = vadd.f32 %v742, %v672
    %744 = vadd.xlane.f32.xlu0 %v743
    %v745 = vpop.xlane.xlu0 %744
    %v746 = vadd.f32 %v673, %v674
    %v747 = vadd.f32 %v746, %v675
    %v748 = vadd.f32 %v747, %v676
    %749 = vadd.xlane.f32.xlu0 %v748
    %v750 = vpop.xlane.xlu0 %749
    %v751 = vadd.f32 %v677, %v678
    %v752 = vadd.f32 %v751, %v679
    %v753 = vadd.f32 %v752, %v680
    %754 = vadd.xlane.f32.xlu0 %v753
    %v755 = vpop.xlane.xlu0 %754
    %v756 = vadd.f32 %v681, %v682
    %v757 = vadd.f32 %v756, %v683
    %v758 = vadd.f32 %v757, %v684
    %759 = vadd.xlane.f32.xlu0 %v758
    %v760 = vpop.xlane.xlu0 %759
    %v761 = vadd.f32 %v685, %v686
    %v762 = vadd.f32 %v761, %v687
    %v763 = vadd.f32 %v762, %v688
    %764 = vadd.xlane.f32.xlu0 %v763
    %v765 = vpop.xlane.xlu0 %764
    %v766 = vadd.f32 %v689, %v690
    %v767 = vadd.f32 %v766, %v691
    %v768 = vadd.f32 %v767, %v692
    %769 = vadd.xlane.f32.xlu0 %v768
    %v770 = vpop.xlane.xlu0 %769
    %v771 = vadd.f32 %v693, %v694
    %v772 = vadd.f32 %v771, %v695
    %v773 = vadd.f32 %v772, %v696
    %774 = vadd.xlane.f32.xlu0 %v773
    %v775 = vpop.xlane.xlu0 %774
    %v776 = vadd.f32 %v697, %v698
    %v777 = vadd.f32 %v776, %v699
    %v778 = vadd.f32 %v777, %v700
    %779 = vadd.xlane.f32.xlu0 %v778
    %v780 = vpop.xlane.xlu0 %779
    %v781 = vmul.f32 %v705, %v556
    %v782 = vmul.f32 %v710, %v556
    %v783 = vmul.f32 %v715, %v556
    %v784 = vmul.f32 %v720, %v556
    %v785 = vmul.f32 %v725, %v556
    %v786 = vmul.f32 %v730, %v556
    %v787 = vmul.f32 %v735, %v556
    %v788 = vmul.f32 %v740, %v556
    %v789 = vmul.f32 %v745, %v556
    %v790 = vmul.f32 %v750, %v556
    %v791 = vmul.f32 %v755, %v556
    %v792 = vmul.f32 %v760, %v556
    %v793 = vmul.f32 %v765, %v556
    %v794 = vmul.f32 %v770, %v556
    %v795 = vmul.f32 %v775, %v556
    %v796 = vmul.f32 %v780, %v556
    %v797 = vadd.f32 %v781, 1e-05
    %v798 = vadd.f32 %v782, 1e-05
    %v799 = vadd.f32 %v783, 1e-05
    %v800 = vadd.f32 %v784, 1e-05
    %v801 = vadd.f32 %v785, 1e-05
    %v802 = vadd.f32 %v786, 1e-05
    %v803 = vadd.f32 %v787, 1e-05
    %v804 = vadd.f32 %v788, 1e-05
    %v805 = vadd.f32 %v789, 1e-05
    %v806 = vadd.f32 %v790, 1e-05
    %v807 = vadd.f32 %v791, 1e-05
    %v808 = vadd.f32 %v792, 1e-05
    %v809 = vadd.f32 %v793, 1e-05
    %v810 = vadd.f32 %v794, 1e-05
    %v811 = vadd.f32 %v795, 1e-05
    %v812 = vadd.f32 %v796, 1e-05
    %v813 = vrsqrt.pop %v797
    %v814 = vrsqrt.pop %v798
    %v815 = vrsqrt.pop %v799
    %v816 = vrsqrt.pop %v800
    %v817 = vrsqrt.pop %v801
    %v818 = vrsqrt.pop %v802
    %v819 = vrsqrt.pop %v803
    %v820 = vrsqrt.pop %v804
    %v821 = vrsqrt.pop %v805
    %v822 = vrsqrt.pop %v806
    %v823 = vrsqrt.pop %v807
    %v824 = vrsqrt.pop %v808
    %v825 = vrsqrt.pop %v809
    %v826 = vrsqrt.pop %v810
    %v827 = vrsqrt.pop %v811
    %v828 = vrsqrt.pop %v812
    %v829 = vmul.f32 %v573, %v813
    %v830 = vmul.f32 %v574, %v813
    %v831 = vmul.f32 %v575, %v813
    %v832 = vmul.f32 %v576, %v813
    %v833 = vmul.f32 %v577, %v814
    %v834 = vmul.f32 %v578, %v814
    %v835 = vmul.f32 %v579, %v814
    %v836 = vmul.f32 %v580, %v814
    %v837 = vmul.f32 %v581, %v815
    %v838 = vmul.f32 %v582, %v815
    %v839 = vmul.f32 %v583, %v815
    %v840 = vmul.f32 %v584, %v815
    %v841 = vmul.f32 %v585, %v816
    %v842 = vmul.f32 %v586, %v816
    %v843 = vmul.f32 %v587, %v816
    %v844 = vmul.f32 %v588, %v816
    %v845 = vmul.f32 %v589, %v817
    %v846 = vmul.f32 %v590, %v817
    %v847 = vmul.f32 %v591, %v817
    %v848 = vmul.f32 %v592, %v817
    %v849 = vmul.f32 %v593, %v818
    %v850 = vmul.f32 %v594, %v818
    %v851 = vmul.f32 %v595, %v818
    %v852 = vmul.f32 %v596, %v818
    %v853 = vmul.f32 %v597, %v819
    %v854 = vmul.f32 %v598, %v819
    %v855 = vmul.f32 %v599, %v819
    %v856 = vmul.f32 %v600, %v819
    %v857 = vmul.f32 %v601, %v820
    %v858 = vmul.f32 %v602, %v820
    %v859 = vmul.f32 %v603, %v820
    %v860 = vmul.f32 %v604, %v820
    %v861 = vmul.f32 %v605, %v821
    %v862 = vmul.f32 %v606, %v821
    %v863 = vmul.f32 %v607, %v821
    %v864 = vmul.f32 %v608, %v821
    %v865 = vmul.f32 %v609, %v822
    %v866 = vmul.f32 %v610, %v822
    %v867 = vmul.f32 %v611, %v822
    %v868 = vmul.f32 %v612, %v822
    %v869 = vmul.f32 %v613, %v823
    %v870 = vmul.f32 %v614, %v823
    %v871 = vmul.f32 %v615, %v823
    %v872 = vmul.f32 %v616, %v823
    %v873 = vmul.f32 %v617, %v824
    %v874 = vmul.f32 %v618, %v824
    %v875 = vmul.f32 %v619, %v824
    %v876 = vmul.f32 %v620, %v824
    %v877 = vmul.f32 %v621, %v825
    %v878 = vmul.f32 %v622, %v825
    %v879 = vmul.f32 %v623, %v825
    %v880 = vmul.f32 %v624, %v825
    %v881 = vmul.f32 %v625, %v826
    %v882 = vmul.f32 %v626, %v826
    %v883 = vmul.f32 %v627, %v826
    %v884 = vmul.f32 %v628, %v826
    %v885 = vmul.f32 %v629, %v827
    %v886 = vmul.f32 %v630, %v827
    %v887 = vmul.f32 %v631, %v827
    %v888 = vmul.f32 %v632, %v827
    %v889 = vmul.f32 %v633, %v828
    %v890 = vmul.f32 %v634, %v828
    %v891 = vmul.f32 %v635, %v828
    %v892 = vmul.f32 %v636, %v828
    %v893 = vld [vmem:[%s3] sm:$0xf]
    %v895 = vlaneseq
    %v896 = vshrl.u32 %v895, 7
    %v897 = vsub.s32 0, %v896
    %v898 = vrot.slane %v893, %v897
    %v899 = vlaneseq
    %v900 = vshrl.u32 %v899, 7
    %v901 = vsub.s32 1, %v900
    %v902 = vrot.slane %v893, %v901
    %v903 = vlaneseq
    %v904 = vshrl.u32 %v903, 7
    %v905 = vsub.s32 2, %v904
    %v906 = vrot.slane %v893, %v905
    %v907 = vlaneseq
    %v908 = vshrl.u32 %v907, 7
    %v909 = vsub.s32 3, %v908
    %v910 = vrot.slane %v893, %v909
    %v915 = vmul.f32 %v829, %v898
    %v916 = vmul.f32 %v830, %v902
    %v917 = vmul.f32 %v831, %v906
    %v918 = vmul.f32 %v832, %v910
    %v919 = vmul.f32 %v833, %v898
    %v920 = vmul.f32 %v834, %v902
    %v921 = vmul.f32 %v835, %v906
    %v922 = vmul.f32 %v836, %v910
    %v923 = vmul.f32 %v837, %v898
    %v924 = vmul.f32 %v838, %v902
    %v925 = vmul.f32 %v839, %v906
    %v926 = vmul.f32 %v840, %v910
    %v927 = vmul.f32 %v841, %v898
    %v928 = vmul.f32 %v842, %v902
    %v929 = vmul.f32 %v843, %v906
    %v930 = vmul.f32 %v844, %v910
    %v931 = vmul.f32 %v845, %v898
    %v932 = vmul.f32 %v846, %v902
    %v933 = vmul.f32 %v847, %v906
    %v934 = vmul.f32 %v848, %v910
    %v935 = vmul.f32 %v849, %v898
    %v936 = vmul.f32 %v850, %v902
    %v937 = vmul.f32 %v851, %v906
    %v938 = vmul.f32 %v852, %v910
    %v939 = vmul.f32 %v853, %v898
    %v940 = vmul.f32 %v854, %v902
    %v941 = vmul.f32 %v855, %v906
    %v942 = vmul.f32 %v856, %v910
    %v943 = vmul.f32 %v857, %v898
    %v944 = vmul.f32 %v858, %v902
    %v945 = vmul.f32 %v859, %v906
    %v946 = vmul.f32 %v860, %v910
    %v947 = vmul.f32 %v861, %v898
    %v948 = vmul.f32 %v862, %v902
    %v949 = vmul.f32 %v863, %v906
    %v950 = vmul.f32 %v864, %v910
    %v951 = vmul.f32 %v865, %v898
    %v952 = vmul.f32 %v866, %v902
    %v953 = vmul.f32 %v867, %v906
    %v954 = vmul.f32 %v868, %v910
    %v955 = vmul.f32 %v869, %v898
    %v956 = vmul.f32 %v870, %v902
    %v957 = vmul.f32 %v871, %v906
    %v958 = vmul.f32 %v872, %v910
    %v959 = vmul.f32 %v873, %v898
    %v960 = vmul.f32 %v874, %v902
    %v961 = vmul.f32 %v875, %v906
    %v962 = vmul.f32 %v876, %v910
    %v963 = vmul.f32 %v877, %v898
    %v964 = vmul.f32 %v878, %v902
    %v965 = vmul.f32 %v879, %v906
    %v966 = vmul.f32 %v880, %v910
    %v967 = vmul.f32 %v881, %v898
    %v968 = vmul.f32 %v882, %v902
    %v969 = vmul.f32 %v883, %v906
    %v970 = vmul.f32 %v884, %v910
    %v971 = vmul.f32 %v885, %v898
    %v972 = vmul.f32 %v886, %v902
    %v973 = vmul.f32 %v887, %v906
    %v974 = vmul.f32 %v888, %v910
    %v975 = vmul.f32 %v889, %v898
    %v976 = vmul.f32 %v890, %v902
    %v977 = vmul.f32 %v891, %v906
    %v978 = vmul.f32 %v892, %v910
    %v979 = vld [vmem:[%s4] sm:$0xf]
    %v981 = vlaneseq
    %v982 = vshrl.u32 %v981, 7
    %v983 = vsub.s32 0, %v982
    %v984 = vrot.slane %v979, %v983
    %v985 = vlaneseq
    %v986 = vshrl.u32 %v985, 7
    %v987 = vsub.s32 1, %v986
    %v988 = vrot.slane %v979, %v987
    %v989 = vlaneseq
    %v990 = vshrl.u32 %v989, 7
    %v991 = vsub.s32 2, %v990
    %v992 = vrot.slane %v979, %v991
    %v993 = vlaneseq
    %v994 = vshrl.u32 %v993, 7
    %v995 = vsub.s32 3, %v994
    %v996 = vrot.slane %v979, %v995
    %v1001 = vadd.f32 %v915, %v984
    %v1002 = vadd.f32 %v916, %v988
    %v1003 = vadd.f32 %v917, %v992
    %v1004 = vadd.f32 %v918, %v996
    %v1005 = vadd.f32 %v919, %v984
    %v1006 = vadd.f32 %v920, %v988
    %v1007 = vadd.f32 %v921, %v992
    %v1008 = vadd.f32 %v922, %v996
    %v1009 = vadd.f32 %v923, %v984
    %v1010 = vadd.f32 %v924, %v988
    %v1011 = vadd.f32 %v925, %v992
    %v1012 = vadd.f32 %v926, %v996
    %v1013 = vadd.f32 %v927, %v984
    %v1014 = vadd.f32 %v928, %v988
    %v1015 = vadd.f32 %v929, %v992
    %v1016 = vadd.f32 %v930, %v996
    %v1017 = vadd.f32 %v931, %v984
    %v1018 = vadd.f32 %v932, %v988
    %v1019 = vadd.f32 %v933, %v992
    %v1020 = vadd.f32 %v934, %v996
    %v1021 = vadd.f32 %v935, %v984
    %v1022 = vadd.f32 %v936, %v988
    %v1023 = vadd.f32 %v937, %v992
    %v1024 = vadd.f32 %v938, %v996
    %v1025 = vadd.f32 %v939, %v984
    %v1026 = vadd.f32 %v940, %v988
    %v1027 = vadd.f32 %v941, %v992
    %v1028 = vadd.f32 %v942, %v996
    %v1029 = vadd.f32 %v943, %v984
    %v1030 = vadd.f32 %v944, %v988
    %v1031 = vadd.f32 %v945, %v992
    %v1032 = vadd.f32 %v946, %v996
    %v1033 = vadd.f32 %v947, %v984
    %v1034 = vadd.f32 %v948, %v988
    %v1035 = vadd.f32 %v949, %v992
    %v1036 = vadd.f32 %v950, %v996
    %v1037 = vadd.f32 %v951, %v984
    %v1038 = vadd.f32 %v952, %v988
    %v1039 = vadd.f32 %v953, %v992
    %v1040 = vadd.f32 %v954, %v996
    %v1041 = vadd.f32 %v955, %v984
    %v1042 = vadd.f32 %v956, %v988
    %v1043 = vadd.f32 %v957, %v992
    %v1044 = vadd.f32 %v958, %v996
    %v1045 = vadd.f32 %v959, %v984
    %v1046 = vadd.f32 %v960, %v988
    %v1047 = vadd.f32 %v961, %v992
    %v1048 = vadd.f32 %v962, %v996
    %v1049 = vadd.f32 %v963, %v984
    %v1050 = vadd.f32 %v964, %v988
    %v1051 = vadd.f32 %v965, %v992
    %v1052 = vadd.f32 %v966, %v996
    %v1053 = vadd.f32 %v967, %v984
    %v1054 = vadd.f32 %v968, %v988
    %v1055 = vadd.f32 %v969, %v992
    %v1056 = vadd.f32 %v970, %v996
    %v1057 = vadd.f32 %v971, %v984
    %v1058 = vadd.f32 %v972, %v988
    %v1059 = vadd.f32 %v973, %v992
    %v1060 = vadd.f32 %v974, %v996
    %v1061 = vadd.f32 %v975, %v984
    %v1062 = vadd.f32 %v976, %v988
    %v1063 = vadd.f32 %v977, %v992
    %v1064 = vadd.f32 %v978, %v996
    %v1065 = vpack.c.bf16 %v1005, %v1001
    %v1066 = vpack.c.bf16 %v1006, %v1002
    %v1067 = vpack.c.bf16 %v1007, %v1003
    %v1068 = vpack.c.bf16 %v1008, %v1004
    %v1069 = vpack.c.bf16 %v1013, %v1009
    %v1070 = vpack.c.bf16 %v1014, %v1010
    %v1071 = vpack.c.bf16 %v1015, %v1011
    %v1072 = vpack.c.bf16 %v1016, %v1012
    %v1073 = vpack.c.bf16 %v1021, %v1017
    %v1074 = vpack.c.bf16 %v1022, %v1018
    %v1075 = vpack.c.bf16 %v1023, %v1019
    %v1076 = vpack.c.bf16 %v1024, %v1020
    %v1077 = vpack.c.bf16 %v1029, %v1025
    %v1078 = vpack.c.bf16 %v1030, %v1026
    %v1079 = vpack.c.bf16 %v1031, %v1027
    %v1080 = vpack.c.bf16 %v1032, %v1028
    %v1081 = vpack.c.bf16 %v1037, %v1033
    %v1082 = vpack.c.bf16 %v1038, %v1034
    %v1083 = vpack.c.bf16 %v1039, %v1035
    %v1084 = vpack.c.bf16 %v1040, %v1036
    %v1085 = vpack.c.bf16 %v1045, %v1041
    %v1086 = vpack.c.bf16 %v1046, %v1042
    %v1087 = vpack.c.bf16 %v1047, %v1043
    %v1088 = vpack.c.bf16 %v1048, %v1044
    %v1089 = vpack.c.bf16 %v1053, %v1049
    %v1090 = vpack.c.bf16 %v1054, %v1050
    %v1091 = vpack.c.bf16 %v1055, %v1051
    %v1092 = vpack.c.bf16 %v1056, %v1052
    %v1093 = vpack.c.bf16 %v1061, %v1057
    %v1094 = vpack.c.bf16 %v1062, %v1058
    %v1095 = vpack.c.bf16 %v1063, %v1059
    %v1096 = vpack.c.bf16 %v1064, %v1060
    %v1097 = vld [vmem:[#allocation2] sm:$0xff]
    %v1098 = vld [vmem:[#allocation2 + $0x8] sm:$0xff]
    %v1099 = vld [vmem:[#allocation2 + $0x10] sm:$0xff]
    %v1100 = vld [vmem:[#allocation2 + $0x18] sm:$0xff]
    %v1101 = vld [vmem:[#allocation2 + $0x20] sm:$0xff]
    %v1102 = vld [vmem:[#allocation2 + $0x28] sm:$0xff]
    %v1103 = vld [vmem:[#allocation2 + $0x30] sm:$0xff]
    %v1104 = vld [vmem:[#allocation2 + $0x38] sm:$0xff]
    %v1105 = vld [vmem:[#allocation2 + $0x40] sm:$0xff]
    %v1106 = vld [vmem:[#allocation2 + $0x48] sm:$0xff]
    %v1107 = vld [vmem:[#allocation2 + $0x50] sm:$0xff]
    %v1108 = vld [vmem:[#allocation2 + $0x58] sm:$0xff]
    %v1109 = vld [vmem:[#allocation2 + $0x60] sm:$0xff]
    %v1110 = vld [vmem:[#allocation2 + $0x68] sm:$0xff]
    %v1111 = vld [vmem:[#allocation2 + $0x70] sm:$0xff]
    %v1112 = vld [vmem:[#allocation2 + $0x78] sm:$0xff]
    %v1113 = vld [vmem:[#allocation2 + $0x80] sm:$0xff]
    %v1114 = vld [vmem:[#allocation2 + $0x88] sm:$0xff]
    %v1115 = vld [vmem:[#allocation2 + $0x90] sm:$0xff]
    %v1116 = vld [vmem:[#allocation2 + $0x98] sm:$0xff]
    %v1117 = vld [vmem:[#allocation2 + $0xa0] sm:$0xff]
    %v1118 = vld [vmem:[#allocation2 + $0xa8] sm:$0xff]
    %v1119 = vld [vmem:[#allocation2 + $0xb0] sm:$0xff]
    %v1120 = vld [vmem:[#allocation2 + $0xb8] sm:$0xff]
    %v1121 = vld [vmem:[#allocation2 + $0xc0] sm:$0xff]
    %v1122 = vld [vmem:[#allocation2 + $0xc8] sm:$0xff]
    %v1123 = vld [vmem:[#allocation2 + $0xd0] sm:$0xff]
    %v1124 = vld [vmem:[#allocation2 + $0xd8] sm:$0xff]
    %v1125 = vld [vmem:[#allocation2 + $0xe0] sm:$0xff]
    %v1126 = vld [vmem:[#allocation2 + $0xe8] sm:$0xff]
    %v1127 = vld [vmem:[#allocation2 + $0xf0] sm:$0xff]
    %v1128 = vld [vmem:[#allocation2 + $0xf8] sm:$0xff]
    %v1129 = vld [vmem:[#allocation2 + $0x100] sm:$0xff]
    %v1130 = vld [vmem:[#allocation2 + $0x108] sm:$0xff]
    %v1131 = vld [vmem:[#allocation2 + $0x110] sm:$0xff]
    %v1132 = vld [vmem:[#allocation2 + $0x118] sm:$0xff]
    %v1133 = vld [vmem:[#allocation2 + $0x120] sm:$0xff]
    %v1134 = vld [vmem:[#allocation2 + $0x128] sm:$0xff]
    %v1135 = vld [vmem:[#allocation2 + $0x130] sm:$0xff]
    %v1136 = vld [vmem:[#allocation2 + $0x138] sm:$0xff]
    %v1137 = vld [vmem:[#allocation2 + $0x140] sm:$0xff]
    %v1138 = vld [vmem:[#allocation2 + $0x148] sm:$0xff]
    %v1139 = vld [vmem:[#allocation2 + $0x150] sm:$0xff]
    %v1140 = vld [vmem:[#allocation2 + $0x158] sm:$0xff]
    %v1141 = vld [vmem:[#allocation2 + $0x160] sm:$0xff]
    %v1142 = vld [vmem:[#allocation2 + $0x168] sm:$0xff]
    %v1143 = vld [vmem:[#allocation2 + $0x170] sm:$0xff]
    %v1144 = vld [vmem:[#allocation2 + $0x178] sm:$0xff]
    %v1145 = vld [vmem:[#allocation2 + $0x180] sm:$0xff]
    %v1146 = vld [vmem:[#allocation2 + $0x188] sm:$0xff]
    %v1147 = vld [vmem:[#allocation2 + $0x190] sm:$0xff]
    %v1148 = vld [vmem:[#allocation2 + $0x198] sm:$0xff]
    %v1149 = vld [vmem:[#allocation2 + $0x1a0] sm:$0xff]
    %v1150 = vld [vmem:[#allocation2 + $0x1a8] sm:$0xff]
    %v1151 = vld [vmem:[#allocation2 + $0x1b0] sm:$0xff]
    %v1152 = vld [vmem:[#allocation2 + $0x1b8] sm:$0xff]
    %v1153 = vld [vmem:[#allocation2 + $0x1c0] sm:$0xff]
    %v1154 = vld [vmem:[#allocation2 + $0x1c8] sm:$0xff]
    %v1155 = vld [vmem:[#allocation2 + $0x1d0] sm:$0xff]
    %v1156 = vld [vmem:[#allocation2 + $0x1d8] sm:$0xff]
    %v1157 = vld [vmem:[#allocation2 + $0x1e0] sm:$0xff]
    %v1158 = vld [vmem:[#allocation2 + $0x1e8] sm:$0xff]
    %v1159 = vld [vmem:[#allocation2 + $0x1f0] sm:$0xff]
    %v1160 = vld [vmem:[#allocation2 + $0x1f8] sm:$0xff]
    %v1161 = vld [vmem:[#allocation2 + $0x200] sm:$0xff]
    %v1162 = vld [vmem:[#allocation2 + $0x208] sm:$0xff]
    %v1163 = vld [vmem:[#allocation2 + $0x210] sm:$0xff]
    %v1164 = vld [vmem:[#allocation2 + $0x218] sm:$0xff]
    %v1165 = vld [vmem:[#allocation2 + $0x220] sm:$0xff]
    %v1166 = vld [vmem:[#allocation2 + $0x228] sm:$0xff]
    %v1167 = vld [vmem:[#allocation2 + $0x230] sm:$0xff]
    %v1168 = vld [vmem:[#allocation2 + $0x238] sm:$0xff]
    %v1169 = vld [vmem:[#allocation2 + $0x240] sm:$0xff]
    %v1170 = vld [vmem:[#allocation2 + $0x248] sm:$0xff]
    %v1171 = vld [vmem:[#allocation2 + $0x250] sm:$0xff]
    %v1172 = vld [vmem:[#allocation2 + $0x258] sm:$0xff]
    %v1173 = vld [vmem:[#allocation2 + $0x260] sm:$0xff]
    %v1174 = vld [vmem:[#allocation2 + $0x268] sm:$0xff]
    %v1175 = vld [vmem:[#allocation2 + $0x270] sm:$0xff]
    %v1176 = vld [vmem:[#allocation2 + $0x278] sm:$0xff]
    %v1177 = vld [vmem:[#allocation2 + $0x280] sm:$0xff]
    %v1178 = vld [vmem:[#allocation2 + $0x288] sm:$0xff]
    %v1179 = vld [vmem:[#allocation2 + $0x290] sm:$0xff]
    %v1180 = vld [vmem:[#allocation2 + $0x298] sm:$0xff]
    %v1181 = vld [vmem:[#allocation2 + $0x2a0] sm:$0xff]
    %v1182 = vld [vmem:[#allocation2 + $0x2a8] sm:$0xff]
    %v1183 = vld [vmem:[#allocation2 + $0x2b0] sm:$0xff]
    %v1184 = vld [vmem:[#allocation2 + $0x2b8] sm:$0xff]
    %v1185 = vld [vmem:[#allocation2 + $0x2c0] sm:$0xff]
    %v1186 = vld [vmem:[#allocation2 + $0x2c8] sm:$0xff]
    %v1187 = vld [vmem:[#allocation2 + $0x2d0] sm:$0xff]
    %v1188 = vld [vmem:[#allocation2 + $0x2d8] sm:$0xff]
    %v1189 = vld [vmem:[#allocation2 + $0x2e0] sm:$0xff]
    %v1190 = vld [vmem:[#allocation2 + $0x2e8] sm:$0xff]
    %v1191 = vld [vmem:[#allocation2 + $0x2f0] sm:$0xff]
    %v1192 = vld [vmem:[#allocation2 + $0x2f8] sm:$0xff]
    %v1193 = vld [vmem:[#allocation2 + $0x300] sm:$0xff]
    %v1194 = vld [vmem:[#allocation2 + $0x308] sm:$0xff]
    %v1195 = vld [vmem:[#allocation2 + $0x310] sm:$0xff]
    %v1196 = vld [vmem:[#allocation2 + $0x318] sm:$0xff]
    %v1197 = vld [vmem:[#allocation2 + $0x320] sm:$0xff]
    %v1198 = vld [vmem:[#allocation2 + $0x328] sm:$0xff]
    %v1199 = vld [vmem:[#allocation2 + $0x330] sm:$0xff]
    %v1200 = vld [vmem:[#allocation2 + $0x338] sm:$0xff]
    %v1201 = vld [vmem:[#allocation2 + $0x340] sm:$0xff]
    %v1202 = vld [vmem:[#allocation2 + $0x348] sm:$0xff]
    %v1203 = vld [vmem:[#allocation2 + $0x350] sm:$0xff]
    %v1204 = vld [vmem:[#allocation2 + $0x358] sm:$0xff]
    %v1205 = vld [vmem:[#allocation2 + $0x360] sm:$0xff]
    %v1206 = vld [vmem:[#allocation2 + $0x368] sm:$0xff]
    %v1207 = vld [vmem:[#allocation2 + $0x370] sm:$0xff]
    %v1208 = vld [vmem:[#allocation2 + $0x378] sm:$0xff]
    %v1209 = vld [vmem:[#allocation2 + $0x380] sm:$0xff]
    %v1210 = vld [vmem:[#allocation2 + $0x388] sm:$0xff]
    %v1211 = vld [vmem:[#allocation2 + $0x390] sm:$0xff]
    %v1212 = vld [vmem:[#allocation2 + $0x398] sm:$0xff]
    %v1213 = vld [vmem:[#allocation2 + $0x3a0] sm:$0xff]
    %v1214 = vld [vmem:[#allocation2 + $0x3a8] sm:$0xff]
    %v1215 = vld [vmem:[#allocation2 + $0x3b0] sm:$0xff]
    %v1216 = vld [vmem:[#allocation2 + $0x3b8] sm:$0xff]
    %v1217 = vld [vmem:[#allocation2 + $0x3c0] sm:$0xff]
    %v1218 = vld [vmem:[#allocation2 + $0x3c8] sm:$0xff]
    %v1219 = vld [vmem:[#allocation2 + $0x3d0] sm:$0xff]
    %v1220 = vld [vmem:[#allocation2 + $0x3d8] sm:$0xff]
    %v1221 = vld [vmem:[#allocation2 + $0x3e0] sm:$0xff]
    %v1222 = vld [vmem:[#allocation2 + $0x3e8] sm:$0xff]
    %v1223 = vld [vmem:[#allocation2 + $0x3f0] sm:$0xff]
    %v1224 = vld [vmem:[#allocation2 + $0x3f8] sm:$0xff]
    %v1225 = vld [vmem:[%s6] sm:$0xf]
    %v1227 = vlaneseq
    %v1228 = vshrl.u32 %v1227, 7
    %v1229 = vsub.s32 0, %v1228
    %v1230 = vrot.slane %v1225, %v1229
    %v1231 = vlaneseq
    %v1232 = vshrl.u32 %v1231, 7
    %v1233 = vsub.s32 1, %v1232
    %v1234 = vrot.slane %v1225, %v1233
    %v1235 = vlaneseq
    %v1236 = vshrl.u32 %v1235, 7
    %v1237 = vsub.s32 2, %v1236
    %v1238 = vrot.slane %v1225, %v1237
    %v1239 = vlaneseq
    %v1240 = vshrl.u32 %v1239, 7
    %v1241 = vsub.s32 3, %v1240
    %v1242 = vrot.slane %v1225, %v1241
    %v1375 = vunpack.c.l.b16 %v1097
    %v1376 = vunpack.c.h.b16 %v1097
    %v1377 = vunpack.c.l.b16 %v1098
    %v1378 = vunpack.c.h.b16 %v1098
    %v1379 = vunpack.c.l.b16 %v1099
    %v1380 = vunpack.c.h.b16 %v1099
    %v1381 = vunpack.c.l.b16 %v1100
    %v1382 = vunpack.c.h.b16 %v1100
    %v1383 = vunpack.c.l.b16 %v1101
    %v1384 = vunpack.c.h.b16 %v1101
    %v1385 = vunpack.c.l.b16 %v1102
    %v1386 = vunpack.c.h.b16 %v1102
    %v1387 = vunpack.c.l.b16 %v1103
    %v1388 = vunpack.c.h.b16 %v1103
    %v1389 = vunpack.c.l.b16 %v1104
    %v1390 = vunpack.c.h.b16 %v1104
    %v1391 = vunpack.c.l.b16 %v1105
    %v1392 = vunpack.c.h.b16 %v1105
    %v1393 = vunpack.c.l.b16 %v1106
    %v1394 = vunpack.c.h.b16 %v1106
    %v1395 = vunpack.c.l.b16 %v1107
    %v1396 = vunpack.c.h.b16 %v1107
    %v1397 = vunpack.c.l.b16 %v1108
    %v1398 = vunpack.c.h.b16 %v1108
    %v1399 = vunpack.c.l.b16 %v1109
    %v1400 = vunpack.c.h.b16 %v1109
    %v1401 = vunpack.c.l.b16 %v1110
    %v1402 = vunpack.c.h.b16 %v1110
    %v1403 = vunpack.c.l.b16 %v1111
    %v1404 = vunpack.c.h.b16 %v1111
    %v1405 = vunpack.c.l.b16 %v1112
    %v1406 = vunpack.c.h.b16 %v1112
    %v1407 = vunpack.c.l.b16 %v1113
    %v1408 = vunpack.c.h.b16 %v1113
    %v1409 = vunpack.c.l.b16 %v1114
    %v1410 = vunpack.c.h.b16 %v1114
    %v1411 = vunpack.c.l.b16 %v1115
    %v1412 = vunpack.c.h.b16 %v1115
    %v1413 = vunpack.c.l.b16 %v1116
    %v1414 = vunpack.c.h.b16 %v1116
    %v1415 = vunpack.c.l.b16 %v1117
    %v1416 = vunpack.c.h.b16 %v1117
    %v1417 = vunpack.c.l.b16 %v1118
    %v1418 = vunpack.c.h.b16 %v1118
    %v1419 = vunpack.c.l.b16 %v1119
    %v1420 = vunpack.c.h.b16 %v1119
    %v1421 = vunpack.c.l.b16 %v1120
    %v1422 = vunpack.c.h.b16 %v1120
    %v1423 = vunpack.c.l.b16 %v1121
    %v1424 = vunpack.c.h.b16 %v1121
    %v1425 = vunpack.c.l.b16 %v1122
    %v1426 = vunpack.c.h.b16 %v1122
    %v1427 = vunpack.c.l.b16 %v1123
    %v1428 = vunpack.c.h.b16 %v1123
    %v1429 = vunpack.c.l.b16 %v1124
    %v1430 = vunpack.c.h.b16 %v1124
    %v1431 = vunpack.c.l.b16 %v1125
    %v1432 = vunpack.c.h.b16 %v1125
    %v1433 = vunpack.c.l.b16 %v1126
    %v1434 = vunpack.c.h.b16 %v1126
    %v1435 = vunpack.c.l.b16 %v1127
    %v1436 = vunpack.c.h.b16 %v1127
    %v1437 = vunpack.c.l.b16 %v1128
    %v1438 = vunpack.c.h.b16 %v1128
    %v1439 = vunpack.c.l.b16 %v1129
    %v1440 = vunpack.c.h.b16 %v1129
    %v1441 = vunpack.c.l.b16 %v1130
    %v1442 = vunpack.c.h.b16 %v1130
    %v1443 = vunpack.c.l.b16 %v1131
    %v1444 = vunpack.c.h.b16 %v1131
    %v1445 = vunpack.c.l.b16 %v1132
    %v1446 = vunpack.c.h.b16 %v1132
    %v1447 = vunpack.c.l.b16 %v1133
    %v1448 = vunpack.c.h.b16 %v1133
    %v1449 = vunpack.c.l.b16 %v1134
    %v1450 = vunpack.c.h.b16 %v1134
    %v1451 = vunpack.c.l.b16 %v1135
    %v1452 = vunpack.c.h.b16 %v1135
    %v1453 = vunpack.c.l.b16 %v1136
    %v1454 = vunpack.c.h.b16 %v1136
    %v1455 = vunpack.c.l.b16 %v1137
    %v1456 = vunpack.c.h.b16 %v1137
    %v1457 = vunpack.c.l.b16 %v1138
    %v1458 = vunpack.c.h.b16 %v1138
    %v1459 = vunpack.c.l.b16 %v1139
    %v1460 = vunpack.c.h.b16 %v1139
    %v1461 = vunpack.c.l.b16 %v1140
    %v1462 = vunpack.c.h.b16 %v1140
    %v1463 = vunpack.c.l.b16 %v1141
    %v1464 = vunpack.c.h.b16 %v1141
    %v1465 = vunpack.c.l.b16 %v1142
    %v1466 = vunpack.c.h.b16 %v1142
    %v1467 = vunpack.c.l.b16 %v1143
    %v1468 = vunpack.c.h.b16 %v1143
    %v1469 = vunpack.c.l.b16 %v1144
    %v1470 = vunpack.c.h.b16 %v1144
    %v1471 = vunpack.c.l.b16 %v1145
    %v1472 = vunpack.c.h.b16 %v1145
    %v1473 = vunpack.c.l.b16 %v1146
    %v1474 = vunpack.c.h.b16 %v1146
    %v1475 = vunpack.c.l.b16 %v1147
    %v1476 = vunpack.c.h.b16 %v1147
    %v1477 = vunpack.c.l.b16 %v1148
    %v1478 = vunpack.c.h.b16 %v1148
    %v1479 = vunpack.c.l.b16 %v1149
    %v1480 = vunpack.c.h.b16 %v1149
    %v1481 = vunpack.c.l.b16 %v1150
    %v1482 = vunpack.c.h.b16 %v1150
    %v1483 = vunpack.c.l.b16 %v1151
    %v1484 = vunpack.c.h.b16 %v1151
    %v1485 = vunpack.c.l.b16 %v1152
    %v1486 = vunpack.c.h.b16 %v1152
    %v1487 = vunpack.c.l.b16 %v1153
    %v1488 = vunpack.c.h.b16 %v1153
    %v1489 = vunpack.c.l.b16 %v1154
    %v1490 = vunpack.c.h.b16 %v1154
    %v1491 = vunpack.c.l.b16 %v1155
    %v1492 = vunpack.c.h.b16 %v1155
    %v1493 = vunpack.c.l.b16 %v1156
    %v1494 = vunpack.c.h.b16 %v1156
    %v1495 = vunpack.c.l.b16 %v1157
    %v1496 = vunpack.c.h.b16 %v1157
    %v1497 = vunpack.c.l.b16 %v1158
    %v1498 = vunpack.c.h.b16 %v1158
    %v1499 = vunpack.c.l.b16 %v1159
    %v1500 = vunpack.c.h.b16 %v1159
    %v1501 = vunpack.c.l.b16 %v1160
    %v1502 = vunpack.c.h.b16 %v1160
    %v1503 = vunpack.c.l.b16 %v1161
    %v1504 = vunpack.c.h.b16 %v1161
    %v1505 = vunpack.c.l.b16 %v1162
    %v1506 = vunpack.c.h.b16 %v1162
    %v1507 = vunpack.c.l.b16 %v1163
    %v1508 = vunpack.c.h.b16 %v1163
    %v1509 = vunpack.c.l.b16 %v1164
    %v1510 = vunpack.c.h.b16 %v1164
    %v1511 = vunpack.c.l.b16 %v1165
    %v1512 = vunpack.c.h.b16 %v1165
    %v1513 = vunpack.c.l.b16 %v1166
    %v1514 = vunpack.c.h.b16 %v1166
    %v1515 = vunpack.c.l.b16 %v1167
    %v1516 = vunpack.c.h.b16 %v1167
    %v1517 = vunpack.c.l.b16 %v1168
    %v1518 = vunpack.c.h.b16 %v1168
    %v1519 = vunpack.c.l.b16 %v1169
    %v1520 = vunpack.c.h.b16 %v1169
    %v1521 = vunpack.c.l.b16 %v1170
    %v1522 = vunpack.c.h.b16 %v1170
    %v1523 = vunpack.c.l.b16 %v1171
    %v1524 = vunpack.c.h.b16 %v1171
    %v1525 = vunpack.c.l.b16 %v1172
    %v1526 = vunpack.c.h.b16 %v1172
    %v1527 = vunpack.c.l.b16 %v1173
    %v1528 = vunpack.c.h.b16 %v1173
    %v1529 = vunpack.c.l.b16 %v1174
    %v1530 = vunpack.c.h.b16 %v1174
    %v1531 = vunpack.c.l.b16 %v1175
    %v1532 = vunpack.c.h.b16 %v1175
    %v1533 = vunpack.c.l.b16 %v1176
    %v1534 = vunpack.c.h.b16 %v1176
    %v1535 = vunpack.c.l.b16 %v1177
    %v1536 = vunpack.c.h.b16 %v1177
    %v1537 = vunpack.c.l.b16 %v1178
    %v1538 = vunpack.c.h.b16 %v1178
    %v1539 = vunpack.c.l.b16 %v1179
    %v1540 = vunpack.c.h.b16 %v1179
    %v1541 = vunpack.c.l.b16 %v1180
    %v1542 = vunpack.c.h.b16 %v1180
    %v1543 = vunpack.c.l.b16 %v1181
    %v1544 = vunpack.c.h.b16 %v1181
    %v1545 = vunpack.c.l.b16 %v1182
    %v1546 = vunpack.c.h.b16 %v1182
    %v1547 = vunpack.c.l.b16 %v1183
    %v1548 = vunpack.c.h.b16 %v1183
    %v1549 = vunpack.c.l.b16 %v1184
    %v1550 = vunpack.c.h.b16 %v1184
    %v1551 = vunpack.c.l.b16 %v1185
    %v1552 = vunpack.c.h.b16 %v1185
    %v1553 = vunpack.c.l.b16 %v1186
    %v1554 = vunpack.c.h.b16 %v1186
    %v1555 = vunpack.c.l.b16 %v1187
    %v1556 = vunpack.c.h.b16 %v1187
    %v1557 = vunpack.c.l.b16 %v1188
    %v1558 = vunpack.c.h.b16 %v1188
    %v1559 = vunpack.c.l.b16 %v1189
    %v1560 = vunpack.c.h.b16 %v1189
    %v1561 = vunpack.c.l.b16 %v1190
    %v1562 = vunpack.c.h.b16 %v1190
    %v1563 = vunpack.c.l.b16 %v1191
    %v1564 = vunpack.c.h.b16 %v1191
    %v1565 = vunpack.c.l.b16 %v1192
    %v1566 = vunpack.c.h.b16 %v1192
    %v1567 = vunpack.c.l.b16 %v1193
    %v1568 = vunpack.c.h.b16 %v1193
    %v1569 = vunpack.c.l.b16 %v1194
    %v1570 = vunpack.c.h.b16 %v1194
    %v1571 = vunpack.c.l.b16 %v1195
    %v1572 = vunpack.c.h.b16 %v1195
    %v1573 = vunpack.c.l.b16 %v1196
    %v1574 = vunpack.c.h.b16 %v1196
    %v1575 = vunpack.c.l.b16 %v1197
    %v1576 = vunpack.c.h.b16 %v1197
    %v1577 = vunpack.c.l.b16 %v1198
    %v1578 = vunpack.c.h.b16 %v1198
    %v1579 = vunpack.c.l.b16 %v1199
    %v1580 = vunpack.c.h.b16 %v1199
    %v1581 = vunpack.c.l.b16 %v1200
    %v1582 = vunpack.c.h.b16 %v1200
    %v1583 = vunpack.c.l.b16 %v1201
    %v1584 = vunpack.c.h.b16 %v1201
    %v1585 = vunpack.c.l.b16 %v1202
    %v1586 = vunpack.c.h.b16 %v1202
    %v1587 = vunpack.c.l.b16 %v1203
    %v1588 = vunpack.c.h.b16 %v1203
    %v1589 = vunpack.c.l.b16 %v1204
    %v1590 = vunpack.c.h.b16 %v1204
    %v1591 = vunpack.c.l.b16 %v1205
    %v1592 = vunpack.c.h.b16 %v1205
    %v1593 = vunpack.c.l.b16 %v1206
    %v1594 = vunpack.c.h.b16 %v1206
    %v1595 = vunpack.c.l.b16 %v1207
    %v1596 = vunpack.c.h.b16 %v1207
    %v1597 = vunpack.c.l.b16 %v1208
    %v1598 = vunpack.c.h.b16 %v1208
    %v1599 = vunpack.c.l.b16 %v1209
    %v1600 = vunpack.c.h.b16 %v1209
    %v1601 = vunpack.c.l.b16 %v1210
    %v1602 = vunpack.c.h.b16 %v1210
    %v1603 = vunpack.c.l.b16 %v1211
    %v1604 = vunpack.c.h.b16 %v1211
    %v1605 = vunpack.c.l.b16 %v1212
    %v1606 = vunpack.c.h.b16 %v1212
    %v1607 = vunpack.c.l.b16 %v1213
    %v1608 = vunpack.c.h.b16 %v1213
    %v1609 = vunpack.c.l.b16 %v1214
    %v1610 = vunpack.c.h.b16 %v1214
    %v1611 = vunpack.c.l.b16 %v1215
    %v1612 = vunpack.c.h.b16 %v1215
    %v1613 = vunpack.c.l.b16 %v1216
    %v1614 = vunpack.c.h.b16 %v1216
    %v1615 = vunpack.c.l.b16 %v1217
    %v1616 = vunpack.c.h.b16 %v1217
    %v1617 = vunpack.c.l.b16 %v1218
    %v1618 = vunpack.c.h.b16 %v1218
    %v1619 = vunpack.c.l.b16 %v1219
    %v1620 = vunpack.c.h.b16 %v1219
    %v1621 = vunpack.c.l.b16 %v1220
    %v1622 = vunpack.c.h.b16 %v1220
    %v1623 = vunpack.c.l.b16 %v1221
    %v1624 = vunpack.c.h.b16 %v1221
    %v1625 = vunpack.c.l.b16 %v1222
    %v1626 = vunpack.c.h.b16 %v1222
    %v1627 = vunpack.c.l.b16 %v1223
    %v1628 = vunpack.c.h.b16 %v1223
    %v1629 = vunpack.c.l.b16 %v1224
    %v1630 = vunpack.c.h.b16 %v1224
    %v1631 = vpack.c.b16 %v1379, %v1375
    %v1632 = vpack.c.b16 %v1380, %v1376
    %v1633 = vpack.c.b16 %v1381, %v1377
    %v1634 = vpack.c.b16 %v1382, %v1378
    %v1635 = vpack.c.b16 %v1387, %v1383
    %v1636 = vpack.c.b16 %v1388, %v1384
    %v1637 = vpack.c.b16 %v1389, %v1385
    %v1638 = vpack.c.b16 %v1390, %v1386
    %v1639 = vpack.c.b16 %v1395, %v1391
    %v1640 = vpack.c.b16 %v1396, %v1392
    %v1641 = vpack.c.b16 %v1397, %v1393
    %v1642 = vpack.c.b16 %v1398, %v1394
    %v1643 = vpack.c.b16 %v1403, %v1399
    %v1644 = vpack.c.b16 %v1404, %v1400
    %v1645 = vpack.c.b16 %v1405, %v1401
    %v1646 = vpack.c.b16 %v1406, %v1402
    %v1647 = vpack.c.b16 %v1411, %v1407
    %v1648 = vpack.c.b16 %v1412, %v1408
    %v1649 = vpack.c.b16 %v1413, %v1409
    %v1650 = vpack.c.b16 %v1414, %v1410
    %v1651 = vpack.c.b16 %v1419, %v1415
    %v1652 = vpack.c.b16 %v1420, %v1416
    %v1653 = vpack.c.b16 %v1421, %v1417
    %v1654 = vpack.c.b16 %v1422, %v1418
    %v1655 = vpack.c.b16 %v1427, %v1423
    %v1656 = vpack.c.b16 %v1428, %v1424
    %v1657 = vpack.c.b16 %v1429, %v1425
    %v1658 = vpack.c.b16 %v1430, %v1426
    %v1659 = vpack.c.b16 %v1435, %v1431
    %v1660 = vpack.c.b16 %v1436, %v1432
    %v1661 = vpack.c.b16 %v1437, %v1433
    %v1662 = vpack.c.b16 %v1438, %v1434
    %v1663 = vpack.c.b16 %v1443, %v1439
    %v1664 = vpack.c.b16 %v1444, %v1440
    %v1665 = vpack.c.b16 %v1445, %v1441
    %v1666 = vpack.c.b16 %v1446, %v1442
    %v1667 = vpack.c.b16 %v1451, %v1447
    %v1668 = vpack.c.b16 %v1452, %v1448
    %v1669 = vpack.c.b16 %v1453, %v1449
    %v1670 = vpack.c.b16 %v1454, %v1450
    %v1671 = vpack.c.b16 %v1459, %v1455
    %v1672 = vpack.c.b16 %v1460, %v1456
    %v1673 = vpack.c.b16 %v1461, %v1457
    %v1674 = vpack.c.b16 %v1462, %v1458
    %v1675 = vpack.c.b16 %v1467, %v1463
    %v1676 = vpack.c.b16 %v1468, %v1464
    %v1677 = vpack.c.b16 %v1469, %v1465
    %v1678 = vpack.c.b16 %v1470, %v1466
    %v1679 = vpack.c.b16 %v1475, %v1471
    %v1680 = vpack.c.b16 %v1476, %v1472
    %v1681 = vpack.c.b16 %v1477, %v1473
    %v1682 = vpack.c.b16 %v1478, %v1474
    %v1683 = vpack.c.b16 %v1483, %v1479
    %v1684 = vpack.c.b16 %v1484, %v1480
    %v1685 = vpack.c.b16 %v1485, %v1481
    %v1686 = vpack.c.b16 %v1486, %v1482
    %v1687 = vpack.c.b16 %v1491, %v1487
    %v1688 = vpack.c.b16 %v1492, %v1488
    %v1689 = vpack.c.b16 %v1493, %v1489
    %v1690 = vpack.c.b16 %v1494, %v1490
    %v1691 = vpack.c.b16 %v1499, %v1495
    %v1692 = vpack.c.b16 %v1500, %v1496
    %v1693 = vpack.c.b16 %v1501, %v1497
    %v1694 = vpack.c.b16 %v1502, %v1498
    %v1695 = vpack.c.b16 %v1507, %v1503
    %v1696 = vpack.c.b16 %v1508, %v1504
    %v1697 = vpack.c.b16 %v1509, %v1505
    %v1698 = vpack.c.b16 %v1510, %v1506
    %v1699 = vpack.c.b16 %v1515, %v1511
    %v1700 = vpack.c.b16 %v1516, %v1512
    %v1701 = vpack.c.b16 %v1517, %v1513
    %v1702 = vpack.c.b16 %v1518, %v1514
    %v1703 = vpack.c.b16 %v1523, %v1519
    %v1704 = vpack.c.b16 %v1524, %v1520
    %v1705 = vpack.c.b16 %v1525, %v1521
    %v1706 = vpack.c.b16 %v1526, %v1522
    %v1707 = vpack.c.b16 %v1531, %v1527
    %v1708 = vpack.c.b16 %v1532, %v1528
    %v1709 = vpack.c.b16 %v1533, %v1529
    %v1710 = vpack.c.b16 %v1534, %v1530
    %v1711 = vpack.c.b16 %v1539, %v1535
    %v1712 = vpack.c.b16 %v1540, %v1536
    %v1713 = vpack.c.b16 %v1541, %v1537
    %v1714 = vpack.c.b16 %v1542, %v1538
    %v1715 = vpack.c.b16 %v1547, %v1543
    %v1716 = vpack.c.b16 %v1548, %v1544
    %v1717 = vpack.c.b16 %v1549, %v1545
    %v1718 = vpack.c.b16 %v1550, %v1546
    %v1719 = vpack.c.b16 %v1555, %v1551
    %v1720 = vpack.c.b16 %v1556, %v1552
    %v1721 = vpack.c.b16 %v1557, %v1553
    %v1722 = vpack.c.b16 %v1558, %v1554
    %v1723 = vpack.c.b16 %v1563, %v1559
    %v1724 = vpack.c.b16 %v1564, %v1560
    %v1725 = vpack.c.b16 %v1565, %v1561
    %v1726 = vpack.c.b16 %v1566, %v1562
    %v1727 = vpack.c.b16 %v1571, %v1567
    %v1728 = vpack.c.b16 %v1572, %v1568
    %v1729 = vpack.c.b16 %v1573, %v1569
    %v1730 = vpack.c.b16 %v1574, %v1570
    %v1731 = vpack.c.b16 %v1579, %v1575
    %v1732 = vpack.c.b16 %v1580, %v1576
    %v1733 = vpack.c.b16 %v1581, %v1577
    %v1734 = vpack.c.b16 %v1582, %v1578
    %v1735 = vpack.c.b16 %v1587, %v1583
    %v1736 = vpack.c.b16 %v1588, %v1584
    %v1737 = vpack.c.b16 %v1589, %v1585
    %v1738 = vpack.c.b16 %v1590, %v1586
    %v1739 = vpack.c.b16 %v1595, %v1591
    %v1740 = vpack.c.b16 %v1596, %v1592
    %v1741 = vpack.c.b16 %v1597, %v1593
    %v1742 = vpack.c.b16 %v1598, %v1594
    %v1743 = vpack.c.b16 %v1603, %v1599
    %v1744 = vpack.c.b16 %v1604, %v1600
    %v1745 = vpack.c.b16 %v1605, %v1601
    %v1746 = vpack.c.b16 %v1606, %v1602
    %v1747 = vpack.c.b16 %v1611, %v1607
    %v1748 = vpack.c.b16 %v1612, %v1608
    %v1749 = vpack.c.b16 %v1613, %v1609
    %v1750 = vpack.c.b16 %v1614, %v1610
    %v1751 = vpack.c.b16 %v1619, %v1615
    %v1752 = vpack.c.b16 %v1620, %v1616
    %v1753 = vpack.c.b16 %v1621, %v1617
    %v1754 = vpack.c.b16 %v1622, %v1618
    %v1755 = vpack.c.b16 %v1627, %v1623
    %v1756 = vpack.c.b16 %v1628, %v1624
    %v1757 = vpack.c.b16 %v1629, %v1625
    %v1758 = vpack.c.b16 %v1630, %v1626
    %1887 = vmatprep.subr.bf16.mxu0 %v1632
    %1888 = vmatpush1.bf16.msra.mxu0 %v1631
    %1889 = vmatprep.subr.bf16.mxu0 %v1636
    %1890 = vmatpush1.bf16.msra.mxu0 %v1635
    %1891 = vmatprep.subr.bf16.mxu0 %v1640
    %1892 = vmatpush1.bf16.msra.mxu0 %v1639
    %1893 = vmatprep.subr.bf16.mxu0 %v1644
    %1894 = vmatpush1.bf16.msra.mxu0 %v1643
    %1895 = vmatprep.subr.bf16.mxu0 %v1648
    %1896 = vmatpush1.bf16.msra.mxu0 %v1647
    %1897 = vmatprep.subr.bf16.mxu0 %v1652
    %1898 = vmatpush1.bf16.msra.mxu0 %v1651
    %1899 = vmatprep.subr.bf16.mxu0 %v1656
    %1900 = vmatpush1.bf16.msra.mxu0 %v1655
    %1901 = vmatprep.subr.bf16.mxu0 %v1660
    %1902 = vmatpush1.bf16.msra.mxu0 %v1659
    %1903 = vmatprep.subr.bf16.mxu0 %v1664
    %1904 = vmatpush1.bf16.msra.mxu0 %v1663
    %1905 = vmatprep.subr.bf16.mxu0 %v1668
    %1906 = vmatpush1.bf16.msra.mxu0 %v1667
    %1907 = vmatprep.subr.bf16.mxu0 %v1672
    %1908 = vmatpush1.bf16.msra.mxu0 %v1671
    %1909 = vmatprep.subr.bf16.mxu0 %v1676
    %1910 = vmatpush1.bf16.msra.mxu0 %v1675
    %1911 = vmatprep.subr.bf16.mxu0 %v1680
    %1912 = vmatpush1.bf16.msra.mxu0 %v1679
    %1913 = vmatprep.subr.bf16.mxu0 %v1684
    %1914 = vmatpush1.bf16.msra.mxu0 %v1683
    %1915 = vmatprep.subr.bf16.mxu0 %v1688
    %1916 = vmatpush1.bf16.msra.mxu0 %v1687
    %1917 = vmatprep.subr.bf16.mxu0 %v1692
    %1918 = vmatpush1.bf16.msra.mxu0 %v1691
    %1919 = vmatprep.mubr.bf16.mxu0 %v1066
    %1920 = vmatmul.mubr.bf16.gmra.mrb[0].mxu0 %v1065
    %v1921 = vpop.f32.mrb[0].mxu0
    %v1922 = vadd.f32 %v1230, %v1921
    %v1923 = vpop.f32.mrb[0].mxu0
    %v1924 = vadd.f32 %v1234, %v1923
    %v1925 = vpop.f32.mrb[0].mxu0
    %v1926 = vadd.f32 %v1230, %v1925
    %v1927 = vpop.f32.mrb[0].mxu0
    %v1928 = vadd.f32 %v1234, %v1927
    %1929 = vmatprep.mubr.bf16.mxu0 %v1070
    %1930 = vmatmul.mubr.bf16.gmra.mrb[0].mxu0 %v1069
    %v1931 = vpop.f32.mrb[0].mxu0
    %v1932 = vadd.f32 %v1230, %v1931
    %v1933 = vpop.f32.mrb[0].mxu0
    %v1934 = vadd.f32 %v1234, %v1933
    %v1935 = vpop.f32.mrb[0].mxu0
    %v1936 = vadd.f32 %v1230, %v1935
    %v1937 = vpop.f32.mrb[0].mxu0
    %v1938 = vadd.f32 %v1234, %v1937
    %1939 = vmatprep.mubr.bf16.mxu0 %v1074
    %1940 = vmatmul.mubr.bf16.gmra.mrb[0].mxu0 %v1073
    %v1941 = vpop.f32.mrb[0].mxu0
    %v1942 = vadd.f32 %v1230, %v1941
    %v1943 = vpop.f32.mrb[0].mxu0
    %v1944 = vadd.f32 %v1234, %v1943
    %v1945 = vpop.f32.mrb[0].mxu0
    %v1946 = vadd.f32 %v1230, %v1945
    %v1947 = vpop.f32.mrb[0].mxu0
    %v1948 = vadd.f32 %v1234, %v1947
    %1949 = vmatprep.mubr.bf16.mxu0 %v1078
    %1950 = vmatmul.mubr.bf16.gmra.mrb[0].mxu0 %v1077
    %v1951 = vpop.f32.mrb[0].mxu0
    %v1952 = vadd.f32 %v1230, %v1951
    %v1953 = vpop.f32.mrb[0].mxu0
    %v1954 = vadd.f32 %v1234, %v1953
    %v1955 = vpop.f32.mrb[0].mxu0
    %v1956 = vadd.f32 %v1230, %v1955
    %v1957 = vpop.f32.mrb[0].mxu0
    %v1958 = vadd.f32 %v1234, %v1957
    %1959 = vmatprep.mubr.bf16.mxu0 %v1082
    %1960 = vmatmul.mubr.bf16.gmra.mrb[0].mxu0 %v1081
    %v1961 = vpop.f32.mrb[0].mxu0
    %v1962 = vadd.f32 %v1230, %v1961
    %v1963 = vpop.f32.mrb[0].mxu0
    %v1964 = vadd.f32 %v1234, %v1963
    %v1965 = vpop.f32.mrb[0].mxu0
    %v1966 = vadd.f32 %v1230, %v1965
    %v1967 = vpop.f32.mrb[0].mxu0
    %v1968 = vadd.f32 %v1234, %v1967
    %1969 = vmatprep.mubr.bf16.mxu0 %v1086
    %1970 = vmatmul.mubr.bf16.gmra.mrb[0].mxu0 %v1085
    %v1971 = vpop.f32.mrb[0].mxu0
    %v1972 = vadd.f32 %v1230, %v1971
    %v1973 = vpop.f32.mrb[0].mxu0
    %v1974 = vadd.f32 %v1234, %v1973
    %v1975 = vpop.f32.mrb[0].mxu0
    %v1976 = vadd.f32 %v1230, %v1975
    %v1977 = vpop.f32.mrb[0].mxu0
    %v1978 = vadd.f32 %v1234, %v1977
    %1979 = vmatprep.mubr.bf16.mxu0 %v1090
    %1980 = vmatmul.mubr.bf16.gmra.mrb[0].mxu0 %v1089
    %v1981 = vpop.f32.mrb[0].mxu0
    %v1982 = vadd.f32 %v1230, %v1981
    %v1983 = vpop.f32.mrb[0].mxu0
    %v1984 = vadd.f32 %v1234, %v1983
    %v1985 = vpop.f32.mrb[0].mxu0
    %v1986 = vadd.f32 %v1230, %v1985
    %v1987 = vpop.f32.mrb[0].mxu0
    %v1988 = vadd.f32 %v1234, %v1987
    %1989 = vmatprep.mubr.bf16.mxu0 %v1094
    %1990 = vmatmul.mubr.bf16.gmra.mrb[0].mxu0 %v1093
    %v1991 = vpop.f32.mrb[0].mxu0
    %v1992 = vadd.f32 %v1230, %v1991
    %v1993 = vpop.f32.mrb[0].mxu0
    %v1994 = vadd.f32 %v1234, %v1993
    %v1995 = vpop.f32.mrb[0].mxu0
    %v1996 = vadd.f32 %v1230, %v1995
    %v1997 = vpop.f32.mrb[0].mxu0
    %v1998 = vadd.f32 %v1234, %v1997
    %1999 = vdwg.mxu0
    %2000 = vmatprep.subr.bf16.mxu0 %v1696
    %2001 = vmatpush1.bf16.msra.mxu0 %v1695
    %2002 = vmatprep.subr.bf16.mxu0 %v1700
    %2003 = vmatpush1.bf16.msra.mxu0 %v1699
    %2004 = vmatprep.subr.bf16.mxu0 %v1704
    %2005 = vmatpush1.bf16.msra.mxu0 %v1703
    %2006 = vmatprep.subr.bf16.mxu0 %v1708
    %2007 = vmatpush1.bf16.msra.mxu0 %v1707
    %2008 = vmatprep.subr.bf16.mxu0 %v1712
    %2009 = vmatpush1.bf16.msra.mxu0 %v1711
    %2010 = vmatprep.subr.bf16.mxu0 %v1716
    %2011 = vmatpush1.bf16.msra.mxu0 %v1715
    %2012 = vmatprep.subr.bf16.mxu0 %v1720
    %2013 = vmatpush1.bf16.msra.mxu0 %v1719
    %2014 = vmatprep.subr.bf16.mxu0 %v1724
    %2015 = vmatpush1.bf16.msra.mxu0 %v1723
    %2016 = vmatprep.subr.bf16.mxu0 %v1728
    %2017 = vmatpush1.bf16.msra.mxu0 %v1727
    %2018 = vmatprep.subr.bf16.mxu0 %v1732
    %2019 = vmatpush1.bf16.msra.mxu0 %v1731
    %2020 = vmatprep.subr.bf16.mxu0 %v1736
    %2021 = vmatpush1.bf16.msra.mxu0 %v1735
    %2022 = vmatprep.subr.bf16.mxu0 %v1740
    %2023 = vmatpush1.bf16.msra.mxu0 %v1739
    %2024 = vmatprep.subr.bf16.mxu0 %v1744
    %2025 = vmatpush1.bf16.msra.mxu0 %v1743
    %2026 = vmatprep.subr.bf16.mxu0 %v1748
    %2027 = vmatpush1.bf16.msra.mxu0 %v1747
    %2028 = vmatprep.subr.bf16.mxu0 %v1752
    %2029 = vmatpush1.bf16.msra.mxu0 %v1751
    %2030 = vmatprep.subr.bf16.mxu0 %v1756
    %2031 = vmatpush1.bf16.msra.mxu0 %v1755
    %2032 = vmatprep.mubr.bf16.mxu0 %v1068
    %2033 = vmatmul.mubr.bf16.gmra.mrb[0].mxu0 %v1067
    %v2034 = vpop.f32.mrb[0].mxu0
    %v2035 = vadd.f32 %v1922, %v2034
    %v2036 = vpop.f32.mrb[0].mxu0
    %v2037 = vadd.f32 %v1924, %v2036
    %v2038 = vpop.f32.mrb[0].mxu0
    %v2039 = vadd.f32 %v1926, %v2038
    %v2040 = vpop.f32.mrb[0].mxu0
    %v2041 = vadd.f32 %v1928, %v2040
    %2042 = vmatprep.mubr.bf16.mxu0 %v1072
    %2043 = vmatmul.mubr.bf16.gmra.mrb[0].mxu0 %v1071
    %v2044 = vpop.f32.mrb[0].mxu0
    %v2045 = vadd.f32 %v1932, %v2044
    %v2046 = vpop.f32.mrb[0].mxu0
    %v2047 = vadd.f32 %v1934, %v2046
    %v2048 = vpop.f32.mrb[0].mxu0
    %v2049 = vadd.f32 %v1936, %v2048
    %v2050 = vpop.f32.mrb[0].mxu0
    %v2051 = vadd.f32 %v1938, %v2050
    %2052 = vmatprep.mubr.bf16.mxu0 %v1076
    %2053 = vmatmul.mubr.bf16.gmra.mrb[0].mxu0 %v1075
    %v2054 = vpop.f32.mrb[0].mxu0
    %v2055 = vadd.f32 %v1942, %v2054
    %v2056 = vpop.f32.mrb[0].mxu0
    %v2057 = vadd.f32 %v1944, %v2056
    %v2058 = vpop.f32.mrb[0].mxu0
    %v2059 = vadd.f32 %v1946, %v2058
    %v2060 = vpop.f32.mrb[0].mxu0
    %v2061 = vadd.f32 %v1948, %v2060
    %2062 = vmatprep.mubr.bf16.mxu0 %v1080
    %2063 = vmatmul.mubr.bf16.gmra.mrb[0].mxu0 %v1079
    %v2064 = vpop.f32.mrb[0].mxu0
    %v2065 = vadd.f32 %v1952, %v2064
    %v2066 = vpop.f32.mrb[0].mxu0
    %v2067 = vadd.f32 %v1954, %v2066
    %v2068 = vpop.f32.mrb[0].mxu0
    %v2069 = vadd.f32 %v1956, %v2068
    %v2070 = vpop.f32.mrb[0].mxu0
    %v2071 = vadd.f32 %v1958, %v2070
    %2072 = vmatprep.mubr.bf16.mxu0 %v1084
    %2073 = vmatmul.mubr.bf16.gmra.mrb[0].mxu0 %v1083
    %v2074 = vpop.f32.mrb[0].mxu0
    %v2075 = vadd.f32 %v1962, %v2074
    %v2076 = vpop.f32.mrb[0].mxu0
    %v2077 = vadd.f32 %v1964, %v2076
    %v2078 = vpop.f32.mrb[0].mxu0
    %v2079 = vadd.f32 %v1966, %v2078
    %v2080 = vpop.f32.mrb[0].mxu0
    %v2081 = vadd.f32 %v1968, %v2080
    %2082 = vmatprep.mubr.bf16.mxu0 %v1088
    %2083 = vmatmul.mubr.bf16.gmra.mrb[0].mxu0 %v1087
    %v2084 = vpop.f32.mrb[0].mxu0
    %v2085 = vadd.f32 %v1972, %v2084
    %v2086 = vpop.f32.mrb[0].mxu0
    %v2087 = vadd.f32 %v1974, %v2086
    %v2088 = vpop.f32.mrb[0].mxu0
    %v2089 = vadd.f32 %v1976, %v2088
    %v2090 = vpop.f32.mrb[0].mxu0
    %v2091 = vadd.f32 %v1978, %v2090
    %2092 = vmatprep.mubr.bf16.mxu0 %v1092
    %2093 = vmatmul.mubr.bf16.gmra.mrb[0].mxu0 %v1091
    %v2094 = vpop.f32.mrb[0].mxu0
    %v2095 = vadd.f32 %v1982, %v2094
    %v2096 = vpop.f32.mrb[0].mxu0
    %v2097 = vadd.f32 %v1984, %v2096
    %v2098 = vpop.f32.mrb[0].mxu0
    %v2099 = vadd.f32 %v1986, %v2098
    %v2100 = vpop.f32.mrb[0].mxu0
    %v2101 = vadd.f32 %v1988, %v2100
    %2102 = vmatprep.mubr.bf16.mxu0 %v1096
    %2103 = vmatmul.mubr.bf16.gmra.mrb[0].mxu0 %v1095
    %v2104 = vpop.f32.mrb[0].mxu0
    %v2105 = vadd.f32 %v1992, %v2104
    %v2106 = vpop.f32.mrb[0].mxu0
    %v2107 = vadd.f32 %v1994, %v2106
    %v2108 = vpop.f32.mrb[0].mxu0
    %v2109 = vadd.f32 %v1996, %v2108
    %v2110 = vpop.f32.mrb[0].mxu0
    %v2111 = vadd.f32 %v1998, %v2110
    %2112 = vdwg.mxu0
    %2113 = vmatprep.subr.bf16.mxu0 %v1634
    %2114 = vmatpush1.bf16.msra.mxu0 %v1633
    %2115 = vmatprep.subr.bf16.mxu0 %v1638
    %2116 = vmatpush1.bf16.msra.mxu0 %v1637
    %2117 = vmatprep.subr.bf16.mxu0 %v1642
    %2118 = vmatpush1.bf16.msra.mxu0 %v1641
    %2119 = vmatprep.subr.bf16.mxu0 %v1646
    %2120 = vmatpush1.bf16.msra.mxu0 %v1645
    %2121 = vmatprep.subr.bf16.mxu0 %v1650
    %2122 = vmatpush1.bf16.msra.mxu0 %v1649
    %2123 = vmatprep.subr.bf16.mxu0 %v1654
    %2124 = vmatpush1.bf16.msra.mxu0 %v1653
    %2125 = vmatprep.subr.bf16.mxu0 %v1658
    %2126 = vmatpush1.bf16.msra.mxu0 %v1657
    %2127 = vmatprep.subr.bf16.mxu0 %v1662
    %2128 = vmatpush1.bf16.msra.mxu0 %v1661
    %2129 = vmatprep.subr.bf16.mxu0 %v1666
    %2130 = vmatpush1.bf16.msra.mxu0 %v1665
    %2131 = vmatprep.subr.bf16.mxu0 %v1670
    %2132 = vmatpush1.bf16.msra.mxu0 %v1669
    %2133 = vmatprep.subr.bf16.mxu0 %v1674
    %2134 = vmatpush1.bf16.msra.mxu0 %v1673
    %2135 = vmatprep.subr.bf16.mxu0 %v1678
    %2136 = vmatpush1.bf16.msra.mxu0 %v1677
    %2137 = vmatprep.subr.bf16.mxu0 %v1682
    %2138 = vmatpush1.bf16.msra.mxu0 %v1681
    %2139 = vmatprep.subr.bf16.mxu0 %v1686
    %2140 = vmatpush1.bf16.msra.mxu0 %v1685
    %2141 = vmatprep.subr.bf16.mxu0 %v1690
    %2142 = vmatpush1.bf16.msra.mxu0 %v1689
    %2143 = vmatprep.subr.bf16.mxu0 %v1694
    %2144 = vmatpush1.bf16.msra.mxu0 %v1693
    %2145 = vmatprep.mubr.bf16.mxu0 %v1066
    %2146 = vmatmul.mubr.bf16.gmra.mrb[0].mxu0 %v1065
    %v2147 = vpop.f32.mrb[0].mxu0
    %v2148 = vadd.f32 %v1238, %v2147
    %v2149 = vpop.f32.mrb[0].mxu0
    %v2150 = vadd.f32 %v1242, %v2149
    %v2151 = vpop.f32.mrb[0].mxu0
    %v2152 = vadd.f32 %v1238, %v2151
    %v2153 = vpop.f32.mrb[0].mxu0
    %v2154 = vadd.f32 %v1242, %v2153
    %2155 = vmatprep.mubr.bf16.mxu0 %v1070
    %2156 = vmatmul.mubr.bf16.gmra.mrb[0].mxu0 %v1069
    %v2157 = vpop.f32.mrb[0].mxu0
    %v2158 = vadd.f32 %v1238, %v2157
    %v2159 = vpop.f32.mrb[0].mxu0
    %v2160 = vadd.f32 %v1242, %v2159
    %v2161 = vpop.f32.mrb[0].mxu0
    %v2162 = vadd.f32 %v1238, %v2161
    %v2163 = vpop.f32.mrb[0].mxu0
    %v2164 = vadd.f32 %v1242, %v2163
    %2165 = vmatprep.mubr.bf16.mxu0 %v1074
    %2166 = vmatmul.mubr.bf16.gmra.mrb[0].mxu0 %v1073
    %v2167 = vpop.f32.mrb[0].mxu0
    %v2168 = vadd.f32 %v1238, %v2167
    %v2169 = vpop.f32.mrb[0].mxu0
    %v2170 = vadd.f32 %v1242, %v2169
    %v2171 = vpop.f32.mrb[0].mxu0
    %v2172 = vadd.f32 %v1238, %v2171
    %v2173 = vpop.f32.mrb[0].mxu0
    %v2174 = vadd.f32 %v1242, %v2173
    %2175 = vmatprep.mubr.bf16.mxu0 %v1078
    %2176 = vmatmul.mubr.bf16.gmra.mrb[0].mxu0 %v1077
    %v2177 = vpop.f32.mrb[0].mxu0
    %v2178 = vadd.f32 %v1238, %v2177
    %v2179 = vpop.f32.mrb[0].mxu0
    %v2180 = vadd.f32 %v1242, %v2179
    %v2181 = vpop.f32.mrb[0].mxu0
    %v2182 = vadd.f32 %v1238, %v2181
    %v2183 = vpop.f32.mrb[0].mxu0
    %v2184 = vadd.f32 %v1242, %v2183
    %2185 = vmatprep.mubr.bf16.mxu0 %v1082
    %2186 = vmatmul.mubr.bf16.gmra.mrb[0].mxu0 %v1081
    %v2187 = vpop.f32.mrb[0].mxu0
    %v2188 = vadd.f32 %v1238, %v2187
    %v2189 = vpop.f32.mrb[0].mxu0
    %v2190 = vadd.f32 %v1242, %v2189
    %v2191 = vpop.f32.mrb[0].mxu0
    %v2192 = vadd.f32 %v1238, %v2191
    %v2193 = vpop.f32.mrb[0].mxu0
    %v2194 = vadd.f32 %v1242, %v2193
    %2195 = vmatprep.mubr.bf16.mxu0 %v1086
    %2196 = vmatmul.mubr.bf16.gmra.mrb[0].mxu0 %v1085
    %v2197 = vpop.f32.mrb[0].mxu0
    %v2198 = vadd.f32 %v1238, %v2197
    %v2199 = vpop.f32.mrb[0].mxu0
    %v2200 = vadd.f32 %v1242, %v2199
    %v2201 = vpop.f32.mrb[0].mxu0
    %v2202 = vadd.f32 %v1238, %v2201
    %v2203 = vpop.f32.mrb[0].mxu0
    %v2204 = vadd.f32 %v1242, %v2203
    %2205 = vmatprep.mubr.bf16.mxu0 %v1090
    %2206 = vmatmul.mubr.bf16.gmra.mrb[0].mxu0 %v1089
    %v2207 = vpop.f32.mrb[0].mxu0
    %v2208 = vadd.f32 %v1238, %v2207
    %v2209 = vpop.f32.mrb[0].mxu0
    %v2210 = vadd.f32 %v1242, %v2209
    %v2211 = vpop.f32.mrb[0].mxu0
    %v2212 = vadd.f32 %v1238, %v2211
    %v2213 = vpop.f32.mrb[0].mxu0
    %v2214 = vadd.f32 %v1242, %v2213
    %2215 = vmatprep.mubr.bf16.mxu0 %v1094
    %2216 = vmatmul.mubr.bf16.gmra.mrb[0].mxu0 %v1093
    %v2217 = vpop.f32.mrb[0].mxu0
    %v2218 = vadd.f32 %v1238, %v2217
    %v2219 = vpop.f32.mrb[0].mxu0
    %v2220 = vadd.f32 %v1242, %v2219
    %v2221 = vpop.f32.mrb[0].mxu0
    %v2222 = vadd.f32 %v1238, %v2221
    %v2223 = vpop.f32.mrb[0].mxu0
    %v2224 = vadd.f32 %v1242, %v2223
    %2225 = vdwg.mxu0
    %2226 = vmatprep.subr.bf16.mxu0 %v1698
    %2227 = vmatpush1.bf16.msra.mxu0 %v1697
    %2228 = vmatprep.subr.bf16.mxu0 %v1702
    %2229 = vmatpush1.bf16.msra.mxu0 %v1701
    %2230 = vmatprep.subr.bf16.mxu0 %v1706
    %2231 = vmatpush1.bf16.msra.mxu0 %v1705
    %2232 = vmatprep.subr.bf16.mxu0 %v1710
    %2233 = vmatpush1.bf16.msra.mxu0 %v1709
    %2234 = vmatprep.subr.bf16.mxu0 %v1714
    %2235 = vmatpush1.bf16.msra.mxu0 %v1713
    %2236 = vmatprep.subr.bf16.mxu0 %v1718
    %2237 = vmatpush1.bf16.msra.mxu0 %v1717
    %2238 = vmatprep.subr.bf16.mxu0 %v1722
    %2239 = vmatpush1.bf16.msra.mxu0 %v1721
    %2240 = vmatprep.subr.bf16.mxu0 %v1726
    %2241 = vmatpush1.bf16.msra.mxu0 %v1725
    %2242 = vmatprep.subr.bf16.mxu0 %v1730
    %2243 = vmatpush1.bf16.msra.mxu0 %v1729
    %2244 = vmatprep.subr.bf16.mxu0 %v1734
    %2245 = vmatpush1.bf16.msra.mxu0 %v1733
    %2246 = vmatprep.subr.bf16.mxu0 %v1738
    %2247 = vmatpush1.bf16.msra.mxu0 %v1737
    %2248 = vmatprep.subr.bf16.mxu0 %v1742
    %2249 = vmatpush1.bf16.msra.mxu0 %v1741
    %2250 = vmatprep.subr.bf16.mxu0 %v1746
    %2251 = vmatpush1.bf16.msra.mxu0 %v1745
    %2252 = vmatprep.subr.bf16.mxu0 %v1750
    %2253 = vmatpush1.bf16.msra.mxu0 %v1749
    %2254 = vmatprep.subr.bf16.mxu0 %v1754
    %2255 = vmatpush1.bf16.msra.mxu0 %v1753
    %2256 = vmatprep.subr.bf16.mxu0 %v1758
    %2257 = vmatpush1.bf16.msra.mxu0 %v1757
    %2258 = vmatprep.mubr.bf16.mxu0 %v1068
    %2259 = vmatmul.mubr.bf16.gmra.mrb[0].mxu0 %v1067
    %v2260 = vpop.f32.mrb[0].mxu0
    %v2261 = vadd.f32 %v2148, %v2260
    %v2262 = vpop.f32.mrb[0].mxu0
    %v2263 = vadd.f32 %v2150, %v2262
    %v2264 = vpop.f32.mrb[0].mxu0
    %v2265 = vadd.f32 %v2152, %v2264
    %v2266 = vpop.f32.mrb[0].mxu0
    %v2267 = vadd.f32 %v2154, %v2266
    %2268 = vmatprep.mubr.bf16.mxu0 %v1072
    %2269 = vmatmul.mubr.bf16.gmra.mrb[0].mxu0 %v1071
    %v2270 = vpop.f32.mrb[0].mxu0
    %v2271 = vadd.f32 %v2158, %v2270
    %v2272 = vpop.f32.mrb[0].mxu0
    %v2273 = vadd.f32 %v2160, %v2272
    %v2274 = vpop.f32.mrb[0].mxu0
    %v2275 = vadd.f32 %v2162, %v2274
    %v2276 = vpop.f32.mrb[0].mxu0
    %v2277 = vadd.f32 %v2164, %v2276
    %2278 = vmatprep.mubr.bf16.mxu0 %v1076
    %2279 = vmatmul.mubr.bf16.gmra.mrb[0].mxu0 %v1075
    %v2280 = vpop.f32.mrb[0].mxu0
    %v2281 = vadd.f32 %v2168, %v2280
    %v2282 = vpop.f32.mrb[0].mxu0
    %v2283 = vadd.f32 %v2170, %v2282
    %v2284 = vpop.f32.mrb[0].mxu0
    %v2285 = vadd.f32 %v2172, %v2284
    %v2286 = vpop.f32.mrb[0].mxu0
    %v2287 = vadd.f32 %v2174, %v2286
    %2288 = vmatprep.mubr.bf16.mxu0 %v1080
    %2289 = vmatmul.mubr.bf16.gmra.mrb[0].mxu0 %v1079
    %v2290 = vpop.f32.mrb[0].mxu0
    %v2291 = vadd.f32 %v2178, %v2290
    %v2292 = vpop.f32.mrb[0].mxu0
    %v2293 = vadd.f32 %v2180, %v2292
    %v2294 = vpop.f32.mrb[0].mxu0
    %v2295 = vadd.f32 %v2182, %v2294
    %v2296 = vpop.f32.mrb[0].mxu0
    %v2297 = vadd.f32 %v2184, %v2296
    %2298 = vmatprep.mubr.bf16.mxu0 %v1084
    %2299 = vmatmul.mubr.bf16.gmra.mrb[0].mxu0 %v1083
    %v2300 = vpop.f32.mrb[0].mxu0
    %v2301 = vadd.f32 %v2188, %v2300
    %v2302 = vpop.f32.mrb[0].mxu0
    %v2303 = vadd.f32 %v2190, %v2302
    %v2304 = vpop.f32.mrb[0].mxu0
    %v2305 = vadd.f32 %v2192, %v2304
    %v2306 = vpop.f32.mrb[0].mxu0
    %v2307 = vadd.f32 %v2194, %v2306
    %2308 = vmatprep.mubr.bf16.mxu0 %v1088
    %2309 = vmatmul.mubr.bf16.gmra.mrb[0].mxu0 %v1087
    %v2310 = vpop.f32.mrb[0].mxu0
    %v2311 = vadd.f32 %v2198, %v2310
    %v2312 = vpop.f32.mrb[0].mxu0
    %v2313 = vadd.f32 %v2200, %v2312
    %v2314 = vpop.f32.mrb[0].mxu0
    %v2315 = vadd.f32 %v2202, %v2314
    %v2316 = vpop.f32.mrb[0].mxu0
    %v2317 = vadd.f32 %v2204, %v2316
    %2318 = vmatprep.mubr.bf16.mxu0 %v1092
    %2319 = vmatmul.mubr.bf16.gmra.mrb[0].mxu0 %v1091
    %v2320 = vpop.f32.mrb[0].mxu0
    %v2321 = vadd.f32 %v2208, %v2320
    %v2322 = vpop.f32.mrb[0].mxu0
    %v2323 = vadd.f32 %v2210, %v2322
    %v2324 = vpop.f32.mrb[0].mxu0
    %v2325 = vadd.f32 %v2212, %v2324
    %v2326 = vpop.f32.mrb[0].mxu0
    %v2327 = vadd.f32 %v2214, %v2326
    %2328 = vmatprep.mubr.bf16.mxu0 %v1096
    %2329 = vmatmul.mubr.bf16.gmra.mrb[0].mxu0 %v1095
    %v2330 = vpop.f32.mrb[0].mxu0
    %v2331 = vadd.f32 %v2218, %v2330
    %v2332 = vpop.f32.mrb[0].mxu0
    %v2333 = vadd.f32 %v2220, %v2332
    %v2334 = vpop.f32.mrb[0].mxu0
    %v2335 = vadd.f32 %v2222, %v2334
    %v2336 = vpop.f32.mrb[0].mxu0
    %v2337 = vadd.f32 %v2224, %v2336
    %2338 = vdwg.mxu0
    %v2339 = vmax.f32 %v2035, 0.0
    %v2340 = vmax.f32 %v2037, 0.0
    %v2341 = vmax.f32 %v2261, 0.0
    %v2342 = vmax.f32 %v2263, 0.0
    %v2343 = vmax.f32 %v2039, 0.0
    %v2344 = vmax.f32 %v2041, 0.0
    %v2345 = vmax.f32 %v2265, 0.0
    %v2346 = vmax.f32 %v2267, 0.0
    %v2347 = vmax.f32 %v2045, 0.0
    %v2348 = vmax.f32 %v2047, 0.0
    %v2349 = vmax.f32 %v2271, 0.0
    %v2350 = vmax.f32 %v2273, 0.0
    %v2351 = vmax.f32 %v2049, 0.0
    %v2352 = vmax.f32 %v2051, 0.0
    %v2353 = vmax.f32 %v2275, 0.0
    %v2354 = vmax.f32 %v2277, 0.0
    %v2355 = vmax.f32 %v2055, 0.0
    %v2356 = vmax.f32 %v2057, 0.0
    %v2357 = vmax.f32 %v2281, 0.0
    %v2358 = vmax.f32 %v2283, 0.0
    %v2359 = vmax.f32 %v2059, 0.0
    %v2360 = vmax.f32 %v2061, 0.0
    %v2361 = vmax.f32 %v2285, 0.0
    %v2362 = vmax.f32 %v2287, 0.0
    %v2363 = vmax.f32 %v2065, 0.0
    %v2364 = vmax.f32 %v2067, 0.0
    %v2365 = vmax.f32 %v2291, 0.0
    %v2366 = vmax.f32 %v2293, 0.0
    %v2367 = vmax.f32 %v2069, 0.0
    %v2368 = vmax.f32 %v2071, 0.0
    %v2369 = vmax.f32 %v2295, 0.0
    %v2370 = vmax.f32 %v2297, 0.0
    %v2371 = vmax.f32 %v2075, 0.0
    %v2372 = vmax.f32 %v2077, 0.0
    %v2373 = vmax.f32 %v2301, 0.0
    %v2374 = vmax.f32 %v2303, 0.0
    %v2375 = vmax.f32 %v2079, 0.0
    %v2376 = vmax.f32 %v2081, 0.0
    %v2377 = vmax.f32 %v2305, 0.0
    %v2378 = vmax.f32 %v2307, 0.0
    %v2379 = vmax.f32 %v2085, 0.0
    %v2380 = vmax.f32 %v2087, 0.0
    %v2381 = vmax.f32 %v2311, 0.0
    %v2382 = vmax.f32 %v2313, 0.0
    %v2383 = vmax.f32 %v2089, 0.0
    %v2384 = vmax.f32 %v2091, 0.0
    %v2385 = vmax.f32 %v2315, 0.0
    %v2386 = vmax.f32 %v2317, 0.0
    %v2387 = vmax.f32 %v2095, 0.0
    %v2388 = vmax.f32 %v2097, 0.0
    %v2389 = vmax.f32 %v2321, 0.0
    %v2390 = vmax.f32 %v2323, 0.0
    %v2391 = vmax.f32 %v2099, 0.0
    %v2392 = vmax.f32 %v2101, 0.0
    %v2393 = vmax.f32 %v2325, 0.0
    %v2394 = vmax.f32 %v2327, 0.0
    %v2395 = vmax.f32 %v2105, 0.0
    %v2396 = vmax.f32 %v2107, 0.0
    %v2397 = vmax.f32 %v2331, 0.0
    %v2398 = vmax.f32 %v2333, 0.0
    %v2399 = vmax.f32 %v2109, 0.0
    %v2400 = vmax.f32 %v2111, 0.0
    %v2401 = vmax.f32 %v2335, 0.0
    %v2402 = vmax.f32 %v2337, 0.0
    %v2403 = vadd.f32 %v2339, %v2340
    %v2404 = vadd.f32 %v2403, %v2341
    %v2405 = vadd.f32 %v2404, %v2342
    %2406 = vadd.xlane.f32.xlu0 %v2405
    %v2407 = vpop.xlane.xlu0 %2406
    %v2408 = vadd.f32 %v2343, %v2344
    %v2409 = vadd.f32 %v2408, %v2345
    %v2410 = vadd.f32 %v2409, %v2346
    %2411 = vadd.xlane.f32.xlu0 %v2410
    %v2412 = vpop.xlane.xlu0 %2411
    %v2413 = vadd.f32 %v2347, %v2348
    %v2414 = vadd.f32 %v2413, %v2349
    %v2415 = vadd.f32 %v2414, %v2350
    %2416 = vadd.xlane.f32.xlu0 %v2415
    %v2417 = vpop.xlane.xlu0 %2416
    %v2418 = vadd.f32 %v2351, %v2352
    %v2419 = vadd.f32 %v2418, %v2353
    %v2420 = vadd.f32 %v2419, %v2354
    %2421 = vadd.xlane.f32.xlu0 %v2420
    %v2422 = vpop.xlane.xlu0 %2421
    %v2423 = vadd.f32 %v2355, %v2356
    %v2424 = vadd.f32 %v2423, %v2357
    %v2425 = vadd.f32 %v2424, %v2358
    %2426 = vadd.xlane.f32.xlu0 %v2425
    %v2427 = vpop.xlane.xlu0 %2426
    %v2428 = vadd.f32 %v2359, %v2360
    %v2429 = vadd.f32 %v2428, %v2361
    %v2430 = vadd.f32 %v2429, %v2362
    %2431 = vadd.xlane.f32.xlu0 %v2430
    %v2432 = vpop.xlane.xlu0 %2431
    %v2433 = vadd.f32 %v2363, %v2364
    %v2434 = vadd.f32 %v2433, %v2365
    %v2435 = vadd.f32 %v2434, %v2366
    %2436 = vadd.xlane.f32.xlu0 %v2435
    %v2437 = vpop.xlane.xlu0 %2436
    %v2438 = vadd.f32 %v2367, %v2368
    %v2439 = vadd.f32 %v2438, %v2369
    %v2440 = vadd.f32 %v2439, %v2370
    %2441 = vadd.xlane.f32.xlu0 %v2440
    %v2442 = vpop.xlane.xlu0 %2441
    %v2443 = vadd.f32 %v2371, %v2372
    %v2444 = vadd.f32 %v2443, %v2373
    %v2445 = vadd.f32 %v2444, %v2374
    %2446 = vadd.xlane.f32.xlu0 %v2445
    %v2447 = vpop.xlane.xlu0 %2446
    %v2448 = vadd.f32 %v2375, %v2376
    %v2449 = vadd.f32 %v2448, %v2377
    %v2450 = vadd.f32 %v2449, %v2378
    %2451 = vadd.xlane.f32.xlu0 %v2450
    %v2452 = vpop.xlane.xlu0 %2451
    %v2453 = vadd.f32 %v2379, %v2380
    %v2454 = vadd.f32 %v2453, %v2381
    %v2455 = vadd.f32 %v2454, %v2382
    %2456 = vadd.xlane.f32.xlu0 %v2455
    %v2457 = vpop.xlane.xlu0 %2456
    %v2458 = vadd.f32 %v2383, %v2384
    %v2459 = vadd.f32 %v2458, %v2385
    %v2460 = vadd.f32 %v2459, %v2386
    %2461 = vadd.xlane.f32.xlu0 %v2460
    %v2462 = vpop.xlane.xlu0 %2461
    %v2463 = vadd.f32 %v2387, %v2388
    %v2464 = vadd.f32 %v2463, %v2389
    %v2465 = vadd.f32 %v2464, %v2390
    %2466 = vadd.xlane.f32.xlu0 %v2465
    %v2467 = vpop.xlane.xlu0 %2466
    %v2468 = vadd.f32 %v2391, %v2392
    %v2469 = vadd.f32 %v2468, %v2393
    %v2470 = vadd.f32 %v2469, %v2394
    %2471 = vadd.xlane.f32.xlu0 %v2470
    %v2472 = vpop.xlane.xlu0 %2471
    %v2473 = vadd.f32 %v2395, %v2396
    %v2474 = vadd.f32 %v2473, %v2397
    %v2475 = vadd.f32 %v2474, %v2398
    %2476 = vadd.xlane.f32.xlu0 %v2475
    %v2477 = vpop.xlane.xlu0 %2476
    %v2478 = vadd.f32 %v2399, %v2400
    %v2479 = vadd.f32 %v2478, %v2401
    %v2480 = vadd.f32 %v2479, %v2402
    %2481 = vadd.xlane.f32.xlu0 %v2480
    %v2482 = vpop.xlane.xlu0 %2481
    %v2483 = vmul.f32 %v2407, %v556
    %v2484 = vmul.f32 %v2412, %v556
    %v2485 = vmul.f32 %v2417, %v556
    %v2486 = vmul.f32 %v2422, %v556
    %v2487 = vmul.f32 %v2427, %v556
    %v2488 = vmul.f32 %v2432, %v556
    %v2489 = vmul.f32 %v2437, %v556
    %v2490 = vmul.f32 %v2442, %v556
    %v2491 = vmul.f32 %v2447, %v556
    %v2492 = vmul.f32 %v2452, %v556
    %v2493 = vmul.f32 %v2457, %v556
    %v2494 = vmul.f32 %v2462, %v556
    %v2495 = vmul.f32 %v2467, %v556
    %v2496 = vmul.f32 %v2472, %v556
    %v2497 = vmul.f32 %v2477, %v556
    %v2498 = vmul.f32 %v2482, %v556
    %v2499 = vsub.f32 %v2339, %v2483
    %v2500 = vsub.f32 %v2340, %v2483
    %v2501 = vsub.f32 %v2341, %v2483
    %v2502 = vsub.f32 %v2342, %v2483
    %v2503 = vsub.f32 %v2343, %v2484
    %v2504 = vsub.f32 %v2344, %v2484
    %v2505 = vsub.f32 %v2345, %v2484
    %v2506 = vsub.f32 %v2346, %v2484
    %v2507 = vsub.f32 %v2347, %v2485
    %v2508 = vsub.f32 %v2348, %v2485
    %v2509 = vsub.f32 %v2349, %v2485
    %v2510 = vsub.f32 %v2350, %v2485
    %v2511 = vsub.f32 %v2351, %v2486
    %v2512 = vsub.f32 %v2352, %v2486
    %v2513 = vsub.f32 %v2353, %v2486
    %v2514 = vsub.f32 %v2354, %v2486
    %v2515 = vsub.f32 %v2355, %v2487
    %v2516 = vsub.f32 %v2356, %v2487
    %v2517 = vsub.f32 %v2357, %v2487
    %v2518 = vsub.f32 %v2358, %v2487
    %v2519 = vsub.f32 %v2359, %v2488
    %v2520 = vsub.f32 %v2360, %v2488
    %v2521 = vsub.f32 %v2361, %v2488
    %v2522 = vsub.f32 %v2362, %v2488
    %v2523 = vsub.f32 %v2363, %v2489
    %v2524 = vsub.f32 %v2364, %v2489
    %v2525 = vsub.f32 %v2365, %v2489
    %v2526 = vsub.f32 %v2366, %v2489
    %v2527 = vsub.f32 %v2367, %v2490
    %v2528 = vsub.f32 %v2368, %v2490
    %v2529 = vsub.f32 %v2369, %v2490
    %v2530 = vsub.f32 %v2370, %v2490
    %v2531 = vsub.f32 %v2371, %v2491
    %v2532 = vsub.f32 %v2372, %v2491
    %v2533 = vsub.f32 %v2373, %v2491
    %v2534 = vsub.f32 %v2374, %v2491
    %v2535 = vsub.f32 %v2375, %v2492
    %v2536 = vsub.f32 %v2376, %v2492
    %v2537 = vsub.f32 %v2377, %v2492
    %v2538 = vsub.f32 %v2378, %v2492
    %v2539 = vsub.f32 %v2379, %v2493
    %v2540 = vsub.f32 %v2380, %v2493
    %v2541 = vsub.f32 %v2381, %v2493
    %v2542 = vsub.f32 %v2382, %v2493
    %v2543 = vsub.f32 %v2383, %v2494
    %v2544 = vsub.f32 %v2384, %v2494
    %v2545 = vsub.f32 %v2385, %v2494
    %v2546 = vsub.f32 %v2386, %v2494
    %v2547 = vsub.f32 %v2387, %v2495
    %v2548 = vsub.f32 %v2388, %v2495
    %v2549 = vsub.f32 %v2389, %v2495
    %v2550 = vsub.f32 %v2390, %v2495
    %v2551 = vsub.f32 %v2391, %v2496
    %v2552 = vsub.f32 %v2392, %v2496
    %v2553 = vsub.f32 %v2393, %v2496
    %v2554 = vsub.f32 %v2394, %v2496
    %v2555 = vsub.f32 %v2395, %v2497
    %v2556 = vsub.f32 %v2396, %v2497
    %v2557 = vsub.f32 %v2397, %v2497
    %v2558 = vsub.f32 %v2398, %v2497
    %v2559 = vsub.f32 %v2399, %v2498
    %v2560 = vsub.f32 %v2400, %v2498
    %v2561 = vsub.f32 %v2401, %v2498
    %v2562 = vsub.f32 %v2402, %v2498
    %v2563 = vmul.f32 %v2499, %v2499
    %v2564 = vmul.f32 %v2500, %v2500
    %v2565 = vmul.f32 %v2501, %v2501
    %v2566 = vmul.f32 %v2502, %v2502
    %v2567 = vmul.f32 %v2503, %v2503
    %v2568 = vmul.f32 %v2504, %v2504
    %v2569 = vmul.f32 %v2505, %v2505
    %v2570 = vmul.f32 %v2506, %v2506
    %v2571 = vmul.f32 %v2507, %v2507
    %v2572 = vmul.f32 %v2508, %v2508
    %v2573 = vmul.f32 %v2509, %v2509
    %v2574 = vmul.f32 %v2510, %v2510
    %v2575 = vmul.f32 %v2511, %v2511
    %v2576 = vmul.f32 %v2512, %v2512
    %v2577 = vmul.f32 %v2513, %v2513
    %v2578 = vmul.f32 %v2514, %v2514
    %v2579 = vmul.f32 %v2515, %v2515
    %v2580 = vmul.f32 %v2516, %v2516
    %v2581 = vmul.f32 %v2517, %v2517
    %v2582 = vmul.f32 %v2518, %v2518
    %v2583 = vmul.f32 %v2519, %v2519
    %v2584 = vmul.f32 %v2520, %v2520
    %v2585 = vmul.f32 %v2521, %v2521
    %v2586 = vmul.f32 %v2522, %v2522
    %v2587 = vmul.f32 %v2523, %v2523
    %v2588 = vmul.f32 %v2524, %v2524
    %v2589 = vmul.f32 %v2525, %v2525
    %v2590 = vmul.f32 %v2526, %v2526
    %v2591 = vmul.f32 %v2527, %v2527
    %v2592 = vmul.f32 %v2528, %v2528
    %v2593 = vmul.f32 %v2529, %v2529
    %v2594 = vmul.f32 %v2530, %v2530
    %v2595 = vmul.f32 %v2531, %v2531
    %v2596 = vmul.f32 %v2532, %v2532
    %v2597 = vmul.f32 %v2533, %v2533
    %v2598 = vmul.f32 %v2534, %v2534
    %v2599 = vmul.f32 %v2535, %v2535
    %v2600 = vmul.f32 %v2536, %v2536
    %v2601 = vmul.f32 %v2537, %v2537
    %v2602 = vmul.f32 %v2538, %v2538
    %v2603 = vmul.f32 %v2539, %v2539
    %v2604 = vmul.f32 %v2540, %v2540
    %v2605 = vmul.f32 %v2541, %v2541
    %v2606 = vmul.f32 %v2542, %v2542
    %v2607 = vmul.f32 %v2543, %v2543
    %v2608 = vmul.f32 %v2544, %v2544
    %v2609 = vmul.f32 %v2545, %v2545
    %v2610 = vmul.f32 %v2546, %v2546
    %v2611 = vmul.f32 %v2547, %v2547
    %v2612 = vmul.f32 %v2548, %v2548
    %v2613 = vmul.f32 %v2549, %v2549
    %v2614 = vmul.f32 %v2550, %v2550
    %v2615 = vmul.f32 %v2551, %v2551
    %v2616 = vmul.f32 %v2552, %v2552
    %v2617 = vmul.f32 %v2553, %v2553
    %v2618 = vmul.f32 %v2554, %v2554
    %v2619 = vmul.f32 %v2555, %v2555
    %v2620 = vmul.f32 %v2556, %v2556
    %v2621 = vmul.f32 %v2557, %v2557
    %v2622 = vmul.f32 %v2558, %v2558
    %v2623 = vmul.f32 %v2559, %v2559
    %v2624 = vmul.f32 %v2560, %v2560
    %v2625 = vmul.f32 %v2561, %v2561
    %v2626 = vmul.f32 %v2562, %v2562
    %v2627 = vadd.f32 %v2563, %v2564
    %v2628 = vadd.f32 %v2627, %v2565
    %v2629 = vadd.f32 %v2628, %v2566
    %2630 = vadd.xlane.f32.xlu0 %v2629
    %v2631 = vpop.xlane.xlu0 %2630
    %v2632 = vadd.f32 %v2567, %v2568
    %v2633 = vadd.f32 %v2632, %v2569
    %v2634 = vadd.f32 %v2633, %v2570
    %2635 = vadd.xlane.f32.xlu0 %v2634
    %v2636 = vpop.xlane.xlu0 %2635
    %v2637 = vadd.f32 %v2571, %v2572
    %v2638 = vadd.f32 %v2637, %v2573
    %v2639 = vadd.f32 %v2638, %v2574
    %2640 = vadd.xlane.f32.xlu0 %v2639
    %v2641 = vpop.xlane.xlu0 %2640
    %v2642 = vadd.f32 %v2575, %v2576
    %v2643 = vadd.f32 %v2642, %v2577
    %v2644 = vadd.f32 %v2643, %v2578
    %2645 = vadd.xlane.f32.xlu0 %v2644
    %v2646 = vpop.xlane.xlu0 %2645
    %v2647 = vadd.f32 %v2579, %v2580
    %v2648 = vadd.f32 %v2647, %v2581
    %v2649 = vadd.f32 %v2648, %v2582
    %2650 = vadd.xlane.f32.xlu0 %v2649
    %v2651 = vpop.xlane.xlu0 %2650
    %v2652 = vadd.f32 %v2583, %v2584
    %v2653 = vadd.f32 %v2652, %v2585
    %v2654 = vadd.f32 %v2653, %v2586
    %2655 = vadd.xlane.f32.xlu0 %v2654
    %v2656 = vpop.xlane.xlu0 %2655
    %v2657 = vadd.f32 %v2587, %v2588
    %v2658 = vadd.f32 %v2657, %v2589
    %v2659 = vadd.f32 %v2658, %v2590
    %2660 = vadd.xlane.f32.xlu0 %v2659
    %v2661 = vpop.xlane.xlu0 %2660
    %v2662 = vadd.f32 %v2591, %v2592
    %v2663 = vadd.f32 %v2662, %v2593
    %v2664 = vadd.f32 %v2663, %v2594
    %2665 = vadd.xlane.f32.xlu0 %v2664
    %v2666 = vpop.xlane.xlu0 %2665
    %v2667 = vadd.f32 %v2595, %v2596
    %v2668 = vadd.f32 %v2667, %v2597
    %v2669 = vadd.f32 %v2668, %v2598
    %2670 = vadd.xlane.f32.xlu0 %v2669
    %v2671 = vpop.xlane.xlu0 %2670
    %v2672 = vadd.f32 %v2599, %v2600
    %v2673 = vadd.f32 %v2672, %v2601
    %v2674 = vadd.f32 %v2673, %v2602
    %2675 = vadd.xlane.f32.xlu0 %v2674
    %v2676 = vpop.xlane.xlu0 %2675
    %v2677 = vadd.f32 %v2603, %v2604
    %v2678 = vadd.f32 %v2677, %v2605
    %v2679 = vadd.f32 %v2678, %v2606
    %2680 = vadd.xlane.f32.xlu0 %v2679
    %v2681 = vpop.xlane.xlu0 %2680
    %v2682 = vadd.f32 %v2607, %v2608
    %v2683 = vadd.f32 %v2682, %v2609
    %v2684 = vadd.f32 %v2683, %v2610
    %2685 = vadd.xlane.f32.xlu0 %v2684
    %v2686 = vpop.xlane.xlu0 %2685
    %v2687 = vadd.f32 %v2611, %v2612
    %v2688 = vadd.f32 %v2687, %v2613
    %v2689 = vadd.f32 %v2688, %v2614
    %2690 = vadd.xlane.f32.xlu0 %v2689
    %v2691 = vpop.xlane.xlu0 %2690
    %v2692 = vadd.f32 %v2615, %v2616
    %v2693 = vadd.f32 %v2692, %v2617
    %v2694 = vadd.f32 %v2693, %v2618
    %2695 = vadd.xlane.f32.xlu0 %v2694
    %v2696 = vpop.xlane.xlu0 %2695
    %v2697 = vadd.f32 %v2619, %v2620
    %v2698 = vadd.f32 %v2697, %v2621
    %v2699 = vadd.f32 %v2698, %v2622
    %2700 = vadd.xlane.f32.xlu0 %v2699
    %v2701 = vpop.xlane.xlu0 %2700
    %v2702 = vadd.f32 %v2623, %v2624
    %v2703 = vadd.f32 %v2702, %v2625
    %v2704 = vadd.f32 %v2703, %v2626
    %2705 = vadd.xlane.f32.xlu0 %v2704
    %v2706 = vpop.xlane.xlu0 %2705
    %v2707 = vmul.f32 %v2631, %v556
    %v2708 = vmul.f32 %v2636, %v556
    %v2709 = vmul.f32 %v2641, %v556
    %v2710 = vmul.f32 %v2646, %v556
    %v2711 = vmul.f32 %v2651, %v556
    %v2712 = vmul.f32 %v2656, %v556
    %v2713 = vmul.f32 %v2661, %v556
    %v2714 = vmul.f32 %v2666, %v556
    %v2715 = vmul.f32 %v2671, %v556
    %v2716 = vmul.f32 %v2676, %v556
    %v2717 = vmul.f32 %v2681, %v556
    %v2718 = vmul.f32 %v2686, %v556
    %v2719 = vmul.f32 %v2691, %v556
    %v2720 = vmul.f32 %v2696, %v556
    %v2721 = vmul.f32 %v2701, %v556
    %v2722 = vmul.f32 %v2706, %v556
    %v2723 = vadd.f32 %v2707, 1e-05
    %v2724 = vadd.f32 %v2708, 1e-05
    %v2725 = vadd.f32 %v2709, 1e-05
    %v2726 = vadd.f32 %v2710, 1e-05
    %v2727 = vadd.f32 %v2711, 1e-05
    %v2728 = vadd.f32 %v2712, 1e-05
    %v2729 = vadd.f32 %v2713, 1e-05
    %v2730 = vadd.f32 %v2714, 1e-05
    %v2731 = vadd.f32 %v2715, 1e-05
    %v2732 = vadd.f32 %v2716, 1e-05
    %v2733 = vadd.f32 %v2717, 1e-05
    %v2734 = vadd.f32 %v2718, 1e-05
    %v2735 = vadd.f32 %v2719, 1e-05
    %v2736 = vadd.f32 %v2720, 1e-05
    %v2737 = vadd.f32 %v2721, 1e-05
    %v2738 = vadd.f32 %v2722, 1e-05
    %v2739 = vrsqrt.pop %v2723
    %v2740 = vrsqrt.pop %v2724
    %v2741 = vrsqrt.pop %v2725
    %v2742 = vrsqrt.pop %v2726
    %v2743 = vrsqrt.pop %v2727
    %v2744 = vrsqrt.pop %v2728
    %v2745 = vrsqrt.pop %v2729
    %v2746 = vrsqrt.pop %v2730
    %v2747 = vrsqrt.pop %v2731
    %v2748 = vrsqrt.pop %v2732
    %v2749 = vrsqrt.pop %v2733
    %v2750 = vrsqrt.pop %v2734
    %v2751 = vrsqrt.pop %v2735
    %v2752 = vrsqrt.pop %v2736
    %v2753 = vrsqrt.pop %v2737
    %v2754 = vrsqrt.pop %v2738
    %v2755 = vmul.f32 %v2499, %v2739
    %v2756 = vmul.f32 %v2500, %v2739
    %v2757 = vmul.f32 %v2501, %v2739
    %v2758 = vmul.f32 %v2502, %v2739
    %v2759 = vmul.f32 %v2503, %v2740
    %v2760 = vmul.f32 %v2504, %v2740
    %v2761 = vmul.f32 %v2505, %v2740
    %v2762 = vmul.f32 %v2506, %v2740
    %v2763 = vmul.f32 %v2507, %v2741
    %v2764 = vmul.f32 %v2508, %v2741
    %v2765 = vmul.f32 %v2509, %v2741
    %v2766 = vmul.f32 %v2510, %v2741
    %v2767 = vmul.f32 %v2511, %v2742
    %v2768 = vmul.f32 %v2512, %v2742
    %v2769 = vmul.f32 %v2513, %v2742
    %v2770 = vmul.f32 %v2514, %v2742
    %v2771 = vmul.f32 %v2515, %v2743
    %v2772 = vmul.f32 %v2516, %v2743
    %v2773 = vmul.f32 %v2517, %v2743
    %v2774 = vmul.f32 %v2518, %v2743
    %v2775 = vmul.f32 %v2519, %v2744
    %v2776 = vmul.f32 %v2520, %v2744
    %v2777 = vmul.f32 %v2521, %v2744
    %v2778 = vmul.f32 %v2522, %v2744
    %v2779 = vmul.f32 %v2523, %v2745
    %v2780 = vmul.f32 %v2524, %v2745
    %v2781 = vmul.f32 %v2525, %v2745
    %v2782 = vmul.f32 %v2526, %v2745
    %v2783 = vmul.f32 %v2527, %v2746
    %v2784 = vmul.f32 %v2528, %v2746
    %v2785 = vmul.f32 %v2529, %v2746
    %v2786 = vmul.f32 %v2530, %v2746
    %v2787 = vmul.f32 %v2531, %v2747
    %v2788 = vmul.f32 %v2532, %v2747
    %v2789 = vmul.f32 %v2533, %v2747
    %v2790 = vmul.f32 %v2534, %v2747
    %v2791 = vmul.f32 %v2535, %v2748
    %v2792 = vmul.f32 %v2536, %v2748
    %v2793 = vmul.f32 %v2537, %v2748
    %v2794 = vmul.f32 %v2538, %v2748
    %v2795 = vmul.f32 %v2539, %v2749
    %v2796 = vmul.f32 %v2540, %v2749
    %v2797 = vmul.f32 %v2541, %v2749
    %v2798 = vmul.f32 %v2542, %v2749
    %v2799 = vmul.f32 %v2543, %v2750
    %v2800 = vmul.f32 %v2544, %v2750
    %v2801 = vmul.f32 %v2545, %v2750
    %v2802 = vmul.f32 %v2546, %v2750
    %v2803 = vmul.f32 %v2547, %v2751
    %v2804 = vmul.f32 %v2548, %v2751
    %v2805 = vmul.f32 %v2549, %v2751
    %v2806 = vmul.f32 %v2550, %v2751
    %v2807 = vmul.f32 %v2551, %v2752
    %v2808 = vmul.f32 %v2552, %v2752
    %v2809 = vmul.f32 %v2553, %v2752
    %v2810 = vmul.f32 %v2554, %v2752
    %v2811 = vmul.f32 %v2555, %v2753
    %v2812 = vmul.f32 %v2556, %v2753
    %v2813 = vmul.f32 %v2557, %v2753
    %v2814 = vmul.f32 %v2558, %v2753
    %v2815 = vmul.f32 %v2559, %v2754
    %v2816 = vmul.f32 %v2560, %v2754
    %v2817 = vmul.f32 %v2561, %v2754
    %v2818 = vmul.f32 %v2562, %v2754
    %v2819 = vld [vmem:[#allocation4] sm:$0xf]
    %v2821 = vlaneseq
    %v2822 = vshrl.u32 %v2821, 7
    %v2823 = vsub.s32 0, %v2822
    %v2824 = vrot.slane %v2819, %v2823
    %v2825 = vlaneseq
    %v2826 = vshrl.u32 %v2825, 7
    %v2827 = vsub.s32 1, %v2826
    %v2828 = vrot.slane %v2819, %v2827
    %v2829 = vlaneseq
    %v2830 = vshrl.u32 %v2829, 7
    %v2831 = vsub.s32 2, %v2830
    %v2832 = vrot.slane %v2819, %v2831
    %v2833 = vlaneseq
    %v2834 = vshrl.u32 %v2833, 7
    %v2835 = vsub.s32 3, %v2834
    %v2836 = vrot.slane %v2819, %v2835
    %v2841 = vmul.f32 %v2755, %v2824
    %v2842 = vmul.f32 %v2756, %v2828
    %v2843 = vmul.f32 %v2757, %v2832
    %v2844 = vmul.f32 %v2758, %v2836
    %v2845 = vmul.f32 %v2759, %v2824
    %v2846 = vmul.f32 %v2760, %v2828
    %v2847 = vmul.f32 %v2761, %v2832
    %v2848 = vmul.f32 %v2762, %v2836
    %v2849 = vmul.f32 %v2763, %v2824
    %v2850 = vmul.f32 %v2764, %v2828
    %v2851 = vmul.f32 %v2765, %v2832
    %v2852 = vmul.f32 %v2766, %v2836
    %v2853 = vmul.f32 %v2767, %v2824
    %v2854 = vmul.f32 %v2768, %v2828
    %v2855 = vmul.f32 %v2769, %v2832
    %v2856 = vmul.f32 %v2770, %v2836
    %v2857 = vmul.f32 %v2771, %v2824
    %v2858 = vmul.f32 %v2772, %v2828
    %v2859 = vmul.f32 %v2773, %v2832
    %v2860 = vmul.f32 %v2774, %v2836
    %v2861 = vmul.f32 %v2775, %v2824
    %v2862 = vmul.f32 %v2776, %v2828
    %v2863 = vmul.f32 %v2777, %v2832
    %v2864 = vmul.f32 %v2778, %v2836
    %v2865 = vmul.f32 %v2779, %v2824
    %v2866 = vmul.f32 %v2780, %v2828
    %v2867 = vmul.f32 %v2781, %v2832
    %v2868 = vmul.f32 %v2782, %v2836
    %v2869 = vmul.f32 %v2783, %v2824
    %v2870 = vmul.f32 %v2784, %v2828
    %v2871 = vmul.f32 %v2785, %v2832
    %v2872 = vmul.f32 %v2786, %v2836
    %v2873 = vmul.f32 %v2787, %v2824
    %v2874 = vmul.f32 %v2788, %v2828
    %v2875 = vmul.f32 %v2789, %v2832
    %v2876 = vmul.f32 %v2790, %v2836
    %v2877 = vmul.f32 %v2791, %v2824
    %v2878 = vmul.f32 %v2792, %v2828
    %v2879 = vmul.f32 %v2793, %v2832
    %v2880 = vmul.f32 %v2794, %v2836
    %v2881 = vmul.f32 %v2795, %v2824
    %v2882 = vmul.f32 %v2796, %v2828
    %v2883 = vmul.f32 %v2797, %v2832
    %v2884 = vmul.f32 %v2798, %v2836
    %v2885 = vmul.f32 %v2799, %v2824
    %v2886 = vmul.f32 %v2800, %v2828
    %v2887 = vmul.f32 %v2801, %v2832
    %v2888 = vmul.f32 %v2802, %v2836
    %v2889 = vmul.f32 %v2803, %v2824
    %v2890 = vmul.f32 %v2804, %v2828
    %v2891 = vmul.f32 %v2805, %v2832
    %v2892 = vmul.f32 %v2806, %v2836
    %v2893 = vmul.f32 %v2807, %v2824
    %v2894 = vmul.f32 %v2808, %v2828
    %v2895 = vmul.f32 %v2809, %v2832
    %v2896 = vmul.f32 %v2810, %v2836
    %v2897 = vmul.f32 %v2811, %v2824
    %v2898 = vmul.f32 %v2812, %v2828
    %v2899 = vmul.f32 %v2813, %v2832
    %v2900 = vmul.f32 %v2814, %v2836
    %v2901 = vmul.f32 %v2815, %v2824
    %v2902 = vmul.f32 %v2816, %v2828
    %v2903 = vmul.f32 %v2817, %v2832
    %v2904 = vmul.f32 %v2818, %v2836
    %v2905 = vld [vmem:[#allocation6] sm:$0xf]
    %v2907 = vlaneseq
    %v2908 = vshrl.u32 %v2907, 7
    %v2909 = vsub.s32 0, %v2908
    %v2910 = vrot.slane %v2905, %v2909
    %v2911 = vlaneseq
    %v2912 = vshrl.u32 %v2911, 7
    %v2913 = vsub.s32 1, %v2912
    %v2914 = vrot.slane %v2905, %v2913
    %v2915 = vlaneseq
    %v2916 = vshrl.u32 %v2915, 7
    %v2917 = vsub.s32 2, %v2916
    %v2918 = vrot.slane %v2905, %v2917
    %v2919 = vlaneseq
    %v2920 = vshrl.u32 %v2919, 7
    %v2921 = vsub.s32 3, %v2920
    %v2922 = vrot.slane %v2905, %v2921
    %v2927 = vadd.f32 %v2841, %v2910
    %v2928 = vadd.f32 %v2842, %v2914
    %v2929 = vadd.f32 %v2843, %v2918
    %v2930 = vadd.f32 %v2844, %v2922
    %v2931 = vadd.f32 %v2845, %v2910
    %v2932 = vadd.f32 %v2846, %v2914
    %v2933 = vadd.f32 %v2847, %v2918
    %v2934 = vadd.f32 %v2848, %v2922
    %v2935 = vadd.f32 %v2849, %v2910
    %v2936 = vadd.f32 %v2850, %v2914
    %v2937 = vadd.f32 %v2851, %v2918
    %v2938 = vadd.f32 %v2852, %v2922
    %v2939 = vadd.f32 %v2853, %v2910
    %v2940 = vadd.f32 %v2854, %v2914
    %v2941 = vadd.f32 %v2855, %v2918
    %v2942 = vadd.f32 %v2856, %v2922
    %v2943 = vadd.f32 %v2857, %v2910
    %v2944 = vadd.f32 %v2858, %v2914
    %v2945 = vadd.f32 %v2859, %v2918
    %v2946 = vadd.f32 %v2860, %v2922
    %v2947 = vadd.f32 %v2861, %v2910
    %v2948 = vadd.f32 %v2862, %v2914
    %v2949 = vadd.f32 %v2863, %v2918
    %v2950 = vadd.f32 %v2864, %v2922
    %v2951 = vadd.f32 %v2865, %v2910
    %v2952 = vadd.f32 %v2866, %v2914
    %v2953 = vadd.f32 %v2867, %v2918
    %v2954 = vadd.f32 %v2868, %v2922
    %v2955 = vadd.f32 %v2869, %v2910
    %v2956 = vadd.f32 %v2870, %v2914
    %v2957 = vadd.f32 %v2871, %v2918
    %v2958 = vadd.f32 %v2872, %v2922
    %v2959 = vadd.f32 %v2873, %v2910
    %v2960 = vadd.f32 %v2874, %v2914
    %v2961 = vadd.f32 %v2875, %v2918
    %v2962 = vadd.f32 %v2876, %v2922
    %v2963 = vadd.f32 %v2877, %v2910
    %v2964 = vadd.f32 %v2878, %v2914
    %v2965 = vadd.f32 %v2879, %v2918
    %v2966 = vadd.f32 %v2880, %v2922
    %v2967 = vadd.f32 %v2881, %v2910
    %v2968 = vadd.f32 %v2882, %v2914
    %v2969 = vadd.f32 %v2883, %v2918
    %v2970 = vadd.f32 %v2884, %v2922
    %v2971 = vadd.f32 %v2885, %v2910
    %v2972 = vadd.f32 %v2886, %v2914
    %v2973 = vadd.f32 %v2887, %v2918
    %v2974 = vadd.f32 %v2888, %v2922
    %v2975 = vadd.f32 %v2889, %v2910
    %v2976 = vadd.f32 %v2890, %v2914
    %v2977 = vadd.f32 %v2891, %v2918
    %v2978 = vadd.f32 %v2892, %v2922
    %v2979 = vadd.f32 %v2893, %v2910
    %v2980 = vadd.f32 %v2894, %v2914
    %v2981 = vadd.f32 %v2895, %v2918
    %v2982 = vadd.f32 %v2896, %v2922
    %v2983 = vadd.f32 %v2897, %v2910
    %v2984 = vadd.f32 %v2898, %v2914
    %v2985 = vadd.f32 %v2899, %v2918
    %v2986 = vadd.f32 %v2900, %v2922
    %v2987 = vadd.f32 %v2901, %v2910
    %v2988 = vadd.f32 %v2902, %v2914
    %v2989 = vadd.f32 %v2903, %v2918
    %v2990 = vadd.f32 %v2904, %v2922
    %v2991 = vpack.c.bf16 %v2931, %v2927
    %v2992 = vpack.c.bf16 %v2932, %v2928
    %v2993 = vpack.c.bf16 %v2933, %v2929
    %v2994 = vpack.c.bf16 %v2934, %v2930
    %v2995 = vpack.c.bf16 %v2939, %v2935
    %v2996 = vpack.c.bf16 %v2940, %v2936
    %v2997 = vpack.c.bf16 %v2941, %v2937
    %v2998 = vpack.c.bf16 %v2942, %v2938
    %v2999 = vpack.c.bf16 %v2947, %v2943
    %v3000 = vpack.c.bf16 %v2948, %v2944
    %v3001 = vpack.c.bf16 %v2949, %v2945
    %v3002 = vpack.c.bf16 %v2950, %v2946
    %v3003 = vpack.c.bf16 %v2955, %v2951
    %v3004 = vpack.c.bf16 %v2956, %v2952
    %v3005 = vpack.c.bf16 %v2957, %v2953
    %v3006 = vpack.c.bf16 %v2958, %v2954
    %v3007 = vpack.c.bf16 %v2963, %v2959
    %v3008 = vpack.c.bf16 %v2964, %v2960
    %v3009 = vpack.c.bf16 %v2965, %v2961
    %v3010 = vpack.c.bf16 %v2966, %v2962
    %v3011 = vpack.c.bf16 %v2971, %v2967
    %v3012 = vpack.c.bf16 %v2972, %v2968
    %v3013 = vpack.c.bf16 %v2973, %v2969
    %v3014 = vpack.c.bf16 %v2974, %v2970
    %v3015 = vpack.c.bf16 %v2979, %v2975
    %v3016 = vpack.c.bf16 %v2980, %v2976
    %v3017 = vpack.c.bf16 %v2981, %v2977
    %v3018 = vpack.c.bf16 %v2982, %v2978
    %v3019 = vpack.c.bf16 %v2987, %v2983
    %v3020 = vpack.c.bf16 %v2988, %v2984
    %v3021 = vpack.c.bf16 %v2989, %v2985
    %v3022 = vpack.c.bf16 %v2990, %v2986
    %v3023 = vld [vmem:[%s9] sm:$0xf]
    %v3024 = vld [vmem:[%s9 + $0x4] sm:$0xf]
    %v3025 = vld [vmem:[%s9 + $0x8] sm:$0xf]
    %v3026 = vld [vmem:[%s9 + $0xc] sm:$0xf]
    %v3027 = vld [vmem:[%s9 + $0x10] sm:$0xf]
    %v3028 = vld [vmem:[%s9 + $0x14] sm:$0xf]
    %v3029 = vld [vmem:[%s9 + $0x18] sm:$0xf]
    %v3030 = vld [vmem:[%s9 + $0x1c] sm:$0xf]
    %v3031 = vld [vmem:[%s9 + $0x20] sm:$0xf]
    %v3032 = vld [vmem:[%s9 + $0x24] sm:$0xf]
    %v3033 = vld [vmem:[%s9 + $0x28] sm:$0xf]
    %v3034 = vld [vmem:[%s9 + $0x2c] sm:$0xf]
    %v3035 = vld [vmem:[%s9 + $0x30] sm:$0xf]
    %v3036 = vld [vmem:[%s9 + $0x34] sm:$0xf]
    %v3037 = vld [vmem:[%s9 + $0x38] sm:$0xf]
    %v3038 = vld [vmem:[%s9 + $0x3c] sm:$0xf]
    %v3039 = vld [vmem:[%s9 + $0x40] sm:$0xf]
    %v3040 = vld [vmem:[%s9 + $0x44] sm:$0xf]
    %v3041 = vld [vmem:[%s9 + $0x48] sm:$0xf]
    %v3042 = vld [vmem:[%s9 + $0x4c] sm:$0xf]
    %v3043 = vld [vmem:[%s9 + $0x50] sm:$0xf]
    %v3044 = vld [vmem:[%s9 + $0x54] sm:$0xf]
    %v3045 = vld [vmem:[%s9 + $0x58] sm:$0xf]
    %v3046 = vld [vmem:[%s9 + $0x5c] sm:$0xf]
    %v3047 = vld [vmem:[%s9 + $0x60] sm:$0xf]
    %v3048 = vld [vmem:[%s9 + $0x64] sm:$0xf]
    %v3049 = vld [vmem:[%s9 + $0x68] sm:$0xf]
    %v3050 = vld [vmem:[%s9 + $0x6c] sm:$0xf]
    %v3051 = vld [vmem:[%s9 + $0x70] sm:$0xf]
    %v3052 = vld [vmem:[%s9 + $0x74] sm:$0xf]
    %v3053 = vld [vmem:[%s9 + $0x78] sm:$0xf]
    %v3054 = vld [vmem:[%s9 + $0x7c] sm:$0xf]
    %v3055 = vld [vmem:[%s9 + $0x80] sm:$0xf]
    %v3056 = vld [vmem:[%s9 + $0x84] sm:$0xf]
    %v3057 = vld [vmem:[%s9 + $0x88] sm:$0xf]
    %v3058 = vld [vmem:[%s9 + $0x8c] sm:$0xf]
    %v3059 = vld [vmem:[%s9 + $0x90] sm:$0xf]
    %v3060 = vld [vmem:[%s9 + $0x94] sm:$0xf]
    %v3061 = vld [vmem:[%s9 + $0x98] sm:$0xf]
    %v3062 = vld [vmem:[%s9 + $0x9c] sm:$0xf]
    %v3063 = vld [vmem:[%s9 + $0xa0] sm:$0xf]
    %v3064 = vld [vmem:[%s9 + $0xa4] sm:$0xf]
    %v3065 = vld [vmem:[%s9 + $0xa8] sm:$0xf]
    %v3066 = vld [vmem:[%s9 + $0xac] sm:$0xf]
    %v3067 = vld [vmem:[%s9 + $0xb0] sm:$0xf]
    %v3068 = vld [vmem:[%s9 + $0xb4] sm:$0xf]
    %v3069 = vld [vmem:[%s9 + $0xb8] sm:$0xf]
    %v3070 = vld [vmem:[%s9 + $0xbc] sm:$0xf]
    %v3071 = vld [vmem:[%s9 + $0xc0] sm:$0xf]
    %v3072 = vld [vmem:[%s9 + $0xc4] sm:$0xf]
    %v3073 = vld [vmem:[%s9 + $0xc8] sm:$0xf]
    %v3074 = vld [vmem:[%s9 + $0xcc] sm:$0xf]
    %v3075 = vld [vmem:[%s9 + $0xd0] sm:$0xf]
    %v3076 = vld [vmem:[%s9 + $0xd4] sm:$0xf]
    %v3077 = vld [vmem:[%s9 + $0xd8] sm:$0xf]
    %v3078 = vld [vmem:[%s9 + $0xdc] sm:$0xf]
    %v3079 = vld [vmem:[%s9 + $0xe0] sm:$0xf]
    %v3080 = vld [vmem:[%s9 + $0xe4] sm:$0xf]
    %v3081 = vld [vmem:[%s9 + $0xe8] sm:$0xf]
    %v3082 = vld [vmem:[%s9 + $0xec] sm:$0xf]
    %v3083 = vld [vmem:[%s9 + $0xf0] sm:$0xf]
    %v3084 = vld [vmem:[%s9 + $0xf4] sm:$0xf]
    %v3085 = vld [vmem:[%s9 + $0xf8] sm:$0xf]
    %v3086 = vld [vmem:[%s9 + $0xfc] sm:$0xf]
    %v3087 = vld [vmem:[#allocation7] sm:$0x1]
    %v3089 = vlaneseq
    %v3090 = vshrl.u32 %v3089, 7
    %v3091 = vsub.s32 0, %v3090
    %v3092 = vrot.slane %v3087, %v3091
    %v3158 = vunpack.c.l.b16 %v3023
    %v3159 = vunpack.c.l.b16 %v3024
    %v3160 = vunpack.c.l.b16 %v3025
    %v3161 = vunpack.c.l.b16 %v3026
    %v3162 = vunpack.c.l.b16 %v3027
    %v3163 = vunpack.c.l.b16 %v3028
    %v3164 = vunpack.c.l.b16 %v3029
    %v3165 = vunpack.c.l.b16 %v3030
    %v3166 = vunpack.c.l.b16 %v3031
    %v3167 = vunpack.c.l.b16 %v3032
    %v3168 = vunpack.c.l.b16 %v3033
    %v3169 = vunpack.c.l.b16 %v3034
    %v3170 = vunpack.c.l.b16 %v3035
    %v3171 = vunpack.c.l.b16 %v3036
    %v3172 = vunpack.c.l.b16 %v3037
    %v3173 = vunpack.c.l.b16 %v3038
    %v3174 = vunpack.c.l.b16 %v3039
    %v3175 = vunpack.c.l.b16 %v3040
    %v3176 = vunpack.c.l.b16 %v3041
    %v3177 = vunpack.c.l.b16 %v3042
    %v3178 = vunpack.c.l.b16 %v3043
    %v3179 = vunpack.c.l.b16 %v3044
    %v3180 = vunpack.c.l.b16 %v3045
    %v3181 = vunpack.c.l.b16 %v3046
    %v3182 = vunpack.c.l.b16 %v3047
    %v3183 = vunpack.c.l.b16 %v3048
    %v3184 = vunpack.c.l.b16 %v3049
    %v3185 = vunpack.c.l.b16 %v3050
    %v3186 = vunpack.c.l.b16 %v3051
    %v3187 = vunpack.c.l.b16 %v3052
    %v3188 = vunpack.c.l.b16 %v3053
    %v3189 = vunpack.c.l.b16 %v3054
    %v3190 = vunpack.c.l.b16 %v3055
    %v3191 = vunpack.c.l.b16 %v3056
    %v3192 = vunpack.c.l.b16 %v3057
    %v3193 = vunpack.c.l.b16 %v3058
    %v3194 = vunpack.c.l.b16 %v3059
    %v3195 = vunpack.c.l.b16 %v3060
    %v3196 = vunpack.c.l.b16 %v3061
    %v3197 = vunpack.c.l.b16 %v3062
    %v3198 = vunpack.c.l.b16 %v3063
    %v3199 = vunpack.c.l.b16 %v3064
    %v3200 = vunpack.c.l.b16 %v3065
    %v3201 = vunpack.c.l.b16 %v3066
    %v3202 = vunpack.c.l.b16 %v3067
    %v3203 = vunpack.c.l.b16 %v3068
    %v3204 = vunpack.c.l.b16 %v3069
    %v3205 = vunpack.c.l.b16 %v3070
    %v3206 = vunpack.c.l.b16 %v3071
    %v3207 = vunpack.c.l.b16 %v3072
    %v3208 = vunpack.c.l.b16 %v3073
    %v3209 = vunpack.c.l.b16 %v3074
    %v3210 = vunpack.c.l.b16 %v3075
    %v3211 = vunpack.c.l.b16 %v3076
    %v3212 = vunpack.c.l.b16 %v3077
    %v3213 = vunpack.c.l.b16 %v3078
    %v3214 = vunpack.c.l.b16 %v3079
    %v3215 = vunpack.c.l.b16 %v3080
    %v3216 = vunpack.c.l.b16 %v3081
    %v3217 = vunpack.c.l.b16 %v3082
    %v3218 = vunpack.c.l.b16 %v3083
    %v3219 = vunpack.c.l.b16 %v3084
    %v3220 = vunpack.c.l.b16 %v3085
    %v3221 = vunpack.c.l.b16 %v3086
    %v3222 = vpack.c.b16 %v3159, %v3158
    %v3223 = vpack.c.b16 %v3161, %v3160
    %v3224 = vpack.c.b16 %v3163, %v3162
    %v3225 = vpack.c.b16 %v3165, %v3164
    %v3226 = vpack.c.b16 %v3167, %v3166
    %v3227 = vpack.c.b16 %v3169, %v3168
    %v3228 = vpack.c.b16 %v3171, %v3170
    %v3229 = vpack.c.b16 %v3173, %v3172
    %v3230 = vpack.c.b16 %v3175, %v3174
    %v3231 = vpack.c.b16 %v3177, %v3176
    %v3232 = vpack.c.b16 %v3179, %v3178
    %v3233 = vpack.c.b16 %v3181, %v3180
    %v3234 = vpack.c.b16 %v3183, %v3182
    %v3235 = vpack.c.b16 %v3185, %v3184
    %v3236 = vpack.c.b16 %v3187, %v3186
    %v3237 = vpack.c.b16 %v3189, %v3188
    %v3238 = vpack.c.b16 %v3191, %v3190
    %v3239 = vpack.c.b16 %v3193, %v3192
    %v3240 = vpack.c.b16 %v3195, %v3194
    %v3241 = vpack.c.b16 %v3197, %v3196
    %v3242 = vpack.c.b16 %v3199, %v3198
    %v3243 = vpack.c.b16 %v3201, %v3200
    %v3244 = vpack.c.b16 %v3203, %v3202
    %v3245 = vpack.c.b16 %v3205, %v3204
    %v3246 = vpack.c.b16 %v3207, %v3206
    %v3247 = vpack.c.b16 %v3209, %v3208
    %v3248 = vpack.c.b16 %v3211, %v3210
    %v3249 = vpack.c.b16 %v3213, %v3212
    %v3250 = vpack.c.b16 %v3215, %v3214
    %v3251 = vpack.c.b16 %v3217, %v3216
    %v3252 = vpack.c.b16 %v3219, %v3218
    %v3253 = vpack.c.b16 %v3221, %v3220
    %3286 = vmatprep.subr.bf16.mxu0 0
    %3287 = vmatpush1.bf16.msra.mxu0 %v3222
    %3288 = vmatprep.subr.bf16.mxu0 0
    %3289 = vmatpush1.bf16.msra.mxu0 %v3223
    %3290 = vmatprep.subr.bf16.mxu0 0
    %3291 = vmatpush1.bf16.msra.mxu0 %v3224
    %3292 = vmatprep.subr.bf16.mxu0 0
    %3293 = vmatpush1.bf16.msra.mxu0 %v3225
    %3294 = vmatprep.subr.bf16.mxu0 0
    %3295 = vmatpush1.bf16.msra.mxu0 %v3226
    %3296 = vmatprep.subr.bf16.mxu0 0
    %3297 = vmatpush1.bf16.msra.mxu0 %v3227
    %3298 = vmatprep.subr.bf16.mxu0 0
    %3299 = vmatpush1.bf16.msra.mxu0 %v3228
    %3300 = vmatprep.subr.bf16.mxu0 0
    %3301 = vmatpush1.bf16.msra.mxu0 %v3229
    %3302 = vmatprep.subr.bf16.mxu0 0
    %3303 = vmatpush1.bf16.msra.mxu0 %v3230
    %3304 = vmatprep.subr.bf16.mxu0 0
    %3305 = vmatpush1.bf16.msra.mxu0 %v3231
    %3306 = vmatprep.subr.bf16.mxu0 0
    %3307 = vmatpush1.bf16.msra.mxu0 %v3232
    %3308 = vmatprep.subr.bf16.mxu0 0
    %3309 = vmatpush1.bf16.msra.mxu0 %v3233
    %3310 = vmatprep.subr.bf16.mxu0 0
    %3311 = vmatpush1.bf16.msra.mxu0 %v3234
    %3312 = vmatprep.subr.bf16.mxu0 0
    %3313 = vmatpush1.bf16.msra.mxu0 %v3235
    %3314 = vmatprep.subr.bf16.mxu0 0
    %3315 = vmatpush1.bf16.msra.mxu0 %v3236
    %3316 = vmatprep.subr.bf16.mxu0 0
    %3317 = vmatpush1.bf16.msra.mxu0 %v3237
    %3318 = vmatprep.mubr.bf16.mxu0 %v2992
    %3319 = vmatmul.mubr.bf16.gmra.mrb[0].mxu0 %v2991
    %v3320 = vpop.f32.mrb[0].mxu0
    %v3321 = vadd.f32 %v3092, %v3320
    %v3322 = vpop.f32.mrb[0].mxu0
    %v3323 = vpop.f32.mrb[0].mxu0
    %v3324 = vadd.f32 %v3092, %v3323
    %v3325 = vpop.f32.mrb[0].mxu0
    %3326 = vmatprep.mubr.bf16.mxu0 %v2996
    %3327 = vmatmul.mubr.bf16.gmra.mrb[0].mxu0 %v2995
    %v3328 = vpop.f32.mrb[0].mxu0
    %v3329 = vadd.f32 %v3092, %v3328
    %v3330 = vpop.f32.mrb[0].mxu0
    %v3331 = vpop.f32.mrb[0].mxu0
    %v3332 = vadd.f32 %v3092, %v3331
    %v3333 = vpop.f32.mrb[0].mxu0
    %3334 = vmatprep.mubr.bf16.mxu0 %v3000
    %3335 = vmatmul.mubr.bf16.gmra.mrb[0].mxu0 %v2999
    %v3336 = vpop.f32.mrb[0].mxu0
    %v3337 = vadd.f32 %v3092, %v3336
    %v3338 = vpop.f32.mrb[0].mxu0
    %v3339 = vpop.f32.mrb[0].mxu0
    %v3340 = vadd.f32 %v3092, %v3339
    %v3341 = vpop.f32.mrb[0].mxu0
    %3342 = vmatprep.mubr.bf16.mxu0 %v3004
    %3343 = vmatmul.mubr.bf16.gmra.mrb[0].mxu0 %v3003
    %v3344 = vpop.f32.mrb[0].mxu0
    %v3345 = vadd.f32 %v3092, %v3344
    %v3346 = vpop.f32.mrb[0].mxu0
    %v3347 = vpop.f32.mrb[0].mxu0
    %v3348 = vadd.f32 %v3092, %v3347
    %v3349 = vpop.f32.mrb[0].mxu0
    %3350 = vmatprep.mubr.bf16.mxu0 %v3008
    %3351 = vmatmul.mubr.bf16.gmra.mrb[0].mxu0 %v3007
    %v3352 = vpop.f32.mrb[0].mxu0
    %v3353 = vadd.f32 %v3092, %v3352
    %v3354 = vpop.f32.mrb[0].mxu0
    %v3355 = vpop.f32.mrb[0].mxu0
    %v3356 = vadd.f32 %v3092, %v3355
    %v3357 = vpop.f32.mrb[0].mxu0
    %3358 = vmatprep.mubr.bf16.mxu0 %v3012
    %3359 = vmatmul.mubr.bf16.gmra.mrb[0].mxu0 %v3011
    %v3360 = vpop.f32.mrb[0].mxu0
    %v3361 = vadd.f32 %v3092, %v3360
    %v3362 = vpop.f32.mrb[0].mxu0
    %v3363 = vpop.f32.mrb[0].mxu0
    %v3364 = vadd.f32 %v3092, %v3363
    %v3365 = vpop.f32.mrb[0].mxu0
    %3366 = vmatprep.mubr.bf16.mxu0 %v3016
    %3367 = vmatmul.mubr.bf16.gmra.mrb[0].mxu0 %v3015
    %v3368 = vpop.f32.mrb[0].mxu0
    %v3369 = vadd.f32 %v3092, %v3368
    %v3370 = vpop.f32.mrb[0].mxu0
    %v3371 = vpop.f32.mrb[0].mxu0
    %v3372 = vadd.f32 %v3092, %v3371
    %v3373 = vpop.f32.mrb[0].mxu0
    %3374 = vmatprep.mubr.bf16.mxu0 %v3020
    %3375 = vmatmul.mubr.bf16.gmra.mrb[0].mxu0 %v3019
    %v3376 = vpop.f32.mrb[0].mxu0
    %v3377 = vadd.f32 %v3092, %v3376
    %v3378 = vpop.f32.mrb[0].mxu0
    %v3379 = vpop.f32.mrb[0].mxu0
    %v3380 = vadd.f32 %v3092, %v3379
    %v3381 = vpop.f32.mrb[0].mxu0
    %3382 = vdwg.mxu0
    %3383 = vmatprep.subr.bf16.mxu0 0
    %3384 = vmatpush1.bf16.msra.mxu0 %v3238
    %3385 = vmatprep.subr.bf16.mxu0 0
    %3386 = vmatpush1.bf16.msra.mxu0 %v3239
    %3387 = vmatprep.subr.bf16.mxu0 0
    %3388 = vmatpush1.bf16.msra.mxu0 %v3240
    %3389 = vmatprep.subr.bf16.mxu0 0
    %3390 = vmatpush1.bf16.msra.mxu0 %v3241
    %3391 = vmatprep.subr.bf16.mxu0 0
    %3392 = vmatpush1.bf16.msra.mxu0 %v3242
    %3393 = vmatprep.subr.bf16.mxu0 0
    %3394 = vmatpush1.bf16.msra.mxu0 %v3243
    %3395 = vmatprep.subr.bf16.mxu0 0
    %3396 = vmatpush1.bf16.msra.mxu0 %v3244
    %3397 = vmatprep.subr.bf16.mxu0 0
    %3398 = vmatpush1.bf16.msra.mxu0 %v3245
    %3399 = vmatprep.subr.bf16.mxu0 0
    %3400 = vmatpush1.bf16.msra.mxu0 %v3246
    %3401 = vmatprep.subr.bf16.mxu0 0
    %3402 = vmatpush1.bf16.msra.mxu0 %v3247
    %3403 = vmatprep.subr.bf16.mxu0 0
    %3404 = vmatpush1.bf16.msra.mxu0 %v3248
    %3405 = vmatprep.subr.bf16.mxu0 0
    %3406 = vmatpush1.bf16.msra.mxu0 %v3249
    %3407 = vmatprep.subr.bf16.mxu0 0
    %3408 = vmatpush1.bf16.msra.mxu0 %v3250
    %3409 = vmatprep.subr.bf16.mxu0 0
    %3410 = vmatpush1.bf16.msra.mxu0 %v3251
    %3411 = vmatprep.subr.bf16.mxu0 0
    %3412 = vmatpush1.bf16.msra.mxu0 %v3252
    %3413 = vmatprep.subr.bf16.mxu0 0
    %3414 = vmatpush1.bf16.msra.mxu0 %v3253
    %3415 = vmatprep.mubr.bf16.mxu0 %v2994
    %3416 = vmatmul.mubr.bf16.gmra.mrb[0].mxu0 %v2993
    %v3417 = vpop.f32.mrb[0].mxu0
    %v3418 = vadd.f32 %v3321, %v3417
    %v3419 = vpop.f32.mrb[0].mxu0
    %v3420 = vpop.f32.mrb[0].mxu0
    %v3421 = vadd.f32 %v3324, %v3420
    %v3422 = vpop.f32.mrb[0].mxu0
    %3423 = vmatprep.mubr.bf16.mxu0 %v2998
    %3424 = vmatmul.mubr.bf16.gmra.mrb[0].mxu0 %v2997
    %v3425 = vpop.f32.mrb[0].mxu0
    %v3426 = vadd.f32 %v3329, %v3425
    %v3427 = vpop.f32.mrb[0].mxu0
    %v3428 = vpop.f32.mrb[0].mxu0
    %v3429 = vadd.f32 %v3332, %v3428
    %v3430 = vpop.f32.mrb[0].mxu0
    %3431 = vmatprep.mubr.bf16.mxu0 %v3002
    %3432 = vmatmul.mubr.bf16.gmra.mrb[0].mxu0 %v3001
    %v3433 = vpop.f32.mrb[0].mxu0
    %v3434 = vadd.f32 %v3337, %v3433
    %v3435 = vpop.f32.mrb[0].mxu0
    %v3436 = vpop.f32.mrb[0].mxu0
    %v3437 = vadd.f32 %v3340, %v3436
    %v3438 = vpop.f32.mrb[0].mxu0
    %3439 = vmatprep.mubr.bf16.mxu0 %v3006
    %3440 = vmatmul.mubr.bf16.gmra.mrb[0].mxu0 %v3005
    %v3441 = vpop.f32.mrb[0].mxu0
    %v3442 = vadd.f32 %v3345, %v3441
    %v3443 = vpop.f32.mrb[0].mxu0
    %v3444 = vpop.f32.mrb[0].mxu0
    %v3445 = vadd.f32 %v3348, %v3444
    %v3446 = vpop.f32.mrb[0].mxu0
    %3447 = vmatprep.mubr.bf16.mxu0 %v3010
    %3448 = vmatmul.mubr.bf16.gmra.mrb[0].mxu0 %v3009
    %v3449 = vpop.f32.mrb[0].mxu0
    %v3450 = vadd.f32 %v3353, %v3449
    %v3451 = vpop.f32.mrb[0].mxu0
    %v3452 = vpop.f32.mrb[0].mxu0
    %v3453 = vadd.f32 %v3356, %v3452
    %v3454 = vpop.f32.mrb[0].mxu0
    %3455 = vmatprep.mubr.bf16.mxu0 %v3014
    %3456 = vmatmul.mubr.bf16.gmra.mrb[0].mxu0 %v3013
    %v3457 = vpop.f32.mrb[0].mxu0
    %v3458 = vadd.f32 %v3361, %v3457
    %v3459 = vpop.f32.mrb[0].mxu0
    %v3460 = vpop.f32.mrb[0].mxu0
    %v3461 = vadd.f32 %v3364, %v3460
    %v3462 = vpop.f32.mrb[0].mxu0
    %3463 = vmatprep.mubr.bf16.mxu0 %v3018
    %3464 = vmatmul.mubr.bf16.gmra.mrb[0].mxu0 %v3017
    %v3465 = vpop.f32.mrb[0].mxu0
    %v3466 = vadd.f32 %v3369, %v3465
    %v3467 = vpop.f32.mrb[0].mxu0
    %v3468 = vpop.f32.mrb[0].mxu0
    %v3469 = vadd.f32 %v3372, %v3468
    %v3470 = vpop.f32.mrb[0].mxu0
    %3471 = vmatprep.mubr.bf16.mxu0 %v3022
    %3472 = vmatmul.mubr.bf16.gmra.mrb[0].mxu0 %v3021
    %v3473 = vpop.f32.mrb[0].mxu0
    %v3474 = vadd.f32 %v3377, %v3473
    %v3475 = vpop.f32.mrb[0].mxu0
    %v3476 = vpop.f32.mrb[0].mxu0
    %v3477 = vadd.f32 %v3380, %v3476
    %v3478 = vpop.f32.mrb[0].mxu0
    %3479 = vdwg.mxu0
    %v3480 = vld [vmem:[%s11] sm:$0xff]
    %v3481 = vld [vmem:[%s11 + $0x8] sm:$0xff]
    %v3482 = vld [vmem:[%s11 + $0x10] sm:$0xff]
    %v3483 = vld [vmem:[%s11 + $0x18] sm:$0xff]
    %v3484 = vld [vmem:[%s11 + $0x20] sm:$0xff]
    %v3485 = vld [vmem:[%s11 + $0x28] sm:$0xff]
    %v3486 = vld [vmem:[%s11 + $0x30] sm:$0xff]
    %v3487 = vld [vmem:[%s11 + $0x38] sm:$0xff]
    %v3488 = vld [vmem:[%s11 + $0x40] sm:$0xff]
    %v3489 = vld [vmem:[%s11 + $0x48] sm:$0xff]
    %v3490 = vld [vmem:[%s11 + $0x50] sm:$0xff]
    %v3491 = vld [vmem:[%s11 + $0x58] sm:$0xff]
    %v3492 = vld [vmem:[%s11 + $0x60] sm:$0xff]
    %v3493 = vld [vmem:[%s11 + $0x68] sm:$0xff]
    %v3494 = vld [vmem:[%s11 + $0x70] sm:$0xff]
    %v3495 = vld [vmem:[%s11 + $0x78] sm:$0xff]
    %3512 = vrot.lane.b32.xlu0 %v3418, 1
    %v3513 = vpop.permute.xlu0 %3512
    %3514 = vrot.lane.b32.xlu0 %v3421, 1
    %v3515 = vpop.permute.xlu0 %3514
    %3516 = vrot.lane.b32.xlu0 %v3426, 1
    %v3517 = vpop.permute.xlu0 %3516
    %3518 = vrot.lane.b32.xlu0 %v3429, 1
    %v3519 = vpop.permute.xlu0 %3518
    %3520 = vrot.lane.b32.xlu0 %v3434, 1
    %v3521 = vpop.permute.xlu0 %3520
    %3522 = vrot.lane.b32.xlu0 %v3437, 1
    %v3523 = vpop.permute.xlu0 %3522
    %3524 = vrot.lane.b32.xlu0 %v3442, 1
    %v3525 = vpop.permute.xlu0 %3524
    %3526 = vrot.lane.b32.xlu0 %v3445, 1
    %v3527 = vpop.permute.xlu0 %3526
    %3528 = vrot.lane.b32.xlu0 %v3450, 1
    %v3529 = vpop.permute.xlu0 %3528
    %3530 = vrot.lane.b32.xlu0 %v3453, 1
    %v3531 = vpop.permute.xlu0 %3530
    %3532 = vrot.lane.b32.xlu0 %v3458, 1
    %v3533 = vpop.permute.xlu0 %3532
    %3534 = vrot.lane.b32.xlu0 %v3461, 1
    %v3535 = vpop.permute.xlu0 %3534
    %3536 = vrot.lane.b32.xlu0 %v3466, 1
    %v3537 = vpop.permute.xlu0 %3536
    %3538 = vrot.lane.b32.xlu0 %v3469, 1
    %v3539 = vpop.permute.xlu0 %3538
    %3540 = vrot.lane.b32.xlu0 %v3474, 1
    %v3541 = vpop.permute.xlu0 %3540
    %3542 = vrot.lane.b32.xlu0 %v3477, 1
    %v3543 = vpop.permute.xlu0 %3542
    %v3560 = vmul.f32 %v3480, %v3513
    %v3561 = vmul.f32 %v3481, %v3515
    %v3562 = vmul.f32 %v3482, %v3517
    %v3563 = vmul.f32 %v3483, %v3519
    %v3564 = vmul.f32 %v3484, %v3521
    %v3565 = vmul.f32 %v3485, %v3523
    %v3566 = vmul.f32 %v3486, %v3525
    %v3567 = vmul.f32 %v3487, %v3527
    %v3568 = vmul.f32 %v3488, %v3529
    %v3569 = vmul.f32 %v3489, %v3531
    %v3570 = vmul.f32 %v3490, %v3533
    %v3571 = vmul.f32 %v3491, %v3535
    %v3572 = vmul.f32 %v3492, %v3537
    %v3573 = vmul.f32 %v3493, %v3539
    %v3574 = vmul.f32 %v3494, %v3541
    %v3575 = vmul.f32 %v3495, %v3543
    %3577 = vset.pattern.permute.xlu0 0
    %3578 = vperm.xlu0 %3577, %v3560
    %v3579 = vpop.permute.xlu0 %3578
    %3582 = vset.pattern.permute.xlu0 0
    %3583 = vperm.xlu0 %3582, %v3561
    %v3584 = vpop.permute.xlu0 %3583
    %3587 = vset.pattern.permute.xlu0 0
    %3588 = vperm.xlu0 %3587, %v3562
    %v3589 = vpop.permute.xlu0 %3588
    %3592 = vset.pattern.permute.xlu0 0
    %3593 = vperm.xlu0 %3592, %v3563
    %v3594 = vpop.permute.xlu0 %3593
    %3597 = vset.pattern.permute.xlu0 0
    %3598 = vperm.xlu0 %3597, %v3564
    %v3599 = vpop.permute.xlu0 %3598
    %3602 = vset.pattern.permute.xlu0 0
    %3603 = vperm.xlu0 %3602, %v3565
    %v3604 = vpop.permute.xlu0 %3603
    %3607 = vset.pattern.permute.xlu0 0
    %3608 = vperm.xlu0 %3607, %v3566
    %v3609 = vpop.permute.xlu0 %3608
    %3612 = vset.pattern.permute.xlu0 0
    %3613 = vperm.xlu0 %3612, %v3567
    %v3614 = vpop.permute.xlu0 %3613
    %3617 = vset.pattern.permute.xlu0 0
    %3618 = vperm.xlu0 %3617, %v3568
    %v3619 = vpop.permute.xlu0 %3618
    %3622 = vset.pattern.permute.xlu0 0
    %3623 = vperm.xlu0 %3622, %v3569
    %v3624 = vpop.permute.xlu0 %3623
    %3627 = vset.pattern.permute.xlu0 0
    %3628 = vperm.xlu0 %3627, %v3570
    %v3629 = vpop.permute.xlu0 %3628
    %3632 = vset.pattern.permute.xlu0 0
    %3633 = vperm.xlu0 %3632, %v3571
    %v3634 = vpop.permute.xlu0 %3633
    %3637 = vset.pattern.permute.xlu0 0
    %3638 = vperm.xlu0 %3637, %v3572
    %v3639 = vpop.permute.xlu0 %3638
    %3642 = vset.pattern.permute.xlu0 0
    %3643 = vperm.xlu0 %3642, %v3573
    %v3644 = vpop.permute.xlu0 %3643
    %3647 = vset.pattern.permute.xlu0 0
    %3648 = vperm.xlu0 %3647, %v3574
    %v3649 = vpop.permute.xlu0 %3648
    %3652 = vset.pattern.permute.xlu0 0
    %3653 = vperm.xlu0 %3652, %v3575
    %v3654 = vpop.permute.xlu0 %3653
    %vm3656 = vcmp.lt.f32.partialorder %v3418, %v3579
    %vm3657 = vcmp.lt.f32.partialorder %v3421, %v3584
    %vm3658 = vcmp.lt.f32.partialorder %v3426, %v3589
    %vm3659 = vcmp.lt.f32.partialorder %v3429, %v3594
    %vm3660 = vcmp.lt.f32.partialorder %v3434, %v3599
    %vm3661 = vcmp.lt.f32.partialorder %v3437, %v3604
    %vm3662 = vcmp.lt.f32.partialorder %v3442, %v3609
    %vm3663 = vcmp.lt.f32.partialorder %v3445, %v3614
    %vm3664 = vcmp.lt.f32.partialorder %v3450, %v3619
    %vm3665 = vcmp.lt.f32.partialorder %v3453, %v3624
    %vm3666 = vcmp.lt.f32.partialorder %v3458, %v3629
    %vm3667 = vcmp.lt.f32.partialorder %v3461, %v3634
    %vm3668 = vcmp.lt.f32.partialorder %v3466, %v3639
    %vm3669 = vcmp.lt.f32.partialorder %v3469, %v3644
    %vm3670 = vcmp.lt.f32.partialorder %v3474, %v3649
    %vm3671 = vcmp.lt.f32.partialorder %v3477, %v3654
    %v3672 = vsel %vm3656, 1, 0
    %v3673 = vsel %vm3657, 1, 0
    %v3674 = vsel %vm3658, 1, 0
    %v3675 = vsel %vm3659, 1, 0
    %v3676 = vsel %vm3660, 1, 0
    %v3677 = vsel %vm3661, 1, 0
    %v3678 = vsel %vm3662, 1, 0
    %v3679 = vsel %vm3663, 1, 0
    %v3680 = vsel %vm3664, 1, 0
    %v3681 = vsel %vm3665, 1, 0
    %v3682 = vsel %vm3666, 1, 0
    %v3683 = vsel %vm3667, 1, 0
    %v3684 = vsel %vm3668, 1, 0
    %v3685 = vsel %vm3669, 1, 0
    %v3686 = vsel %vm3670, 1, 0
    %v3687 = vsel %vm3671, 1, 0
    %v3688 = vand.u32 %v3672, 65535
    %v3689 = vshrl.u32 %v3672, 16
    %v3690 = vcvt.s32.f32 %v3688
    %v3691 = vcvt.s32.f32 %v3689
    %3692 = vadd.xlane.f32.xlu0 %v3690
    %v3693 = vpop.xlane.xlu0 %3692
    %3694 = vadd.xlane.f32.xlu0 %v3691
    %v3695 = vpop.xlane.xlu0 %3694
    %v3696 = vcvt.f32.s32 %v3693
    %v3697 = vcvt.f32.s32 %v3695
    %v3698 = vshll.u32 %v3697, 16
    %v3699 = vadd.s32 %v3698, %v3696
    %v3700 = vand.u32 %v3673, 65535
    %v3701 = vshrl.u32 %v3673, 16
    %v3702 = vcvt.s32.f32 %v3700
    %v3703 = vcvt.s32.f32 %v3701
    %3704 = vadd.xlane.f32.xlu0 %v3702
    %v3705 = vpop.xlane.xlu0 %3704
    %3706 = vadd.xlane.f32.xlu0 %v3703
    %v3707 = vpop.xlane.xlu0 %3706
    %v3708 = vcvt.f32.s32 %v3705
    %v3709 = vcvt.f32.s32 %v3707
    %v3710 = vshll.u32 %v3709, 16
    %v3711 = vadd.s32 %v3710, %v3708
    %v3712 = vand.u32 %v3674, 65535
    %v3713 = vshrl.u32 %v3674, 16
    %v3714 = vcvt.s32.f32 %v3712
    %v3715 = vcvt.s32.f32 %v3713
    %3716 = vadd.xlane.f32.xlu0 %v3714
    %v3717 = vpop.xlane.xlu0 %3716
    %3718 = vadd.xlane.f32.xlu0 %v3715
    %v3719 = vpop.xlane.xlu0 %3718
    %v3720 = vcvt.f32.s32 %v3717
    %v3721 = vcvt.f32.s32 %v3719
    %v3722 = vshll.u32 %v3721, 16
    %v3723 = vadd.s32 %v3722, %v3720
    %v3724 = vand.u32 %v3675, 65535
    %v3725 = vshrl.u32 %v3675, 16
    %v3726 = vcvt.s32.f32 %v3724
    %v3727 = vcvt.s32.f32 %v3725
    %3728 = vadd.xlane.f32.xlu0 %v3726
    %v3729 = vpop.xlane.xlu0 %3728
    %3730 = vadd.xlane.f32.xlu0 %v3727
    %v3731 = vpop.xlane.xlu0 %3730
    %v3732 = vcvt.f32.s32 %v3729
    %v3733 = vcvt.f32.s32 %v3731
    %v3734 = vshll.u32 %v3733, 16
    %v3735 = vadd.s32 %v3734, %v3732
    %v3736 = vand.u32 %v3676, 65535
    %v3737 = vshrl.u32 %v3676, 16
    %v3738 = vcvt.s32.f32 %v3736
    %v3739 = vcvt.s32.f32 %v3737
    %3740 = vadd.xlane.f32.xlu0 %v3738
    %v3741 = vpop.xlane.xlu0 %3740
    %3742 = vadd.xlane.f32.xlu0 %v3739
    %v3743 = vpop.xlane.xlu0 %3742
    %v3744 = vcvt.f32.s32 %v3741
    %v3745 = vcvt.f32.s32 %v3743
    %v3746 = vshll.u32 %v3745, 16
    %v3747 = vadd.s32 %v3746, %v3744
    %v3748 = vand.u32 %v3677, 65535
    %v3749 = vshrl.u32 %v3677, 16
    %v3750 = vcvt.s32.f32 %v3748
    %v3751 = vcvt.s32.f32 %v3749
    %3752 = vadd.xlane.f32.xlu0 %v3750
    %v3753 = vpop.xlane.xlu0 %3752
    %3754 = vadd.xlane.f32.xlu0 %v3751
    %v3755 = vpop.xlane.xlu0 %3754
    %v3756 = vcvt.f32.s32 %v3753
    %v3757 = vcvt.f32.s32 %v3755
    %v3758 = vshll.u32 %v3757, 16
    %v3759 = vadd.s32 %v3758, %v3756
    %v3760 = vand.u32 %v3678, 65535
    %v3761 = vshrl.u32 %v3678, 16
    %v3762 = vcvt.s32.f32 %v3760
    %v3763 = vcvt.s32.f32 %v3761
    %3764 = vadd.xlane.f32.xlu0 %v3762
    %v3765 = vpop.xlane.xlu0 %3764
    %3766 = vadd.xlane.f32.xlu0 %v3763
    %v3767 = vpop.xlane.xlu0 %3766
    %v3768 = vcvt.f32.s32 %v3765
    %v3769 = vcvt.f32.s32 %v3767
    %v3770 = vshll.u32 %v3769, 16
    %v3771 = vadd.s32 %v3770, %v3768
    %v3772 = vand.u32 %v3679, 65535
    %v3773 = vshrl.u32 %v3679, 16
    %v3774 = vcvt.s32.f32 %v3772
    %v3775 = vcvt.s32.f32 %v3773
    %3776 = vadd.xlane.f32.xlu0 %v3774
    %v3777 = vpop.xlane.xlu0 %3776
    %3778 = vadd.xlane.f32.xlu0 %v3775
    %v3779 = vpop.xlane.xlu0 %3778
    %v3780 = vcvt.f32.s32 %v3777
    %v3781 = vcvt.f32.s32 %v3779
    %v3782 = vshll.u32 %v3781, 16
    %v3783 = vadd.s32 %v3782, %v3780
    %v3784 = vand.u32 %v3680, 65535
    %v3785 = vshrl.u32 %v3680, 16
    %v3786 = vcvt.s32.f32 %v3784
    %v3787 = vcvt.s32.f32 %v3785
    %3788 = vadd.xlane.f32.xlu0 %v3786
    %v3789 = vpop.xlane.xlu0 %3788
    %3790 = vadd.xlane.f32.xlu0 %v3787
    %v3791 = vpop.xlane.xlu0 %3790
    %v3792 = vcvt.f32.s32 %v3789
    %v3793 = vcvt.f32.s32 %v3791
    %v3794 = vshll.u32 %v3793, 16
    %v3795 = vadd.s32 %v3794, %v3792
    %v3796 = vand.u32 %v3681, 65535
    %v3797 = vshrl.u32 %v3681, 16
    %v3798 = vcvt.s32.f32 %v3796
    %v3799 = vcvt.s32.f32 %v3797
    %3800 = vadd.xlane.f32.xlu0 %v3798
    %v3801 = vpop.xlane.xlu0 %3800
    %3802 = vadd.xlane.f32.xlu0 %v3799
    %v3803 = vpop.xlane.xlu0 %3802
    %v3804 = vcvt.f32.s32 %v3801
    %v3805 = vcvt.f32.s32 %v3803
    %v3806 = vshll.u32 %v3805, 16
    %v3807 = vadd.s32 %v3806, %v3804
    %v3808 = vand.u32 %v3682, 65535
    %v3809 = vshrl.u32 %v3682, 16
    %v3810 = vcvt.s32.f32 %v3808
    %v3811 = vcvt.s32.f32 %v3809
    %3812 = vadd.xlane.f32.xlu0 %v3810
    %v3813 = vpop.xlane.xlu0 %3812
    %3814 = vadd.xlane.f32.xlu0 %v3811
    %v3815 = vpop.xlane.xlu0 %3814
    %v3816 = vcvt.f32.s32 %v3813
    %v3817 = vcvt.f32.s32 %v3815
    %v3818 = vshll.u32 %v3817, 16
    %v3819 = vadd.s32 %v3818, %v3816
    %v3820 = vand.u32 %v3683, 65535
    %v3821 = vshrl.u32 %v3683, 16
    %v3822 = vcvt.s32.f32 %v3820
    %v3823 = vcvt.s32.f32 %v3821
    %3824 = vadd.xlane.f32.xlu0 %v3822
    %v3825 = vpop.xlane.xlu0 %3824
    %3826 = vadd.xlane.f32.xlu0 %v3823
    %v3827 = vpop.xlane.xlu0 %3826
    %v3828 = vcvt.f32.s32 %v3825
    %v3829 = vcvt.f32.s32 %v3827
    %v3830 = vshll.u32 %v3829, 16
    %v3831 = vadd.s32 %v3830, %v3828
    %v3832 = vand.u32 %v3684, 65535
    %v3833 = vshrl.u32 %v3684, 16
    %v3834 = vcvt.s32.f32 %v3832
    %v3835 = vcvt.s32.f32 %v3833
    %3836 = vadd.xlane.f32.xlu0 %v3834
    %v3837 = vpop.xlane.xlu0 %3836
    %3838 = vadd.xlane.f32.xlu0 %v3835
    %v3839 = vpop.xlane.xlu0 %3838
    %v3840 = vcvt.f32.s32 %v3837
    %v3841 = vcvt.f32.s32 %v3839
    %v3842 = vshll.u32 %v3841, 16
    %v3843 = vadd.s32 %v3842, %v3840
    %v3844 = vand.u32 %v3685, 65535
    %v3845 = vshrl.u32 %v3685, 16
    %v3846 = vcvt.s32.f32 %v3844
    %v3847 = vcvt.s32.f32 %v3845
    %3848 = vadd.xlane.f32.xlu0 %v3846
    %v3849 = vpop.xlane.xlu0 %3848
    %3850 = vadd.xlane.f32.xlu0 %v3847
    %v3851 = vpop.xlane.xlu0 %3850
    %v3852 = vcvt.f32.s32 %v3849
    %v3853 = vcvt.f32.s32 %v3851
    %v3854 = vshll.u32 %v3853, 16
    %v3855 = vadd.s32 %v3854, %v3852
    %v3856 = vand.u32 %v3686, 65535
    %v3857 = vshrl.u32 %v3686, 16
    %v3858 = vcvt.s32.f32 %v3856
    %v3859 = vcvt.s32.f32 %v3857
    %3860 = vadd.xlane.f32.xlu0 %v3858
    %v3861 = vpop.xlane.xlu0 %3860
    %3862 = vadd.xlane.f32.xlu0 %v3859
    %v3863 = vpop.xlane.xlu0 %3862
    %v3864 = vcvt.f32.s32 %v3861
    %v3865 = vcvt.f32.s32 %v3863
    %v3866 = vshll.u32 %v3865, 16
    %v3867 = vadd.s32 %v3866, %v3864
    %v3868 = vand.u32 %v3687, 65535
    %v3869 = vshrl.u32 %v3687, 16
    %v3870 = vcvt.s32.f32 %v3868
    %v3871 = vcvt.s32.f32 %v3869
    %3872 = vadd.xlane.f32.xlu0 %v3870
    %v3873 = vpop.xlane.xlu0 %3872
    %3874 = vadd.xlane.f32.xlu0 %v3871
    %v3875 = vpop.xlane.xlu0 %3874
    %v3876 = vcvt.f32.s32 %v3873
    %v3877 = vcvt.f32.s32 %v3875
    %v3878 = vshll.u32 %v3877, 16
    %v3879 = vadd.s32 %v3878, %v3876
    %vm3880 = vcmp.lt.s32.totalorder %v3699, 7
    %v3881 = vsel %vm3880, %v3699, 7
    %vm3882 = vcmp.lt.s32.totalorder %v3711, 7
    %v3883 = vsel %vm3882, %v3711, 7
    %vm3884 = vcmp.lt.s32.totalorder %v3723, 7
    %v3885 = vsel %vm3884, %v3723, 7
    %vm3886 = vcmp.lt.s32.totalorder %v3735, 7
    %v3887 = vsel %vm3886, %v3735, 7
    %vm3888 = vcmp.lt.s32.totalorder %v3747, 7
    %v3889 = vsel %vm3888, %v3747, 7
    %vm3890 = vcmp.lt.s32.totalorder %v3759, 7
    %v3891 = vsel %vm3890, %v3759, 7
    %vm3892 = vcmp.lt.s32.totalorder %v3771, 7
    %v3893 = vsel %vm3892, %v3771, 7
    %vm3894 = vcmp.lt.s32.totalorder %v3783, 7
    %v3895 = vsel %vm3894, %v3783, 7
    %vm3896 = vcmp.lt.s32.totalorder %v3795, 7
    %v3897 = vsel %vm3896, %v3795, 7
    %vm3898 = vcmp.lt.s32.totalorder %v3807, 7
    %v3899 = vsel %vm3898, %v3807, 7
    %vm3900 = vcmp.lt.s32.totalorder %v3819, 7
    %v3901 = vsel %vm3900, %v3819, 7
    %vm3902 = vcmp.lt.s32.totalorder %v3831, 7
    %v3903 = vsel %vm3902, %v3831, 7
    %vm3904 = vcmp.lt.s32.totalorder %v3843, 7
    %v3905 = vsel %vm3904, %v3843, 7
    %vm3906 = vcmp.lt.s32.totalorder %v3855, 7
    %v3907 = vsel %vm3906, %v3855, 7
    %vm3908 = vcmp.lt.s32.totalorder %v3867, 7
    %v3909 = vsel %vm3908, %v3867, 7
    %vm3910 = vcmp.lt.s32.totalorder %v3879, 7
    %v3911 = vsel %vm3910, %v3879, 7
    %vm3912 = vcmask 7168
    %3913 = vst.msk [vmem:[%s12] sm:$0xff] %vm3912, %v3881
    %3914 = vst.msk [vmem:[%s12 + $0x8] sm:$0xff] %vm3912, %v3883
    %3915 = vst.msk [vmem:[%s12 + $0x10] sm:$0xff] %vm3912, %v3885
    %3916 = vst.msk [vmem:[%s12 + $0x18] sm:$0xff] %vm3912, %v3887
    %3917 = vst.msk [vmem:[%s12 + $0x20] sm:$0xff] %vm3912, %v3889
    %3918 = vst.msk [vmem:[%s12 + $0x28] sm:$0xff] %vm3912, %v3891
    %3919 = vst.msk [vmem:[%s12 + $0x30] sm:$0xff] %vm3912, %v3893
    %3920 = vst.msk [vmem:[%s12 + $0x38] sm:$0xff] %vm3912, %v3895
    %3921 = vst.msk [vmem:[%s12 + $0x40] sm:$0xff] %vm3912, %v3897
    %3922 = vst.msk [vmem:[%s12 + $0x48] sm:$0xff] %vm3912, %v3899
    %3923 = vst.msk [vmem:[%s12 + $0x50] sm:$0xff] %vm3912, %v3901
    %3924 = vst.msk [vmem:[%s12 + $0x58] sm:$0xff] %vm3912, %v3903
    %3925 = vst.msk [vmem:[%s12 + $0x60] sm:$0xff] %vm3912, %v3905
    %3926 = vst.msk [vmem:[%s12 + $0x68] sm:$0xff] %vm3912, %v3907
    %3927 = vst.msk [vmem:[%s12 + $0x70] sm:$0xff] %vm3912, %v3909
    %3928 = vst.msk [vmem:[%s12 + $0x78] sm:$0xff] %vm3912, %v3911
    // Predicated region
    $region66: #{actor_forward.1} parent=1 // pred_check
      _
    $region67: #{actor_forward.1} parent=1 // pred_check_branch
      %3930 = sbr.rel (0) target = $region69
    $region68: #{actor_forward.1} parent=1 // pred_region
      _
    $region69: #{actor_forward.1} parent=1 // pred_fallthru
      _
    // Predicated region
    $region70: #{actor_forward.1} parent=1 // pred_check
      _
    $region71: #{actor_forward.1} parent=1 // pred_check_branch
      %3932 = sbr.rel (0) target = $region73
    $region72: #{actor_forward.1} parent=1 // pred_region
      _
    $region73: #{actor_forward.1} parent=1 // pred_fallthru
      _
    %3933 = vsyncpa [#allocation3], 1
    %3934 = vsyncpa [#allocation5], 1
    %3935 = vsyncpa [#allocation8], 1

</llo_original>
